<compile_context>
chip_gen: v6e
topology: v6e:2x2x1
jax: 0.10.0
libtpu: 0.0.40
codegen_flags: <defaults>
</compile_context>

<pallas_src>
import functools
import math

import jax
import jax.numpy as jnp
from jax import lax
from jax.experimental import pallas as pl
from jax.experimental.pallas import tpu as pltpu


def _round_up(x, m):
    return ((x + m - 1) // m) * m


def _acconv_kernel(x_ref, w_ref, b_ref, o_ref, patch_ref, *,
                   KH, KW, Cin, TH, W, Kpad, chunk_h):
    # x_ref:     (1, Hp, Wp, Cin)   bf16  whole padded image of this batch
    # w_ref:     (Kpad, Cpad)       bf16  fused, flattened weights (1/3 folded)
    # b_ref:     (1, Cpad)          f32   fused bias (1/3 folded)
    # o_ref:     (1, TH*W, Cpad)    bf16  lane-dense output slab
    # patch_ref: (TH, W, Kpad)      bf16  lane-dense im2col scratch
    K = KH * KW * Cin
    row0 = pl.program_id(1) * TH          # first padded input row of this tile

    # Zero the K padding lanes (their weight rows are zero, but uninitialised
    # VMEM could hold NaNs and NaN * 0 = NaN would leak into the accumulator).
    if Kpad > K:
        patch_ref[:, :, K:] = jnp.zeros((TH, W, Kpad - K), patch_ref.dtype)

    # ---- im2col: KH*KW small halo-window copies into the lane-dense patch ---
    for kh in range(KH):
        for kw in range(KW):
            col = (kh * KW + kw) * Cin
            win = x_ref[0, pl.ds(row0 + kh, TH), kw:kw + W, :]   # (TH, W, Cin)
            patch_ref[:, :, col:col + Cin] = win

    w = w_ref[...]                                   # (Kpad, Cpad) bf16
    b = b_ref[...]                                   # (1, Cpad)   f32

    # ---- one big matmul per row-chunk (chunking bounds f32 acc live range) --
    for r0 in range(0, TH, chunk_h):
        rc = min(chunk_h, TH - r0)
        pk = patch_ref[r0:r0 + rc].reshape(rc * W, Kpad)          # bf16
        acc = jnp.dot(pk, w, preferred_element_type=jnp.float32) + b
        o_ref[0, r0 * W:(r0 + rc) * W, :] = acc.astype(o_ref.dtype)


def acconv2d(x_nchw, w_hwio, b_fused, padding, *, tile_h=None):
    """Fused ACConv2d forward. x_nchw: (N, Cin, H, W) -> (N, Cout, H, W).

    w_hwio: (KH, KW, Cin, Cout) fused weights (already include the 1/3 scale).
    b_fused: (Cout,) fused bias (already includes the 1/3 scale).
    """
    N, Cin, H, W = x_nchw.shape
    KH, KW, _, Cout = w_hwio.shape
    p = padding
    assert KH == KW and KH % 2 == 1 and p == KH // 2, \
        "fused path requires odd k, stride 1, padding == k // 2"

    # ---- tiling -----------------------------------------------------------
    if tile_h is None:
        tile_h = max(1, min(H, 4096 // max(W, 1)))   # ~4K output rows / step
    TH = min(tile_h, H)
    while H % TH:                                    # make TH divide H
        TH -= 1
    nH = H // TH
    Hp, Wp = H + 2 * p, W + 2 * p
    M = TH * W
    assert M % 8 == 0, "TH * W must be a multiple of 8 (sublane alignment)"
    chunk_h = TH
    if M > 512:                                      # bound f32 acc live range
        chunk_h = max(1, 512 // W)
        while TH % chunk_h:
            chunk_h -= 1

    K = KH * KW * Cin
    Kpad = _round_up(K, 128)       # lane-dense contraction depth
    Cpad = _round_up(Cout, 128)    # lane-dense output channels
    # TODO(synk): on v6e/v7x pad Cout to multiples of 256 once Cout > 128
    # (256-wide MXU); 128 is right for tiny Cout like this test's 8.

    # ---- layout plumbing (wrapper side): NCHW -> padded NHWC bf16 ----------
    x_nhwc = jnp.transpose(x_nchw, (0, 2, 3, 1)).astype(jnp.bfloat16)
    x_pad = jnp.pad(x_nhwc, ((0, 0), (p, p), (p, p), (0, 0)))
    # No halo-tile stack: whole padded image handed to the kernel per batch.
    # TODO(synk): for large images / Cin, keep x in HBM (memory_space=pl.ANY)
    # and manually DMA halo row windows instead of whole-image VMEM blocks.

    # Fused weights flattened to one lane-dense (Kpad, Cpad) matmul operand.
    w_flat = w_hwio.reshape(K, Cout).astype(jnp.bfloat16)
    w_p = jnp.zeros((Kpad, Cpad), jnp.bfloat16).at[:K, :Cout].set(w_flat)
    b_p = jnp.zeros((1, Cpad), jnp.float32).at[:, :Cout].set(
        b_fused.reshape(1, Cout).astype(jnp.float32))

    kernel = functools.partial(_acconv_kernel, KH=KH, KW=KW, Cin=Cin, TH=TH,
                               W=W, Kpad=Kpad, chunk_h=chunk_h)

    out = pl.pallas_call(
        kernel,
        out_shape=jax.ShapeDtypeStruct((N, H * W, Cpad), jnp.bfloat16),
        grid_spec=pltpu.PrefetchScalarGridSpec(
            num_scalar_prefetch=0,
            grid=(N, nH),
            in_specs=[
                # Whole padded image per batch; block index is constant over
                # the h axis so Pallas DMAs it once per batch (no halo dup).
                pl.BlockSpec((1, Hp, Wp, Cin), lambda n, h: (n, 0, 0, 0)),
                # Constant-index weights / bias: DMA'd once. (Could also be
                # single-buffered via pipeline_mode=pl.Buffered(1); the 2x VMEM
                # reservation here is ~36 KiB so it is left at the default.)
                pl.BlockSpec((Kpad, Cpad), lambda n, h: (0, 0)),
                pl.BlockSpec((1, Cpad), lambda n, h: (0, 0)),
            ],
            out_specs=pl.BlockSpec((1, M, Cpad), lambda n, h: (n, h, 0)),
            scratch_shapes=[pltpu.VMEM((TH, W, Kpad), jnp.bfloat16)],
        ),
        compiler_params=pltpu.CompilerParams(
            dimension_semantics=("parallel", "parallel"),
            vmem_limit_bytes=32 * 1024 * 1024,
        ),
    )(x_pad, w_p, b_p)

    out = out[:, :, :Cout].reshape(N, H, W, Cout)
    return jnp.transpose(out, (0, 3, 1, 2)).astype(x_nchw.dtype)  # back to NCHW


def conv_params(key, cout, cin, kh, kw):
    """Deterministic PyTorch-style (uniform +-1/sqrt(fan_in)) init."""
    fan_in = cin * kh * kw
    bound = 1.0 / math.sqrt(fan_in)
    k_w, k_b = jax.random.split(key)
    w = jax.random.uniform(k_w, (cout, cin, kh, kw), jnp.float32, -bound, bound)
    b = jax.random.uniform(k_b, (cout,), jnp.float32, -bound, bound)
    return w, b


def fuse_weights(w_conv, b_conv, w_ac1, b_ac1, w_ac2, b_ac2, k, padding):
    # Fusion is exact only for odd k with padding == k // 2 and stride 1
    # (ACConv2d defaults: k=3, p=1, stride=1). The 1/3 output scale is folded
    # directly into the fused weights and bias (linear op -> identical result).
    assert k % 2 == 1 and padding == k // 2
    w = w_conv
    w = w.at[:, :, k // 2, :].add(w_ac1[:, :, 0, :])   # 1 x k -> middle row
    w = w.at[:, :, :, k // 2].add(w_ac2[:, :, :, 0])   # k x 1 -> middle column
    w = w * (1.0 / 3.0)
    b = (b_conv + b_ac1 + b_ac2) * (1.0 / 3.0)
    w_hwio = jnp.transpose(w, (2, 3, 1, 0))            # OIHW -> HWIO
    return w_hwio, b


def reference_acconv(x, w_conv, b_conv, w_ac1, b_ac1, w_ac2, b_ac2, p):
    dn = ('NCHW', 'OIHW', 'NCHW')
    conv = lax.conv_general_dilated(x, w_conv, (1, 1), ((p, p), (p, p)),
                                    dimension_numbers=dn) + b_conv[None, :, None, None]
    ac1 = lax.conv_general_dilated(x, w_ac1, (1, 1), ((0, 0), (p, p)),
                                   dimension_numbers=dn) + b_ac1[None, :, None, None]
    ac2 = lax.conv_general_dilated(x, w_ac2, (1, 1), ((p, p), (0, 0)),
                                   dimension_numbers=dn) + b_ac2[None, :, None, None]
    return (ac1 + ac2 + conv) / 3.0


if __name__ == "__main__":
    N, Cin, H, W = 2, 4, 16, 16
    Cout, K, P = 8, 3, 1  # ACConv2d(in_channels=4, out_channels=8) defaults

    key = jax.random.PRNGKey(0)
    kx, k_conv, k_ac1, k_ac2 = jax.random.split(key, 4)

    x = jax.random.normal(kx, (N, Cin, H, W), jnp.float32)
    w_conv, b_conv = conv_params(k_conv, Cout, Cin, K, K)
    w_ac1, b_ac1 = conv_params(k_ac1, Cout, Cin, 1, K)
    w_ac2, b_ac2 = conv_params(k_ac2, Cout, Cin, K, 1)

    w_hwio, b_fused = fuse_weights(w_conv, b_conv, w_ac1, b_ac1, w_ac2, b_ac2, K, P)

    out = acconv2d(x, w_hwio, b_fused, P)
    out = jax.block_until_ready(out)

    ref = reference_acconv(x, w_conv, b_conv, w_ac1, b_ac1, w_ac2, b_ac2, P)
    err = float(jnp.max(jnp.abs(out - ref)))
    assert out.shape == (N, Cout, H, W), out.shape
    # bf16 activations/weights/output with f32 MXU accumulation -> ~1e-2-scale
    # absolute error budget.
    assert err < 6e-2, f"max abs error {err}"
    print("KERNEL_OK")
</pallas_src>

<mosaic_0001>
module attributes {stable_mosaic.version = 11 : i64} {
  func.func @_acconv_kernel(%arg0: i32, %arg1: i32, %arg2: memref<1x18x18x4xbf16, #tpu.memory_space<vmem>>, %arg3: memref<128x128xbf16, #tpu.memory_space<vmem>>, %arg4: memref<1x128xf32, #tpu.memory_space<vmem>>, %arg5: memref<1x256x128xbf16, #tpu.memory_space<vmem>>, %arg6: memref<16x16x128xbf16, #tpu.memory_space<vmem>>) attributes {dimension_semantics = [#tpu.dimension_semantics<parallel>, #tpu.dimension_semantics<parallel>], iteration_bounds = array<i64: 2, 1>, scalar_prefetch = 0 : i64, scratch_operands = 1 : i64, tpu.core_type = #tpu.core_type<tc>, window_params = [{transform_indices = @transform_0, window_bounds = array<i64: 1, 18, 18, 4>}, {pipeline_mode = #tpu.pipeline_mode<synchronous>, transform_indices = @transform_1, window_bounds = array<i64: 128, 128>}, {pipeline_mode = #tpu.pipeline_mode<synchronous>, transform_indices = @transform_2, window_bounds = array<i64: 1, 128>}, {transform_indices = @transform_3, window_bounds = array<i64: 1, 256, 128>}]} {
    %c16_i32 = arith.constant 16 : i32
    %0 = arith.muli %arg1, %c16_i32 : i32
    %cst = arith.constant 0.000000e+00 : bf16
    %1 = vector.broadcast %cst : bf16 to vector<16x16x92xbf16>
    %c0 = arith.constant 0 : index
    %c0_0 = arith.constant 0 : index
    %c36 = arith.constant 36 : index
    %2 = vector.load %arg6[%c0, %c0_0, %c36] : memref<16x16x128xbf16, #tpu.memory_space<vmem>>, vector<16x16x92xbf16>
    tpu.vector_store %arg6[%c0, %c0_0, %c36], %1 {strides = array<i32>} : memref<16x16x128xbf16, #tpu.memory_space<vmem>>, vector<16x16x92xbf16>,
    %c0_i32 = arith.constant 0 : i32
    %3 = arith.addi %0, %c0_i32 : i32
    %c0_1 = arith.constant 0 : index
    %4 = arith.index_cast %3 : i32 to index
    %c0_2 = arith.constant 0 : index
    %c0_3 = arith.constant 0 : index
    %5 = vector.load %arg2[%c0_1, %4, %c0_2, %c0_3] : memref<1x18x18x4xbf16, #tpu.memory_space<vmem>>, vector<1x16x16x4xbf16>
    %6 = vector.shape_cast %5 : vector<1x16x16x4xbf16> to vector<16x16x4xbf16>
    %c0_4 = arith.constant 0 : index
    %c0_5 = arith.constant 0 : index
    %c0_6 = arith.constant 0 : index
    %7 = vector.load %arg6[%c0_4, %c0_5, %c0_6] : memref<16x16x128xbf16, #tpu.memory_space<vmem>>, vector<16x16x4xbf16>
    tpu.vector_store %arg6[%c0_4, %c0_5, %c0_6], %6 {strides = array<i32>} : memref<16x16x128xbf16, #tpu.memory_space<vmem>>, vector<16x16x4xbf16>,
    %c0_i32_7 = arith.constant 0 : i32
    %8 = arith.addi %0, %c0_i32_7 : i32
    %c0_8 = arith.constant 0 : index
    %9 = arith.index_cast %8 : i32 to index
    %c1 = arith.constant 1 : index
    %c0_9 = arith.constant 0 : index
    %10 = vector.load %arg2[%c0_8, %9, %c1, %c0_9] : memref<1x18x18x4xbf16, #tpu.memory_space<vmem>>, vector<1x16x16x4xbf16>
    %11 = vector.shape_cast %10 : vector<1x16x16x4xbf16> to vector<16x16x4xbf16>
    %c0_10 = arith.constant 0 : index
    %c0_11 = arith.constant 0 : index
    %c4 = arith.constant 4 : index
    %12 = vector.load %arg6[%c0_10, %c0_11, %c4] : memref<16x16x128xbf16, #tpu.memory_space<vmem>>, vector<16x16x4xbf16>
    tpu.vector_store %arg6[%c0_10, %c0_11, %c4], %11 {strides = array<i32>} : memref<16x16x128xbf16, #tpu.memory_space<vmem>>, vector<16x16x4xbf16>,
    %c0_i32_12 = arith.constant 0 : i32
    %13 = arith.addi %0, %c0_i32_12 : i32
    %c0_13 = arith.constant 0 : index
    %14 = arith.index_cast %13 : i32 to index
    %c2 = arith.constant 2 : index
    %c0_14 = arith.constant 0 : index
    %15 = vector.load %arg2[%c0_13, %14, %c2, %c0_14] : memref<1x18x18x4xbf16, #tpu.memory_space<vmem>>, vector<1x16x16x4xbf16>
    %16 = vector.shape_cast %15 : vector<1x16x16x4xbf16> to vector<16x16x4xbf16>
    %c0_15 = arith.constant 0 : index
    %c0_16 = arith.constant 0 : index
    %c8 = arith.constant 8 : index
    %17 = vector.load %arg6[%c0_15, %c0_16, %c8] : memref<16x16x128xbf16, #tpu.memory_space<vmem>>, vector<16x16x4xbf16>
    tpu.vector_store %arg6[%c0_15, %c0_16, %c8], %16 {strides = array<i32>} : memref<16x16x128xbf16, #tpu.memory_space<vmem>>, vector<16x16x4xbf16>,
    %c1_i32 = arith.constant 1 : i32
    %18 = arith.addi %0, %c1_i32 : i32
    %c0_17 = arith.constant 0 : index
    %19 = arith.index_cast %18 : i32 to index
    %c0_18 = arith.constant 0 : index
    %c0_19 = arith.constant 0 : index
    %20 = vector.load %arg2[%c0_17, %19, %c0_18, %c0_19] : memref<1x18x18x4xbf16, #tpu.memory_space<vmem>>, vector<1x16x16x4xbf16>
    %21 = vector.shape_cast %20 : vector<1x16x16x4xbf16> to vector<16x16x4xbf16>
    %c0_20 = arith.constant 0 : index
    %c0_21 = arith.constant 0 : index
    %c12 = arith.constant 12 : index
    %22 = vector.load %arg6[%c0_20, %c0_21, %c12] : memref<16x16x128xbf16, #tpu.memory_space<vmem>>, vector<16x16x4xbf16>
    tpu.vector_store %arg6[%c0_20, %c0_21, %c12], %21 {strides = array<i32>} : memref<16x16x128xbf16, #tpu.memory_space<vmem>>, vector<16x16x4xbf16>,
    %c1_i32_22 = arith.constant 1 : i32
    %23 = arith.addi %0, %c1_i32_22 : i32
    %c0_23 = arith.constant 0 : index
    %24 = arith.index_cast %23 : i32 to index
    %c1_24 = arith.constant 1 : index
    %c0_25 = arith.constant 0 : index
    %25 = vector.load %arg2[%c0_23, %24, %c1_24, %c0_25] : memref<1x18x18x4xbf16, #tpu.memory_space<vmem>>, vector<1x16x16x4xbf16>
    %26 = vector.shape_cast %25 : vector<1x16x16x4xbf16> to vector<16x16x4xbf16>
    %c0_26 = arith.constant 0 : index
    %c0_27 = arith.constant 0 : index
    %c16 = arith.constant 16 : index
    %27 = vector.load %arg6[%c0_26, %c0_27, %c16] : memref<16x16x128xbf16, #tpu.memory_space<vmem>>, vector<16x16x4xbf16>
    tpu.vector_store %arg6[%c0_26, %c0_27, %c16], %26 {strides = array<i32>} : memref<16x16x128xbf16, #tpu.memory_space<vmem>>, vector<16x16x4xbf16>,
    %c1_i32_28 = arith.constant 1 : i32
    %28 = arith.addi %0, %c1_i32_28 : i32
    %c0_29 = arith.constant 0 : index
    %29 = arith.index_cast %28 : i32 to index
    %c2_30 = arith.constant 2 : index
    %c0_31 = arith.constant 0 : index
    %30 = vector.load %arg2[%c0_29, %29, %c2_30, %c0_31] : memref<1x18x18x4xbf16, #tpu.memory_space<vmem>>, vector<1x16x16x4xbf16>
    %31 = vector.shape_cast %30 : vector<1x16x16x4xbf16> to vector<16x16x4xbf16>
    %c0_32 = arith.constant 0 : index
    %c0_33 = arith.constant 0 : index
    %c20 = arith.constant 20 : index
    %32 = vector.load %arg6[%c0_32, %c0_33, %c20] : memref<16x16x128xbf16, #tpu.memory_space<vmem>>, vector<16x16x4xbf16>
    tpu.vector_store %arg6[%c0_32, %c0_33, %c20], %31 {strides = array<i32>} : memref<16x16x128xbf16, #tpu.memory_space<vmem>>, vector<16x16x4xbf16>,
    %c2_i32 = arith.constant 2 : i32
    %33 = arith.addi %0, %c2_i32 : i32
    %c0_34 = arith.constant 0 : index
    %34 = arith.index_cast %33 : i32 to index
    %c0_35 = arith.constant 0 : index
    %c0_36 = arith.constant 0 : index
    %35 = vector.load %arg2[%c0_34, %34, %c0_35, %c0_36] : memref<1x18x18x4xbf16, #tpu.memory_space<vmem>>, vector<1x16x16x4xbf16>
    %36 = vector.shape_cast %35 : vector<1x16x16x4xbf16> to vector<16x16x4xbf16>
    %c0_37 = arith.constant 0 : index
    %c0_38 = arith.constant 0 : index
    %c24 = arith.constant 24 : index
    %37 = vector.load %arg6[%c0_37, %c0_38, %c24] : memref<16x16x128xbf16, #tpu.memory_space<vmem>>, vector<16x16x4xbf16>
    tpu.vector_store %arg6[%c0_37, %c0_38, %c24], %36 {strides = array<i32>} : memref<16x16x128xbf16, #tpu.memory_space<vmem>>, vector<16x16x4xbf16>,
    %c2_i32_39 = arith.constant 2 : i32
    %38 = arith.addi %0, %c2_i32_39 : i32
    %c0_40 = arith.constant 0 : index
    %39 = arith.index_cast %38 : i32 to index
    %c1_41 = arith.constant 1 : index
    %c0_42 = arith.constant 0 : index
    %40 = vector.load %arg2[%c0_40, %39, %c1_41, %c0_42] : memref<1x18x18x4xbf16, #tpu.memory_space<vmem>>, vector<1x16x16x4xbf16>
    %41 = vector.shape_cast %40 : vector<1x16x16x4xbf16> to vector<16x16x4xbf16>
    %c0_43 = arith.constant 0 : index
    %c0_44 = arith.constant 0 : index
    %c28 = arith.constant 28 : index
    %42 = vector.load %arg6[%c0_43, %c0_44, %c28] : memref<16x16x128xbf16, #tpu.memory_space<vmem>>, vector<16x16x4xbf16>
    tpu.vector_store %arg6[%c0_43, %c0_44, %c28], %41 {strides = array<i32>} : memref<16x16x128xbf16, #tpu.memory_space<vmem>>, vector<16x16x4xbf16>,
    %c2_i32_45 = arith.constant 2 : i32
    %43 = arith.addi %0, %c2_i32_45 : i32
    %c0_46 = arith.constant 0 : index
    %44 = arith.index_cast %43 : i32 to index
    %c2_47 = arith.constant 2 : index
    %c0_48 = arith.constant 0 : index
    %45 = vector.load %arg2[%c0_46, %44, %c2_47, %c0_48] : memref<1x18x18x4xbf16, #tpu.memory_space<vmem>>, vector<1x16x16x4xbf16>
    %46 = vector.shape_cast %45 : vector<1x16x16x4xbf16> to vector<16x16x4xbf16>
    %c0_49 = arith.constant 0 : index
    %c0_50 = arith.constant 0 : index
    %c32 = arith.constant 32 : index
    %47 = vector.load %arg6[%c0_49, %c0_50, %c32] : memref<16x16x128xbf16, #tpu.memory_space<vmem>>, vector<16x16x4xbf16>
    tpu.vector_store %arg6[%c0_49, %c0_50, %c32], %46 {strides = array<i32>} : memref<16x16x128xbf16, #tpu.memory_space<vmem>>, vector<16x16x4xbf16>,
    %c0_51 = arith.constant 0 : index
    %c0_52 = arith.constant 0 : index
    %48 = vector.load %arg3[%c0_51, %c0_52] : memref<128x128xbf16, #tpu.memory_space<vmem>>, vector<128x128xbf16>
    %c0_53 = arith.constant 0 : index
    %c0_54 = arith.constant 0 : index
    %49 = vector.load %arg4[%c0_53, %c0_54] : memref<1x128xf32, #tpu.memory_space<vmem>>, vector<1x128xf32>
    %c0_55 = arith.constant 0 : index
    %c0_56 = arith.constant 0 : index
    %c0_57 = arith.constant 0 : index
    %50 = vector.load %arg6[%c0_55, %c0_56, %c0_57] : memref<16x16x128xbf16, #tpu.memory_space<vmem>>, vector<16x16x128xbf16>
    %51 = vector.shape_cast %50 : vector<16x16x128xbf16> to vector<256x128xbf16>
    %cst_58 = arith.constant dense<0.000000e+00> : vector<256x128xf32>
    %52 = tpu.matmul %51, %48, %cst_58 {dimension_numbers = #tpu.dot_dimension_numbers<[1], [0], [0], [1], [0, 0, 1, 1], [], []>} : vector<256x128xbf16>, vector<128x128xbf16>, vector<256x128xf32> -> vector<256x128xf32>
    %53 = vector.broadcast %49 : vector<1x128xf32> to vector<256x128xf32>
    %54 = arith.addf %52, %53 : vector<256x128xf32>
    %55 = arith.truncf %54 : vector<256x128xf32> to vector<256x128xbf16>
    %c0_59 = arith.constant 0 : index
    %c0_60 = arith.constant 0 : index
    %c0_61 = arith.constant 0 : index
    %56 = vector.load %arg5[%c0_59, %c0_60, %c0_61] : memref<1x256x128xbf16, #tpu.memory_space<vmem>>, vector<1x256x128xbf16>
    %57 = vector.shape_cast %56 : vector<1x256x128xbf16> to vector<256x128xbf16>
    %58 = vector.shape_cast %55 : vector<256x128xbf16> to vector<1x256x128xbf16>
    tpu.vector_store %arg5[%c0_59, %c0_60, %c0_61], %58 {strides = array<i32>} : memref<1x256x128xbf16, #tpu.memory_space<vmem>>, vector<1x256x128xbf16>,
    return
  }
  func.func @transform_0(%arg0: i32, %arg1: i32) -> (i32, i32, i32, i32) {
    %c0_i32 = arith.constant 0 : i32
    %c0_i32_0 = arith.constant 0 : i32
    %c0_i32_1 = arith.constant 0 : i32
    %c0_i32_2 = arith.constant 0 : i32
    return %arg0, %c0_i32, %c0_i32_0, %c0_i32_1 : i32, i32, i32, i32
  }
  func.func @transform_1(%arg0: i32, %arg1: i32) -> (i32, i32) {
    %c0_i32 = arith.constant 0 : i32
    %c0_i32_0 = arith.constant 0 : i32
    %c0_i32_1 = arith.constant 0 : i32
    return %c0_i32, %c0_i32_0 : i32, i32
  }
  func.func @transform_2(%arg0: i32, %arg1: i32) -> (i32, i32) {
    %c0_i32 = arith.constant 0 : i32
    %c0_i32_0 = arith.constant 0 : i32
    %c0_i32_1 = arith.constant 0 : i32
    return %c0_i32, %c0_i32_0 : i32, i32
  }
  func.func @transform_3(%arg0: i32, %arg1: i32) -> (i32, i32, i32) {
    %c0_i32 = arith.constant 0 : i32
    %c0_i32_0 = arith.constant 0 : i32
    return %arg0, %arg1, %c0_i32 : i32, i32, i32
  }
}

</mosaic_0001>

<llo_original>
// kernel: tpu_custom_call.1
$region0: #{tpu_custom_call.1}
  #allocation0 [shape = 'u32[]', space=smem, size = 0x4, offset = 0x4, fixed_abs, tag = 'smem constant byte address 0x4 - core index']
  #allocation1 [shape = 'u32[144,128]{1,0:T(1,128)}', space=vmem, size = 0x12000, scoped, tag = 'internal scratch']
  #allocation2 [shape = 'bf16[16,16,128]{2,1,0:T(8,128)(2,1)}', space=vmem, size = 0x10000, scoped, tag = 'scratch operand']
  %s0 = inlined_call_operand.vmem [shape: bf16[2,18,18,4], index: 0, kind: input, shape index: {}]
  %s1 = inlined_call_operand.vmem [shape: bf16[128,128], index: 1, kind: input, shape index: {}]
  %s2 = inlined_call_operand.vmem [shape: f32[1,128], index: 2, kind: input, shape index: {}]
  %s3 = inlined_call_operand.hbm [shape: bf16[2,256,128], index: 3, kind: output, shape index: {}]
  %s4 = sld [smem:[#allocation0]]
  $region45: #{tpu_custom_call.1} parent=0
    _
  %s6 = ssub.s32 1, %s4
  %s7 = scalar_select 0, %s6, %s4
  $region1: #{tpu_custom_call.1} parent=0
    #allocation3 [shape = 'u8[131072]{0}', space=vmem, size = 0x20000, scoped, tag = 'output window, operand 0']
    #allocation4 [shape = 's32[2]{0}', space=sflag, size = 0x8, scoped, tag = 'scoped memory for tpu_custom_call.1']
    %8 = vsyncpa [#allocation4], 0
    %s9 = scalar_lea.sflag [#allocation4], 1
    %10 = vsyncpa %s9, 0
    loop: start=0, step=1, limit=4
    $region2: #{tpu_custom_call.1} parent=1 // loop_pre_header
      _
    $region3: #{tpu_custom_call.1} parent=1 // loop_header
      %s12 = sphi 0, %s16
      %p13 = scmp.ge.s32.totalorder %s12, 4
      %s19 = sphi 0, %s31
      %s20 = sphi 0, %s27
      %s21 = sphi 0, %s19
      %s22 = sphi 0, %s20
      %s23 = sphi 0, %s21
      %s24 = sphi 0, %s22
      %s34 = sphi 0, %s36
      %s37 = sphi 0, %s34
      %s38 = sphi 0, %s37
      %s54 = sphi 0, %s38
      %s58 = sphi 0, %s58
      %s60 = sphi 0, %s58
      %s61 = sphi 0, %s60
      %s75 = sphi 0, %s61
      %s79 = sphi 0, %s79
      %s81 = sphi 0, %s79
      %s82 = sphi 0, %s81
      %s96 = sphi 0, %s82
      %s104 = sphi 0, %s106
      %s107 = sphi 0, %s104
      %s108 = sphi 0, %s107
      %s124 = sphi 0, %s108
    $region4: #{tpu_custom_call.1} parent=1 // loop_header_branch
      %15 = sbr.rel (%p13) target = $region8
    $region5: #{tpu_custom_call.1} parent=1 // loop_body
      %s17 = ssub.s32 %s12, 1
      %s18 = ssub.s32 %s12, 2
      %s25 = sadd.s32 1, %s20
      %p26 = scmp.ge.s32.totalorder %s25, 1
      %s27 = scalar_select %p26, 0, %s25
      %s28 = sadd.s32 1, %s19
      %s29 = scalar_select %p26, %s28, %s19
      %p30 = scmp.ge.s32.totalorder %s29, 2
      %s31 = scalar_select %p30, 0, %s29
      %s32 = ssub.s32 %s19, %s31
      %p33 = scmp.eq.s32.totalorder %s32, 0
      %s35 = sadd.s32 %s34, 1
      %s36 = scalar_select %p33, %s34, %s35
      %p39 = pneg %p33
      %p40 = scmp.eq.s32.totalorder %s12, 1
      %p41 = por %p39, %p40
      %p42 = scmp.ne.s32.totalorder %s34, %s37
      %p43 = scmp.eq.s32.totalorder %s12, 0
      %p44 = por %p42, %p43
      %p45 = scmp.ne.s32.totalorder %s34, %s37
      %p46 = scmp.eq.s32.totalorder %s17, 1
      %p47 = por %p45, %p46
      %p48 = scmp.ne.s32.totalorder %s37, %s38
      %p49 = scmp.eq.s32.totalorder %s17, 0
      %p50 = por %p48, %p49
      %p51 = scmp.ne.s32.totalorder %s37, %s38
      %p52 = scmp.eq.s32.totalorder %s18, 1
      %p53 = por %p51, %p52
      %p55 = scmp.ne.s32.totalorder %s38, %s54
      %p56 = scmp.eq.s32.totalorder %s18, 0
      %p57 = por %p55, %p56
      %s59 = sadd.s32 %s58, 1
      %p62 = scmp.eq.s32.totalorder %s12, 1
      %p63 = scmp.ne.s32.totalorder %s58, %s60
      %p64 = scmp.eq.s32.totalorder %s12, 0
      %p65 = por %p63, %p64
      %p66 = scmp.ne.s32.totalorder %s58, %s60
      %p67 = scmp.eq.s32.totalorder %s17, 1
      %p68 = por %p66, %p67
      %p69 = scmp.ne.s32.totalorder %s60, %s61
      %p70 = scmp.eq.s32.totalorder %s17, 0
      %p71 = por %p69, %p70
      %p72 = scmp.ne.s32.totalorder %s60, %s61
      %p73 = scmp.eq.s32.totalorder %s18, 1
      %p74 = por %p72, %p73
      %p76 = scmp.ne.s32.totalorder %s61, %s75
      %p77 = scmp.eq.s32.totalorder %s18, 0
      %p78 = por %p76, %p77
      %s80 = sadd.s32 %s79, 1
      %p83 = scmp.eq.s32.totalorder %s12, 1
      %p84 = scmp.ne.s32.totalorder %s79, %s81
      %p85 = scmp.eq.s32.totalorder %s12, 0
      %p86 = por %p84, %p85
      %p87 = scmp.ne.s32.totalorder %s79, %s81
      %p88 = scmp.eq.s32.totalorder %s17, 1
      %p89 = por %p87, %p88
      %p90 = scmp.ne.s32.totalorder %s81, %s82
      %p91 = scmp.eq.s32.totalorder %s17, 0
      %p92 = por %p90, %p91
      %p93 = scmp.ne.s32.totalorder %s81, %s82
      %p94 = scmp.eq.s32.totalorder %s18, 1
      %p95 = por %p93, %p94
      %p97 = scmp.ne.s32.totalorder %s82, %s96
      %p98 = scmp.eq.s32.totalorder %s18, 0
      %p99 = por %p97, %p98
      %s100 = ssub.s32 %s19, %s31
      %s101 = ssub.s32 %s20, %s27
      %s102 = sor.u32 %s100, %s101
      %p103 = scmp.eq.s32.totalorder %s102, 0
      %s105 = sadd.s32 %s104, 1
      %s106 = scalar_select %p103, %s104, %s105
      %p109 = pneg %p103
      %p110 = scmp.eq.s32.totalorder %s12, 1
      %p111 = por %p109, %p110
      %p112 = scmp.ne.s32.totalorder %s104, %s107
      %p113 = scmp.eq.s32.totalorder %s12, 0
      %p114 = por %p112, %p113
      %p115 = scmp.ne.s32.totalorder %s104, %s107
      %p116 = scmp.eq.s32.totalorder %s17, 1
      %p117 = por %p115, %p116
      %p118 = scmp.ne.s32.totalorder %s107, %s108
      %p119 = scmp.eq.s32.totalorder %s17, 0
      %p120 = por %p118, %p119
      %p121 = scmp.ne.s32.totalorder %s107, %s108
      %p122 = scmp.eq.s32.totalorder %s18, 1
      %p123 = por %p121, %p122
      %p125 = scmp.ne.s32.totalorder %s108, %s124
      %p126 = scmp.eq.s32.totalorder %s18, 0
      %p127 = por %p125, %p126
      %p128 = scmp.le.s32.totalorder 1, %s12
      %p129 = scmp.lt.s32.totalorder %s12, 3
      %p130 = pnand %p128, %p129
      %p131 = pneg %p130
      // Predicated region
      $region9: #{tpu_custom_call.1} parent=5 // pred_check
        _
      $region10: #{tpu_custom_call.1} parent=5 // pred_check_branch
        %133 = sbr.rel (%p130) target = $region12
      $region11: #{tpu_custom_call.1} parent=5 // pred_region
        %s134 = ssub.s32 %s12, 1
        // Predicated region
        $region13: #{tpu_custom_call.1} parent=11 // pred_check
          %p135 = pneg %p71
        $region14: #{tpu_custom_call.1} parent=11 // pred_check_branch
          %137 = sbr.rel (%p135) target = $region16
        $region15: #{tpu_custom_call.1} parent=11 // pred_region
          _
        $region16: #{tpu_custom_call.1} parent=11 // pred_fallthru
          _
        // Predicated region
        $region17: #{tpu_custom_call.1} parent=11 // pred_check
          %p138 = pneg %p92
        $region18: #{tpu_custom_call.1} parent=11 // pred_check_branch
          %140 = sbr.rel (%p138) target = $region20
        $region19: #{tpu_custom_call.1} parent=11 // pred_region
          _
        $region20: #{tpu_custom_call.1} parent=11 // pred_fallthru
          _
      $region12: #{tpu_custom_call.1} parent=5 // pred_fallthru
        _
      %p141 = scmp.lt.s32.totalorder %s12, 2
      // Predicated region
      $region21: #{tpu_custom_call.1} parent=5 // pred_check
        %p142 = pneg %p141
      $region22: #{tpu_custom_call.1} parent=5 // pred_check_branch
        %144 = sbr.rel (%p142) target = $region24
      $region23: #{tpu_custom_call.1} parent=5 // pred_region
        // Predicated region
        $region25: #{tpu_custom_call.1} parent=23 // pred_check
          %p145 = pneg %p44
        $region26: #{tpu_custom_call.1} parent=23 // pred_check_branch
          %147 = sbr.rel (%p145) target = $region28
        $region27: #{tpu_custom_call.1} parent=23 // pred_region
          %p148 = scmp.lt.s32.totalorder %s19, 1
          %s149 = scalar_select %p148, %s19, 1
          %s150 = smul.addr %s149, 54
          %s151 = smul.addr %s150, 4
          %s152 = scalar_lea.vmem %s0, %s151
        $region28: #{tpu_custom_call.1} parent=23 // pred_fallthru
          _
      $region24: #{tpu_custom_call.1} parent=5 // pred_fallthru
        _
      %p153 = scmp.le.s32.totalorder 1, %s12
      %p154 = scmp.lt.s32.totalorder %s12, 3
      %p155 = pnand %p153, %p154
      %p156 = pneg %p155
      // Predicated region
      $region29: #{tpu_custom_call.1} parent=5 // pred_check
        _
      $region30: #{tpu_custom_call.1} parent=5 // pred_check_branch
        %158 = sbr.rel (%p155) target = $region32
      $region31: #{tpu_custom_call.1} parent=5 // pred_region
        %s159 = ssub.s32 %s12, 1
        %p160 = scmp.lt.s32.totalorder %s21, 1
        %s161 = scalar_select %p160, %s21, 1
        %s162 = smul.addr %s161, 54
        %s163 = smul.addr %s162, 4
        %s164 = scalar_lea.vmem %s0, %s163
        %p165 = pneg %p50
        %p166 = pneg %p47
        %p167 = pneg %p71
        %p168 = pneg %p68
        %p169 = pneg %p92
        %p170 = pneg %p89
        %p171 = pneg %p120
        %p172 = pneg %p117
        %s173 = sand.u32 %s107, 1
        %s174 = scalar_lea.sflag [#allocation4], %s173
        %s175 = sand.u32 %s107, 1
        %s176 = smul.addr %s175, 128
        %s177 = scalar_lea.vmem [#allocation3], %s176
        %p178 = scmp.lt.s32.totalorder %s21, 1
        %s179 = scalar_select %p178, %s21, 1
        %s180 = smul.addr %s179, 54
        %s181 = smul.addr %s180, 4
        %s182 = scalar_lea.vmem %s0, %s181
        %s183 = smul.u32 32, %s22
        %s185 = smul.u32 %s22, 16
        %vm186 = vcmask 1043744
        %187 = vst.msk [vmem:[#allocation2] sm:$0xf] %vm186, 0
        %188 = vst.msk [vmem:[#allocation2 + $0x4] sm:$0xf] %vm186, 0
        %189 = vst.msk [vmem:[#allocation2 + $0x8] sm:$0xf] %vm186, 0
        %190 = vst.msk [vmem:[#allocation2 + $0xc] sm:$0xf] %vm186, 0
        %191 = vst.msk [vmem:[#allocation2 + $0x10] sm:$0xf] %vm186, 0
        %192 = vst.msk [vmem:[#allocation2 + $0x14] sm:$0xf] %vm186, 0
        %193 = vst.msk [vmem:[#allocation2 + $0x18] sm:$0xf] %vm186, 0
        %194 = vst.msk [vmem:[#allocation2 + $0x1c] sm:$0xf] %vm186, 0
        %195 = vst.msk [vmem:[#allocation2 + $0x20] sm:$0xf] %vm186, 0
        %196 = vst.msk [vmem:[#allocation2 + $0x24] sm:$0xf] %vm186, 0
        %197 = vst.msk [vmem:[#allocation2 + $0x28] sm:$0xf] %vm186, 0
        %198 = vst.msk [vmem:[#allocation2 + $0x2c] sm:$0xf] %vm186, 0
        %199 = vst.msk [vmem:[#allocation2 + $0x30] sm:$0xf] %vm186, 0
        %200 = vst.msk [vmem:[#allocation2 + $0x34] sm:$0xf] %vm186, 0
        %201 = vst.msk [vmem:[#allocation2 + $0x38] sm:$0xf] %vm186, 0
        %202 = vst.msk [vmem:[#allocation2 + $0x3c] sm:$0xf] %vm186, 0
        %203 = vst.msk [vmem:[#allocation2 + $0x40] sm:$0xf] %vm186, 0
        %204 = vst.msk [vmem:[#allocation2 + $0x44] sm:$0xf] %vm186, 0
        %205 = vst.msk [vmem:[#allocation2 + $0x48] sm:$0xf] %vm186, 0
        %206 = vst.msk [vmem:[#allocation2 + $0x4c] sm:$0xf] %vm186, 0
        %207 = vst.msk [vmem:[#allocation2 + $0x50] sm:$0xf] %vm186, 0
        %208 = vst.msk [vmem:[#allocation2 + $0x54] sm:$0xf] %vm186, 0
        %209 = vst.msk [vmem:[#allocation2 + $0x58] sm:$0xf] %vm186, 0
        %210 = vst.msk [vmem:[#allocation2 + $0x5c] sm:$0xf] %vm186, 0
        %211 = vst.msk [vmem:[#allocation2 + $0x60] sm:$0xf] %vm186, 0
        %212 = vst.msk [vmem:[#allocation2 + $0x64] sm:$0xf] %vm186, 0
        %213 = vst.msk [vmem:[#allocation2 + $0x68] sm:$0xf] %vm186, 0
        %214 = vst.msk [vmem:[#allocation2 + $0x6c] sm:$0xf] %vm186, 0
        %215 = vst.msk [vmem:[#allocation2 + $0x70] sm:$0xf] %vm186, 0
        %216 = vst.msk [vmem:[#allocation2 + $0x74] sm:$0xf] %vm186, 0
        %217 = vst.msk [vmem:[#allocation2 + $0x78] sm:$0xf] %vm186, 0
        %218 = vst.msk [vmem:[#allocation2 + $0x7c] sm:$0xf] %vm186, 0
        %s219 = smul.u32 %s185, 3
        %s220 = smul.addr %s219, 4
        %s221 = scalar_lea.vmem %s182, %s220
        %v222 = vld [vmem:[%s221] sm:$0xf]
        %v223 = vld [vmem:[%s221 + $0x4] sm:$0xf]
        %v224 = vld [vmem:[%s221 + $0xc] sm:$0xf]
        %v225 = vld [vmem:[%s221 + $0x10] sm:$0xf]
        %v226 = vld [vmem:[%s221 + $0x18] sm:$0xf]
        %v227 = vld [vmem:[%s221 + $0x1c] sm:$0xf]
        %v228 = vld [vmem:[%s221 + $0x24] sm:$0xf]
        %v229 = vld [vmem:[%s221 + $0x28] sm:$0xf]
        %v230 = vld [vmem:[%s221 + $0x30] sm:$0xf]
        %v231 = vld [vmem:[%s221 + $0x34] sm:$0xf]
        %v232 = vld [vmem:[%s221 + $0x3c] sm:$0xf]
        %v233 = vld [vmem:[%s221 + $0x40] sm:$0xf]
        %v234 = vld [vmem:[%s221 + $0x48] sm:$0xf]
        %v235 = vld [vmem:[%s221 + $0x4c] sm:$0xf]
        %v236 = vld [vmem:[%s221 + $0x54] sm:$0xf]
        %v237 = vld [vmem:[%s221 + $0x58] sm:$0xf]
        %v238 = vld [vmem:[%s221 + $0x60] sm:$0xf]
        %v239 = vld [vmem:[%s221 + $0x64] sm:$0xf]
        %v240 = vld [vmem:[%s221 + $0x6c] sm:$0xf]
        %v241 = vld [vmem:[%s221 + $0x70] sm:$0xf]
        %v242 = vld [vmem:[%s221 + $0x78] sm:$0xf]
        %v243 = vld [vmem:[%s221 + $0x7c] sm:$0xf]
        %v244 = vld [vmem:[%s221 + $0x84] sm:$0xf]
        %v245 = vld [vmem:[%s221 + $0x88] sm:$0xf]
        %v246 = vld [vmem:[%s221 + $0x90] sm:$0xf]
        %v247 = vld [vmem:[%s221 + $0x94] sm:$0xf]
        %v248 = vld [vmem:[%s221 + $0x9c] sm:$0xf]
        %v249 = vld [vmem:[%s221 + $0xa0] sm:$0xf]
        %v250 = vld [vmem:[%s221 + $0xa8] sm:$0xf]
        %v251 = vld [vmem:[%s221 + $0xac] sm:$0xf]
        %v252 = vld [vmem:[%s221 + $0xb4] sm:$0xf]
        %v253 = vld [vmem:[%s221 + $0xb8] sm:$0xf]
        %vm254 = vcmask 27648
        %255 = vst.msk [vmem:[#allocation2] sm:$0xf] %vm254, %v222
        %256 = vst.msk [vmem:[#allocation2 + $0x4] sm:$0xf] %vm254, %v223
        %257 = vst.msk [vmem:[#allocation2 + $0x8] sm:$0xf] %vm254, %v224
        %258 = vst.msk [vmem:[#allocation2 + $0xc] sm:$0xf] %vm254, %v225
        %259 = vst.msk [vmem:[#allocation2 + $0x10] sm:$0xf] %vm254, %v226
        %260 = vst.msk [vmem:[#allocation2 + $0x14] sm:$0xf] %vm254, %v227
        %261 = vst.msk [vmem:[#allocation2 + $0x18] sm:$0xf] %vm254, %v228
        %262 = vst.msk [vmem:[#allocation2 + $0x1c] sm:$0xf] %vm254, %v229
        %263 = vst.msk [vmem:[#allocation2 + $0x20] sm:$0xf] %vm254, %v230
        %264 = vst.msk [vmem:[#allocation2 + $0x24] sm:$0xf] %vm254, %v231
        %265 = vst.msk [vmem:[#allocation2 + $0x28] sm:$0xf] %vm254, %v232
        %266 = vst.msk [vmem:[#allocation2 + $0x2c] sm:$0xf] %vm254, %v233
        %267 = vst.msk [vmem:[#allocation2 + $0x30] sm:$0xf] %vm254, %v234
        %268 = vst.msk [vmem:[#allocation2 + $0x34] sm:$0xf] %vm254, %v235
        %269 = vst.msk [vmem:[#allocation2 + $0x38] sm:$0xf] %vm254, %v236
        %270 = vst.msk [vmem:[#allocation2 + $0x3c] sm:$0xf] %vm254, %v237
        %271 = vst.msk [vmem:[#allocation2 + $0x40] sm:$0xf] %vm254, %v238
        %272 = vst.msk [vmem:[#allocation2 + $0x44] sm:$0xf] %vm254, %v239
        %273 = vst.msk [vmem:[#allocation2 + $0x48] sm:$0xf] %vm254, %v240
        %274 = vst.msk [vmem:[#allocation2 + $0x4c] sm:$0xf] %vm254, %v241
        %275 = vst.msk [vmem:[#allocation2 + $0x50] sm:$0xf] %vm254, %v242
        %276 = vst.msk [vmem:[#allocation2 + $0x54] sm:$0xf] %vm254, %v243
        %277 = vst.msk [vmem:[#allocation2 + $0x58] sm:$0xf] %vm254, %v244
        %278 = vst.msk [vmem:[#allocation2 + $0x5c] sm:$0xf] %vm254, %v245
        %279 = vst.msk [vmem:[#allocation2 + $0x60] sm:$0xf] %vm254, %v246
        %280 = vst.msk [vmem:[#allocation2 + $0x64] sm:$0xf] %vm254, %v247
        %281 = vst.msk [vmem:[#allocation2 + $0x68] sm:$0xf] %vm254, %v248
        %282 = vst.msk [vmem:[#allocation2 + $0x6c] sm:$0xf] %vm254, %v249
        %283 = vst.msk [vmem:[#allocation2 + $0x70] sm:$0xf] %vm254, %v250
        %284 = vst.msk [vmem:[#allocation2 + $0x74] sm:$0xf] %vm254, %v251
        %285 = vst.msk [vmem:[#allocation2 + $0x78] sm:$0xf] %vm254, %v252
        %286 = vst.msk [vmem:[#allocation2 + $0x7c] sm:$0xf] %vm254, %v253
        %v287 = vld [vmem:[%s221] sm:$0xf]
        %v288 = vld [vmem:[%s221 + $0x4] sm:$0xf]
        %v289 = vld [vmem:[%s221 + $0x8] sm:$0x1]
        %v290 = vld [vmem:[%s221 + $0xc] sm:$0xf]
        %v291 = vld [vmem:[%s221 + $0x10] sm:$0xf]
        %v292 = vld [vmem:[%s221 + $0x14] sm:$0x1]
        %v293 = vld [vmem:[%s221 + $0x18] sm:$0xf]
        %v294 = vld [vmem:[%s221 + $0x1c] sm:$0xf]
        %v295 = vld [vmem:[%s221 + $0x20] sm:$0x1]
        %v296 = vld [vmem:[%s221 + $0x24] sm:$0xf]
        %v297 = vld [vmem:[%s221 + $0x28] sm:$0xf]
        %v298 = vld [vmem:[%s221 + $0x2c] sm:$0x1]
        %v299 = vld [vmem:[%s221 + $0x30] sm:$0xf]
        %v300 = vld [vmem:[%s221 + $0x34] sm:$0xf]
        %v301 = vld [vmem:[%s221 + $0x38] sm:$0x1]
        %v302 = vld [vmem:[%s221 + $0x3c] sm:$0xf]
        %v303 = vld [vmem:[%s221 + $0x40] sm:$0xf]
        %v304 = vld [vmem:[%s221 + $0x44] sm:$0x1]
        %v305 = vld [vmem:[%s221 + $0x48] sm:$0xf]
        %v306 = vld [vmem:[%s221 + $0x4c] sm:$0xf]
        %v307 = vld [vmem:[%s221 + $0x50] sm:$0x1]
        %v308 = vld [vmem:[%s221 + $0x54] sm:$0xf]
        %v309 = vld [vmem:[%s221 + $0x58] sm:$0xf]
        %v310 = vld [vmem:[%s221 + $0x5c] sm:$0x1]
        %v311 = vld [vmem:[%s221 + $0x60] sm:$0xf]
        %v312 = vld [vmem:[%s221 + $0x64] sm:$0xf]
        %v313 = vld [vmem:[%s221 + $0x68] sm:$0x1]
        %v314 = vld [vmem:[%s221 + $0x6c] sm:$0xf]
        %v315 = vld [vmem:[%s221 + $0x70] sm:$0xf]
        %v316 = vld [vmem:[%s221 + $0x74] sm:$0x1]
        %v317 = vld [vmem:[%s221 + $0x78] sm:$0xf]
        %v318 = vld [vmem:[%s221 + $0x7c] sm:$0xf]
        %v319 = vld [vmem:[%s221 + $0x80] sm:$0x1]
        %v320 = vld [vmem:[%s221 + $0x84] sm:$0xf]
        %v321 = vld [vmem:[%s221 + $0x88] sm:$0xf]
        %v322 = vld [vmem:[%s221 + $0x8c] sm:$0x1]
        %v323 = vld [vmem:[%s221 + $0x90] sm:$0xf]
        %v324 = vld [vmem:[%s221 + $0x94] sm:$0xf]
        %v325 = vld [vmem:[%s221 + $0x98] sm:$0x1]
        %v326 = vld [vmem:[%s221 + $0x9c] sm:$0xf]
        %v327 = vld [vmem:[%s221 + $0xa0] sm:$0xf]
        %v328 = vld [vmem:[%s221 + $0xa4] sm:$0x1]
        %v329 = vld [vmem:[%s221 + $0xa8] sm:$0xf]
        %v330 = vld [vmem:[%s221 + $0xac] sm:$0xf]
        %v331 = vld [vmem:[%s221 + $0xb0] sm:$0x1]
        %v332 = vld [vmem:[%s221 + $0xb4] sm:$0xf]
        %v333 = vld [vmem:[%s221 + $0xb8] sm:$0xf]
        %v334 = vld [vmem:[%s221 + $0xbc] sm:$0x1]
        %vm335 = vsmask.f32 3328
        %vm336 = vsmask.f32 7440
        %vm337 = vmor %vm335, %vm336
        %v339 = vshrl.u32 %v287, 16
        %v341 = vrot.slane %v339, 4
        %v342 = vshll.u32 %v287, 16
        %v344 = vrot.slane %v342, 5
        %v345 = vor.u32 %v341, %v344
        %v346 = vrot.slane %v345, 4
        %v348 = vshll.u32 %v288, 16
        %v350 = vrot.slane %v348, 5
        %v351 = vsel %vm337, %v346, %v350
        %v352 = vshrl.u32 %v288, 16
        %v354 = vrot.slane %v352, 4
        %v355 = vor.u32 %v354, %v350
        %v356 = vrot.slane %v355, 4
        %v358 = vshll.u32 %v289, 16
        %v360 = vrot.slane %v358, 5
        %v361 = vsel %vm337, %v356, %v360
        %v363 = vshrl.u32 %v290, 16
        %v365 = vrot.slane %v363, 4
        %v366 = vshll.u32 %v290, 16
        %v368 = vrot.slane %v366, 5
        %v369 = vor.u32 %v365, %v368
        %v370 = vrot.slane %v369, 4
        %v372 = vshll.u32 %v291, 16
        %v374 = vrot.slane %v372, 5
        %v375 = vsel %vm337, %v370, %v374
        %v376 = vshrl.u32 %v291, 16
        %v378 = vrot.slane %v376, 4
        %v379 = vor.u32 %v378, %v374
        %v380 = vrot.slane %v379, 4
        %v382 = vshll.u32 %v292, 16
        %v384 = vrot.slane %v382, 5
        %v385 = vsel %vm337, %v380, %v384
        %v387 = vshrl.u32 %v293, 16
        %v389 = vrot.slane %v387, 4
        %v390 = vshll.u32 %v293, 16
        %v392 = vrot.slane %v390, 5
        %v393 = vor.u32 %v389, %v392
        %v394 = vrot.slane %v393, 4
        %v396 = vshll.u32 %v294, 16
        %v398 = vrot.slane %v396, 5
        %v399 = vsel %vm337, %v394, %v398
        %v400 = vshrl.u32 %v294, 16
        %v402 = vrot.slane %v400, 4
        %v403 = vor.u32 %v402, %v398
        %v404 = vrot.slane %v403, 4
        %v406 = vshll.u32 %v295, 16
        %v408 = vrot.slane %v406, 5
        %v409 = vsel %vm337, %v404, %v408
        %v411 = vshrl.u32 %v296, 16
        %v413 = vrot.slane %v411, 4
        %v414 = vshll.u32 %v296, 16
        %v416 = vrot.slane %v414, 5
        %v417 = vor.u32 %v413, %v416
        %v418 = vrot.slane %v417, 4
        %v420 = vshll.u32 %v297, 16
        %v422 = vrot.slane %v420, 5
        %v423 = vsel %vm337, %v418, %v422
        %v424 = vshrl.u32 %v297, 16
        %v426 = vrot.slane %v424, 4
        %v427 = vor.u32 %v426, %v422
        %v428 = vrot.slane %v427, 4
        %v430 = vshll.u32 %v298, 16
        %v432 = vrot.slane %v430, 5
        %v433 = vsel %vm337, %v428, %v432
        %v435 = vshrl.u32 %v299, 16
        %v437 = vrot.slane %v435, 4
        %v438 = vshll.u32 %v299, 16
        %v440 = vrot.slane %v438, 5
        %v441 = vor.u32 %v437, %v440
        %v442 = vrot.slane %v441, 4
        %v444 = vshll.u32 %v300, 16
        %v446 = vrot.slane %v444, 5
        %v447 = vsel %vm337, %v442, %v446
        %v448 = vshrl.u32 %v300, 16
        %v450 = vrot.slane %v448, 4
        %v451 = vor.u32 %v450, %v446
        %v452 = vrot.slane %v451, 4
        %v454 = vshll.u32 %v301, 16
        %v456 = vrot.slane %v454, 5
        %v457 = vsel %vm337, %v452, %v456
        %v459 = vshrl.u32 %v302, 16
        %v461 = vrot.slane %v459, 4
        %v462 = vshll.u32 %v302, 16
        %v464 = vrot.slane %v462, 5
        %v465 = vor.u32 %v461, %v464
        %v466 = vrot.slane %v465, 4
        %v468 = vshll.u32 %v303, 16
        %v470 = vrot.slane %v468, 5
        %v471 = vsel %vm337, %v466, %v470
        %v472 = vshrl.u32 %v303, 16
        %v474 = vrot.slane %v472, 4
        %v475 = vor.u32 %v474, %v470
        %v476 = vrot.slane %v475, 4
        %v478 = vshll.u32 %v304, 16
        %v480 = vrot.slane %v478, 5
        %v481 = vsel %vm337, %v476, %v480
        %v483 = vshrl.u32 %v305, 16
        %v485 = vrot.slane %v483, 4
        %v486 = vshll.u32 %v305, 16
        %v488 = vrot.slane %v486, 5
        %v489 = vor.u32 %v485, %v488
        %v490 = vrot.slane %v489, 4
        %v492 = vshll.u32 %v306, 16
        %v494 = vrot.slane %v492, 5
        %v495 = vsel %vm337, %v490, %v494
        %v496 = vshrl.u32 %v306, 16
        %v498 = vrot.slane %v496, 4
        %v499 = vor.u32 %v498, %v494
        %v500 = vrot.slane %v499, 4
        %v502 = vshll.u32 %v307, 16
        %v504 = vrot.slane %v502, 5
        %v505 = vsel %vm337, %v500, %v504
        %v507 = vshrl.u32 %v308, 16
        %v509 = vrot.slane %v507, 4
        %v510 = vshll.u32 %v308, 16
        %v512 = vrot.slane %v510, 5
        %v513 = vor.u32 %v509, %v512
        %v514 = vrot.slane %v513, 4
        %v516 = vshll.u32 %v309, 16
        %v518 = vrot.slane %v516, 5
        %v519 = vsel %vm337, %v514, %v518
        %v520 = vshrl.u32 %v309, 16
        %v522 = vrot.slane %v520, 4
        %v523 = vor.u32 %v522, %v518
        %v524 = vrot.slane %v523, 4
        %v526 = vshll.u32 %v310, 16
        %v528 = vrot.slane %v526, 5
        %v529 = vsel %vm337, %v524, %v528
        %v531 = vshrl.u32 %v311, 16
        %v533 = vrot.slane %v531, 4
        %v534 = vshll.u32 %v311, 16
        %v536 = vrot.slane %v534, 5
        %v537 = vor.u32 %v533, %v536
        %v538 = vrot.slane %v537, 4
        %v540 = vshll.u32 %v312, 16
        %v542 = vrot.slane %v540, 5
        %v543 = vsel %vm337, %v538, %v542
        %v544 = vshrl.u32 %v312, 16
        %v546 = vrot.slane %v544, 4
        %v547 = vor.u32 %v546, %v542
        %v548 = vrot.slane %v547, 4
        %v550 = vshll.u32 %v313, 16
        %v552 = vrot.slane %v550, 5
        %v553 = vsel %vm337, %v548, %v552
        %v555 = vshrl.u32 %v314, 16
        %v557 = vrot.slane %v555, 4
        %v558 = vshll.u32 %v314, 16
        %v560 = vrot.slane %v558, 5
        %v561 = vor.u32 %v557, %v560
        %v562 = vrot.slane %v561, 4
        %v564 = vshll.u32 %v315, 16
        %v566 = vrot.slane %v564, 5
        %v567 = vsel %vm337, %v562, %v566
        %v568 = vshrl.u32 %v315, 16
        %v570 = vrot.slane %v568, 4
        %v571 = vor.u32 %v570, %v566
        %v572 = vrot.slane %v571, 4
        %v574 = vshll.u32 %v316, 16
        %v576 = vrot.slane %v574, 5
        %v577 = vsel %vm337, %v572, %v576
        %v579 = vshrl.u32 %v317, 16
        %v581 = vrot.slane %v579, 4
        %v582 = vshll.u32 %v317, 16
        %v584 = vrot.slane %v582, 5
        %v585 = vor.u32 %v581, %v584
        %v586 = vrot.slane %v585, 4
        %v588 = vshll.u32 %v318, 16
        %v590 = vrot.slane %v588, 5
        %v591 = vsel %vm337, %v586, %v590
        %v592 = vshrl.u32 %v318, 16
        %v594 = vrot.slane %v592, 4
        %v595 = vor.u32 %v594, %v590
        %v596 = vrot.slane %v595, 4
        %v598 = vshll.u32 %v319, 16
        %v600 = vrot.slane %v598, 5
        %v601 = vsel %vm337, %v596, %v600
        %v603 = vshrl.u32 %v320, 16
        %v605 = vrot.slane %v603, 4
        %v606 = vshll.u32 %v320, 16
        %v608 = vrot.slane %v606, 5
        %v609 = vor.u32 %v605, %v608
        %v610 = vrot.slane %v609, 4
        %v612 = vshll.u32 %v321, 16
        %v614 = vrot.slane %v612, 5
        %v615 = vsel %vm337, %v610, %v614
        %v616 = vshrl.u32 %v321, 16
        %v618 = vrot.slane %v616, 4
        %v619 = vor.u32 %v618, %v614
        %v620 = vrot.slane %v619, 4
        %v622 = vshll.u32 %v322, 16
        %v624 = vrot.slane %v622, 5
        %v625 = vsel %vm337, %v620, %v624
        %v627 = vshrl.u32 %v323, 16
        %v629 = vrot.slane %v627, 4
        %v630 = vshll.u32 %v323, 16
        %v632 = vrot.slane %v630, 5
        %v633 = vor.u32 %v629, %v632
        %v634 = vrot.slane %v633, 4
        %v636 = vshll.u32 %v324, 16
        %v638 = vrot.slane %v636, 5
        %v639 = vsel %vm337, %v634, %v638
        %v640 = vshrl.u32 %v324, 16
        %v642 = vrot.slane %v640, 4
        %v643 = vor.u32 %v642, %v638
        %v644 = vrot.slane %v643, 4
        %v646 = vshll.u32 %v325, 16
        %v648 = vrot.slane %v646, 5
        %v649 = vsel %vm337, %v644, %v648
        %v651 = vshrl.u32 %v326, 16
        %v653 = vrot.slane %v651, 4
        %v654 = vshll.u32 %v326, 16
        %v656 = vrot.slane %v654, 5
        %v657 = vor.u32 %v653, %v656
        %v658 = vrot.slane %v657, 4
        %v660 = vshll.u32 %v327, 16
        %v662 = vrot.slane %v660, 5
        %v663 = vsel %vm337, %v658, %v662
        %v664 = vshrl.u32 %v327, 16
        %v666 = vrot.slane %v664, 4
        %v667 = vor.u32 %v666, %v662
        %v668 = vrot.slane %v667, 4
        %v670 = vshll.u32 %v328, 16
        %v672 = vrot.slane %v670, 5
        %v673 = vsel %vm337, %v668, %v672
        %v675 = vshrl.u32 %v329, 16
        %v677 = vrot.slane %v675, 4
        %v678 = vshll.u32 %v329, 16
        %v680 = vrot.slane %v678, 5
        %v681 = vor.u32 %v677, %v680
        %v682 = vrot.slane %v681, 4
        %v684 = vshll.u32 %v330, 16
        %v686 = vrot.slane %v684, 5
        %v687 = vsel %vm337, %v682, %v686
        %v688 = vshrl.u32 %v330, 16
        %v690 = vrot.slane %v688, 4
        %v691 = vor.u32 %v690, %v686
        %v692 = vrot.slane %v691, 4
        %v694 = vshll.u32 %v331, 16
        %v696 = vrot.slane %v694, 5
        %v697 = vsel %vm337, %v692, %v696
        %v699 = vshrl.u32 %v332, 16
        %v701 = vrot.slane %v699, 4
        %v702 = vshll.u32 %v332, 16
        %v704 = vrot.slane %v702, 5
        %v705 = vor.u32 %v701, %v704
        %v706 = vrot.slane %v705, 4
        %v708 = vshll.u32 %v333, 16
        %v710 = vrot.slane %v708, 5
        %v711 = vsel %vm337, %v706, %v710
        %v712 = vshrl.u32 %v333, 16
        %v714 = vrot.slane %v712, 4
        %v715 = vor.u32 %v714, %v710
        %v716 = vrot.slane %v715, 4
        %v718 = vshll.u32 %v334, 16
        %v720 = vrot.slane %v718, 5
        %v721 = vsel %vm337, %v716, %v720
        %722 = vrot.lane.b32.xlu0 %v351, 4
        %v723 = vpop.permute.xlu0 %722
        %724 = vrot.lane.b32.xlu0 %v361, 4
        %v725 = vpop.permute.xlu0 %724
        %726 = vrot.lane.b32.xlu0 %v375, 4
        %v727 = vpop.permute.xlu0 %726
        %728 = vrot.lane.b32.xlu0 %v385, 4
        %v729 = vpop.permute.xlu0 %728
        %730 = vrot.lane.b32.xlu0 %v399, 4
        %v731 = vpop.permute.xlu0 %730
        %732 = vrot.lane.b32.xlu0 %v409, 4
        %v733 = vpop.permute.xlu0 %732
        %734 = vrot.lane.b32.xlu0 %v423, 4
        %v735 = vpop.permute.xlu0 %734
        %736 = vrot.lane.b32.xlu0 %v433, 4
        %v737 = vpop.permute.xlu0 %736
        %738 = vrot.lane.b32.xlu0 %v447, 4
        %v739 = vpop.permute.xlu0 %738
        %740 = vrot.lane.b32.xlu0 %v457, 4
        %v741 = vpop.permute.xlu0 %740
        %742 = vrot.lane.b32.xlu0 %v471, 4
        %v743 = vpop.permute.xlu0 %742
        %744 = vrot.lane.b32.xlu0 %v481, 4
        %v745 = vpop.permute.xlu0 %744
        %746 = vrot.lane.b32.xlu0 %v495, 4
        %v747 = vpop.permute.xlu0 %746
        %748 = vrot.lane.b32.xlu0 %v505, 4
        %v749 = vpop.permute.xlu0 %748
        %750 = vrot.lane.b32.xlu0 %v519, 4
        %v751 = vpop.permute.xlu0 %750
        %752 = vrot.lane.b32.xlu0 %v529, 4
        %v753 = vpop.permute.xlu0 %752
        %754 = vrot.lane.b32.xlu0 %v543, 4
        %v755 = vpop.permute.xlu0 %754
        %756 = vrot.lane.b32.xlu0 %v553, 4
        %v757 = vpop.permute.xlu0 %756
        %758 = vrot.lane.b32.xlu0 %v567, 4
        %v759 = vpop.permute.xlu0 %758
        %760 = vrot.lane.b32.xlu0 %v577, 4
        %v761 = vpop.permute.xlu0 %760
        %762 = vrot.lane.b32.xlu0 %v591, 4
        %v763 = vpop.permute.xlu0 %762
        %764 = vrot.lane.b32.xlu0 %v601, 4
        %v765 = vpop.permute.xlu0 %764
        %766 = vrot.lane.b32.xlu0 %v615, 4
        %v767 = vpop.permute.xlu0 %766
        %768 = vrot.lane.b32.xlu0 %v625, 4
        %v769 = vpop.permute.xlu0 %768
        %770 = vrot.lane.b32.xlu0 %v639, 4
        %v771 = vpop.permute.xlu0 %770
        %772 = vrot.lane.b32.xlu0 %v649, 4
        %v773 = vpop.permute.xlu0 %772
        %774 = vrot.lane.b32.xlu0 %v663, 4
        %v775 = vpop.permute.xlu0 %774
        %776 = vrot.lane.b32.xlu0 %v673, 4
        %v777 = vpop.permute.xlu0 %776
        %778 = vrot.lane.b32.xlu0 %v687, 4
        %v779 = vpop.permute.xlu0 %778
        %780 = vrot.lane.b32.xlu0 %v697, 4
        %v781 = vpop.permute.xlu0 %780
        %782 = vrot.lane.b32.xlu0 %v711, 4
        %v783 = vpop.permute.xlu0 %782
        %784 = vrot.lane.b32.xlu0 %v721, 4
        %v785 = vpop.permute.xlu0 %784
        %vm818 = vcmask 60448
        %819 = vst.msk [vmem:[#allocation2] sm:$0xf] %vm818, %v723
        %820 = vst.msk [vmem:[#allocation2 + $0x4] sm:$0xf] %vm818, %v725
        %821 = vst.msk [vmem:[#allocation2 + $0x8] sm:$0xf] %vm818, %v727
        %822 = vst.msk [vmem:[#allocation2 + $0xc] sm:$0xf] %vm818, %v729
        %823 = vst.msk [vmem:[#allocation2 + $0x10] sm:$0xf] %vm818, %v731
        %824 = vst.msk [vmem:[#allocation2 + $0x14] sm:$0xf] %vm818, %v733
        %825 = vst.msk [vmem:[#allocation2 + $0x18] sm:$0xf] %vm818, %v735
        %826 = vst.msk [vmem:[#allocation2 + $0x1c] sm:$0xf] %vm818, %v737
        %827 = vst.msk [vmem:[#allocation2 + $0x20] sm:$0xf] %vm818, %v739
        %828 = vst.msk [vmem:[#allocation2 + $0x24] sm:$0xf] %vm818, %v741
        %829 = vst.msk [vmem:[#allocation2 + $0x28] sm:$0xf] %vm818, %v743
        %830 = vst.msk [vmem:[#allocation2 + $0x2c] sm:$0xf] %vm818, %v745
        %831 = vst.msk [vmem:[#allocation2 + $0x30] sm:$0xf] %vm818, %v747
        %832 = vst.msk [vmem:[#allocation2 + $0x34] sm:$0xf] %vm818, %v749
        %833 = vst.msk [vmem:[#allocation2 + $0x38] sm:$0xf] %vm818, %v751
        %834 = vst.msk [vmem:[#allocation2 + $0x3c] sm:$0xf] %vm818, %v753
        %835 = vst.msk [vmem:[#allocation2 + $0x40] sm:$0xf] %vm818, %v755
        %836 = vst.msk [vmem:[#allocation2 + $0x44] sm:$0xf] %vm818, %v757
        %837 = vst.msk [vmem:[#allocation2 + $0x48] sm:$0xf] %vm818, %v759
        %838 = vst.msk [vmem:[#allocation2 + $0x4c] sm:$0xf] %vm818, %v761
        %839 = vst.msk [vmem:[#allocation2 + $0x50] sm:$0xf] %vm818, %v763
        %840 = vst.msk [vmem:[#allocation2 + $0x54] sm:$0xf] %vm818, %v765
        %841 = vst.msk [vmem:[#allocation2 + $0x58] sm:$0xf] %vm818, %v767
        %842 = vst.msk [vmem:[#allocation2 + $0x5c] sm:$0xf] %vm818, %v769
        %843 = vst.msk [vmem:[#allocation2 + $0x60] sm:$0xf] %vm818, %v771
        %844 = vst.msk [vmem:[#allocation2 + $0x64] sm:$0xf] %vm818, %v773
        %845 = vst.msk [vmem:[#allocation2 + $0x68] sm:$0xf] %vm818, %v775
        %846 = vst.msk [vmem:[#allocation2 + $0x6c] sm:$0xf] %vm818, %v777
        %847 = vst.msk [vmem:[#allocation2 + $0x70] sm:$0xf] %vm818, %v779
        %848 = vst.msk [vmem:[#allocation2 + $0x74] sm:$0xf] %vm818, %v781
        %849 = vst.msk [vmem:[#allocation2 + $0x78] sm:$0xf] %vm818, %v783
        %850 = vst.msk [vmem:[#allocation2 + $0x7c] sm:$0xf] %vm818, %v785
        %v851 = vld [vmem:[%s221] sm:$0xe]
        %v852 = vld [vmem:[%s221 + $0x4] sm:$0xf]
        %v853 = vld [vmem:[%s221 + $0x8] sm:$0x1]
        %v854 = vld [vmem:[%s221 + $0xc] sm:$0xe]
        %v855 = vld [vmem:[%s221 + $0x10] sm:$0xf]
        %v856 = vld [vmem:[%s221 + $0x14] sm:$0x1]
        %v857 = vld [vmem:[%s221 + $0x18] sm:$0xe]
        %v858 = vld [vmem:[%s221 + $0x1c] sm:$0xf]
        %v859 = vld [vmem:[%s221 + $0x20] sm:$0x1]
        %v860 = vld [vmem:[%s221 + $0x24] sm:$0xe]
        %v861 = vld [vmem:[%s221 + $0x28] sm:$0xf]
        %v862 = vld [vmem:[%s221 + $0x2c] sm:$0x1]
        %v863 = vld [vmem:[%s221 + $0x30] sm:$0xe]
        %v864 = vld [vmem:[%s221 + $0x34] sm:$0xf]
        %v865 = vld [vmem:[%s221 + $0x38] sm:$0x1]
        %v866 = vld [vmem:[%s221 + $0x3c] sm:$0xe]
        %v867 = vld [vmem:[%s221 + $0x40] sm:$0xf]
        %v868 = vld [vmem:[%s221 + $0x44] sm:$0x1]
        %v869 = vld [vmem:[%s221 + $0x48] sm:$0xe]
        %v870 = vld [vmem:[%s221 + $0x4c] sm:$0xf]
        %v871 = vld [vmem:[%s221 + $0x50] sm:$0x1]
        %v872 = vld [vmem:[%s221 + $0x54] sm:$0xe]
        %v873 = vld [vmem:[%s221 + $0x58] sm:$0xf]
        %v874 = vld [vmem:[%s221 + $0x5c] sm:$0x1]
        %v875 = vld [vmem:[%s221 + $0x60] sm:$0xe]
        %v876 = vld [vmem:[%s221 + $0x64] sm:$0xf]
        %v877 = vld [vmem:[%s221 + $0x68] sm:$0x1]
        %v878 = vld [vmem:[%s221 + $0x6c] sm:$0xe]
        %v879 = vld [vmem:[%s221 + $0x70] sm:$0xf]
        %v880 = vld [vmem:[%s221 + $0x74] sm:$0x1]
        %v881 = vld [vmem:[%s221 + $0x78] sm:$0xe]
        %v882 = vld [vmem:[%s221 + $0x7c] sm:$0xf]
        %v883 = vld [vmem:[%s221 + $0x80] sm:$0x1]
        %v884 = vld [vmem:[%s221 + $0x84] sm:$0xe]
        %v885 = vld [vmem:[%s221 + $0x88] sm:$0xf]
        %v886 = vld [vmem:[%s221 + $0x8c] sm:$0x1]
        %v887 = vld [vmem:[%s221 + $0x90] sm:$0xe]
        %v888 = vld [vmem:[%s221 + $0x94] sm:$0xf]
        %v889 = vld [vmem:[%s221 + $0x98] sm:$0x1]
        %v890 = vld [vmem:[%s221 + $0x9c] sm:$0xe]
        %v891 = vld [vmem:[%s221 + $0xa0] sm:$0xf]
        %v892 = vld [vmem:[%s221 + $0xa4] sm:$0x1]
        %v893 = vld [vmem:[%s221 + $0xa8] sm:$0xe]
        %v894 = vld [vmem:[%s221 + $0xac] sm:$0xf]
        %v895 = vld [vmem:[%s221 + $0xb0] sm:$0x1]
        %v896 = vld [vmem:[%s221 + $0xb4] sm:$0xe]
        %v897 = vld [vmem:[%s221 + $0xb8] sm:$0xf]
        %v898 = vld [vmem:[%s221 + $0xbc] sm:$0x1]
        %vm947 = vcmask 1042432
        %vm948 = vcmask 1046532
        %vm949 = vmor %vm947, %vm948
        %v950 = vrot.slane %v851, 5
        %v951 = vrot.slane %v950, 4
        %v952 = vrot.slane %v852, 5
        %v953 = vsel %vm949, %v951, %v952
        %v954 = vrot.slane %v952, 4
        %v955 = vrot.slane %v853, 5
        %v956 = vsel %vm949, %v954, %v955
        %v957 = vrot.slane %v854, 5
        %v958 = vrot.slane %v957, 4
        %v959 = vrot.slane %v855, 5
        %v960 = vsel %vm949, %v958, %v959
        %v961 = vrot.slane %v959, 4
        %v962 = vrot.slane %v856, 5
        %v963 = vsel %vm949, %v961, %v962
        %v964 = vrot.slane %v857, 5
        %v965 = vrot.slane %v964, 4
        %v966 = vrot.slane %v858, 5
        %v967 = vsel %vm949, %v965, %v966
        %v968 = vrot.slane %v966, 4
        %v969 = vrot.slane %v859, 5
        %v970 = vsel %vm949, %v968, %v969
        %v971 = vrot.slane %v860, 5
        %v972 = vrot.slane %v971, 4
        %v973 = vrot.slane %v861, 5
        %v974 = vsel %vm949, %v972, %v973
        %v975 = vrot.slane %v973, 4
        %v976 = vrot.slane %v862, 5
        %v977 = vsel %vm949, %v975, %v976
        %v978 = vrot.slane %v863, 5
        %v979 = vrot.slane %v978, 4
        %v980 = vrot.slane %v864, 5
        %v981 = vsel %vm949, %v979, %v980
        %v982 = vrot.slane %v980, 4
        %v983 = vrot.slane %v865, 5
        %v984 = vsel %vm949, %v982, %v983
        %v985 = vrot.slane %v866, 5
        %v986 = vrot.slane %v985, 4
        %v987 = vrot.slane %v867, 5
        %v988 = vsel %vm949, %v986, %v987
        %v989 = vrot.slane %v987, 4
        %v990 = vrot.slane %v868, 5
        %v991 = vsel %vm949, %v989, %v990
        %v992 = vrot.slane %v869, 5
        %v993 = vrot.slane %v992, 4
        %v994 = vrot.slane %v870, 5
        %v995 = vsel %vm949, %v993, %v994
        %v996 = vrot.slane %v994, 4
        %v997 = vrot.slane %v871, 5
        %v998 = vsel %vm949, %v996, %v997
        %v999 = vrot.slane %v872, 5
        %v1000 = vrot.slane %v999, 4
        %v1001 = vrot.slane %v873, 5
        %v1002 = vsel %vm949, %v1000, %v1001
        %v1003 = vrot.slane %v1001, 4
        %v1004 = vrot.slane %v874, 5
        %v1005 = vsel %vm949, %v1003, %v1004
        %v1006 = vrot.slane %v875, 5
        %v1007 = vrot.slane %v1006, 4
        %v1008 = vrot.slane %v876, 5
        %v1009 = vsel %vm949, %v1007, %v1008
        %v1010 = vrot.slane %v1008, 4
        %v1011 = vrot.slane %v877, 5
        %v1012 = vsel %vm949, %v1010, %v1011
        %v1013 = vrot.slane %v878, 5
        %v1014 = vrot.slane %v1013, 4
        %v1015 = vrot.slane %v879, 5
        %v1016 = vsel %vm949, %v1014, %v1015
        %v1017 = vrot.slane %v1015, 4
        %v1018 = vrot.slane %v880, 5
        %v1019 = vsel %vm949, %v1017, %v1018
        %v1020 = vrot.slane %v881, 5
        %v1021 = vrot.slane %v1020, 4
        %v1022 = vrot.slane %v882, 5
        %v1023 = vsel %vm949, %v1021, %v1022
        %v1024 = vrot.slane %v1022, 4
        %v1025 = vrot.slane %v883, 5
        %v1026 = vsel %vm949, %v1024, %v1025
        %v1027 = vrot.slane %v884, 5
        %v1028 = vrot.slane %v1027, 4
        %v1029 = vrot.slane %v885, 5
        %v1030 = vsel %vm949, %v1028, %v1029
        %v1031 = vrot.slane %v1029, 4
        %v1032 = vrot.slane %v886, 5
        %v1033 = vsel %vm949, %v1031, %v1032
        %v1034 = vrot.slane %v887, 5
        %v1035 = vrot.slane %v1034, 4
        %v1036 = vrot.slane %v888, 5
        %v1037 = vsel %vm949, %v1035, %v1036
        %v1038 = vrot.slane %v1036, 4
        %v1039 = vrot.slane %v889, 5
        %v1040 = vsel %vm949, %v1038, %v1039
        %v1041 = vrot.slane %v890, 5
        %v1042 = vrot.slane %v1041, 4
        %v1043 = vrot.slane %v891, 5
        %v1044 = vsel %vm949, %v1042, %v1043
        %v1045 = vrot.slane %v1043, 4
        %v1046 = vrot.slane %v892, 5
        %v1047 = vsel %vm949, %v1045, %v1046
        %v1048 = vrot.slane %v893, 5
        %v1049 = vrot.slane %v1048, 4
        %v1050 = vrot.slane %v894, 5
        %v1051 = vsel %vm949, %v1049, %v1050
        %v1052 = vrot.slane %v1050, 4
        %v1053 = vrot.slane %v895, 5
        %v1054 = vsel %vm949, %v1052, %v1053
        %v1055 = vrot.slane %v896, 5
        %v1056 = vrot.slane %v1055, 4
        %v1057 = vrot.slane %v897, 5
        %v1058 = vsel %vm949, %v1056, %v1057
        %v1059 = vrot.slane %v1057, 4
        %v1060 = vrot.slane %v898, 5
        %v1061 = vsel %vm949, %v1059, %v1060
        %1062 = vrot.lane.b32.xlu0 %v953, 8
        %v1063 = vpop.permute.xlu0 %1062
        %1064 = vrot.lane.b32.xlu0 %v956, 8
        %v1065 = vpop.permute.xlu0 %1064
        %1066 = vrot.lane.b32.xlu0 %v960, 8
        %v1067 = vpop.permute.xlu0 %1066
        %1068 = vrot.lane.b32.xlu0 %v963, 8
        %v1069 = vpop.permute.xlu0 %1068
        %1070 = vrot.lane.b32.xlu0 %v967, 8
        %v1071 = vpop.permute.xlu0 %1070
        %1072 = vrot.lane.b32.xlu0 %v970, 8
        %v1073 = vpop.permute.xlu0 %1072
        %1074 = vrot.lane.b32.xlu0 %v974, 8
        %v1075 = vpop.permute.xlu0 %1074
        %1076 = vrot.lane.b32.xlu0 %v977, 8
        %v1077 = vpop.permute.xlu0 %1076
        %1078 = vrot.lane.b32.xlu0 %v981, 8
        %v1079 = vpop.permute.xlu0 %1078
        %1080 = vrot.lane.b32.xlu0 %v984, 8
        %v1081 = vpop.permute.xlu0 %1080
        %1082 = vrot.lane.b32.xlu0 %v988, 8
        %v1083 = vpop.permute.xlu0 %1082
        %1084 = vrot.lane.b32.xlu0 %v991, 8
        %v1085 = vpop.permute.xlu0 %1084
        %1086 = vrot.lane.b32.xlu0 %v995, 8
        %v1087 = vpop.permute.xlu0 %1086
        %1088 = vrot.lane.b32.xlu0 %v998, 8
        %v1089 = vpop.permute.xlu0 %1088
        %1090 = vrot.lane.b32.xlu0 %v1002, 8
        %v1091 = vpop.permute.xlu0 %1090
        %1092 = vrot.lane.b32.xlu0 %v1005, 8
        %v1093 = vpop.permute.xlu0 %1092
        %1094 = vrot.lane.b32.xlu0 %v1009, 8
        %v1095 = vpop.permute.xlu0 %1094
        %1096 = vrot.lane.b32.xlu0 %v1012, 8
        %v1097 = vpop.permute.xlu0 %1096
        %1098 = vrot.lane.b32.xlu0 %v1016, 8
        %v1099 = vpop.permute.xlu0 %1098
        %1100 = vrot.lane.b32.xlu0 %v1019, 8
        %v1101 = vpop.permute.xlu0 %1100
        %1102 = vrot.lane.b32.xlu0 %v1023, 8
        %v1103 = vpop.permute.xlu0 %1102
        %1104 = vrot.lane.b32.xlu0 %v1026, 8
        %v1105 = vpop.permute.xlu0 %1104
        %1106 = vrot.lane.b32.xlu0 %v1030, 8
        %v1107 = vpop.permute.xlu0 %1106
        %1108 = vrot.lane.b32.xlu0 %v1033, 8
        %v1109 = vpop.permute.xlu0 %1108
        %1110 = vrot.lane.b32.xlu0 %v1037, 8
        %v1111 = vpop.permute.xlu0 %1110
        %1112 = vrot.lane.b32.xlu0 %v1040, 8
        %v1113 = vpop.permute.xlu0 %1112
        %1114 = vrot.lane.b32.xlu0 %v1044, 8
        %v1115 = vpop.permute.xlu0 %1114
        %1116 = vrot.lane.b32.xlu0 %v1047, 8
        %v1117 = vpop.permute.xlu0 %1116
        %1118 = vrot.lane.b32.xlu0 %v1051, 8
        %v1119 = vpop.permute.xlu0 %1118
        %1120 = vrot.lane.b32.xlu0 %v1054, 8
        %v1121 = vpop.permute.xlu0 %1120
        %1122 = vrot.lane.b32.xlu0 %v1058, 8
        %v1123 = vpop.permute.xlu0 %1122
        %1124 = vrot.lane.b32.xlu0 %v1061, 8
        %v1125 = vpop.permute.xlu0 %1124
        %vm1158 = vcmask 93248
        %1159 = vst.msk [vmem:[#allocation2] sm:$0xf] %vm1158, %v1063
        %1160 = vst.msk [vmem:[#allocation2 + $0x4] sm:$0xf] %vm1158, %v1065
        %1161 = vst.msk [vmem:[#allocation2 + $0x8] sm:$0xf] %vm1158, %v1067
        %1162 = vst.msk [vmem:[#allocation2 + $0xc] sm:$0xf] %vm1158, %v1069
        %1163 = vst.msk [vmem:[#allocation2 + $0x10] sm:$0xf] %vm1158, %v1071
        %1164 = vst.msk [vmem:[#allocation2 + $0x14] sm:$0xf] %vm1158, %v1073
        %1165 = vst.msk [vmem:[#allocation2 + $0x18] sm:$0xf] %vm1158, %v1075
        %1166 = vst.msk [vmem:[#allocation2 + $0x1c] sm:$0xf] %vm1158, %v1077
        %1167 = vst.msk [vmem:[#allocation2 + $0x20] sm:$0xf] %vm1158, %v1079
        %1168 = vst.msk [vmem:[#allocation2 + $0x24] sm:$0xf] %vm1158, %v1081
        %1169 = vst.msk [vmem:[#allocation2 + $0x28] sm:$0xf] %vm1158, %v1083
        %1170 = vst.msk [vmem:[#allocation2 + $0x2c] sm:$0xf] %vm1158, %v1085
        %1171 = vst.msk [vmem:[#allocation2 + $0x30] sm:$0xf] %vm1158, %v1087
        %1172 = vst.msk [vmem:[#allocation2 + $0x34] sm:$0xf] %vm1158, %v1089
        %1173 = vst.msk [vmem:[#allocation2 + $0x38] sm:$0xf] %vm1158, %v1091
        %1174 = vst.msk [vmem:[#allocation2 + $0x3c] sm:$0xf] %vm1158, %v1093
        %1175 = vst.msk [vmem:[#allocation2 + $0x40] sm:$0xf] %vm1158, %v1095
        %1176 = vst.msk [vmem:[#allocation2 + $0x44] sm:$0xf] %vm1158, %v1097
        %1177 = vst.msk [vmem:[#allocation2 + $0x48] sm:$0xf] %vm1158, %v1099
        %1178 = vst.msk [vmem:[#allocation2 + $0x4c] sm:$0xf] %vm1158, %v1101
        %1179 = vst.msk [vmem:[#allocation2 + $0x50] sm:$0xf] %vm1158, %v1103
        %1180 = vst.msk [vmem:[#allocation2 + $0x54] sm:$0xf] %vm1158, %v1105
        %1181 = vst.msk [vmem:[#allocation2 + $0x58] sm:$0xf] %vm1158, %v1107
        %1182 = vst.msk [vmem:[#allocation2 + $0x5c] sm:$0xf] %vm1158, %v1109
        %1183 = vst.msk [vmem:[#allocation2 + $0x60] sm:$0xf] %vm1158, %v1111
        %1184 = vst.msk [vmem:[#allocation2 + $0x64] sm:$0xf] %vm1158, %v1113
        %1185 = vst.msk [vmem:[#allocation2 + $0x68] sm:$0xf] %vm1158, %v1115
        %1186 = vst.msk [vmem:[#allocation2 + $0x6c] sm:$0xf] %vm1158, %v1117
        %1187 = vst.msk [vmem:[#allocation2 + $0x70] sm:$0xf] %vm1158, %v1119
        %1188 = vst.msk [vmem:[#allocation2 + $0x74] sm:$0xf] %vm1158, %v1121
        %1189 = vst.msk [vmem:[#allocation2 + $0x78] sm:$0xf] %vm1158, %v1123
        %1190 = vst.msk [vmem:[#allocation2 + $0x7c] sm:$0xf] %vm1158, %v1125
        %s1191 = sadd.s32 %s185, 1
        %s1192 = smul.u32 %s1191, 3
        %s1193 = smul.addr %s1192, 4
        %s1194 = scalar_lea.vmem %s182, %s1193
        %v1195 = vld [vmem:[%s1194] sm:$0xf]
        %v1196 = vld [vmem:[%s1194 + $0x4] sm:$0xf]
        %v1197 = vld [vmem:[%s1194 + $0xc] sm:$0xf]
        %v1198 = vld [vmem:[%s1194 + $0x10] sm:$0xf]
        %v1199 = vld [vmem:[%s1194 + $0x18] sm:$0xf]
        %v1200 = vld [vmem:[%s1194 + $0x1c] sm:$0xf]
        %v1201 = vld [vmem:[%s1194 + $0x24] sm:$0xf]
        %v1202 = vld [vmem:[%s1194 + $0x28] sm:$0xf]
        %v1203 = vld [vmem:[%s1194 + $0x30] sm:$0xf]
        %v1204 = vld [vmem:[%s1194 + $0x34] sm:$0xf]
        %v1205 = vld [vmem:[%s1194 + $0x3c] sm:$0xf]
        %v1206 = vld [vmem:[%s1194 + $0x40] sm:$0xf]
        %v1207 = vld [vmem:[%s1194 + $0x48] sm:$0xf]
        %v1208 = vld [vmem:[%s1194 + $0x4c] sm:$0xf]
        %v1209 = vld [vmem:[%s1194 + $0x54] sm:$0xf]
        %v1210 = vld [vmem:[%s1194 + $0x58] sm:$0xf]
        %v1211 = vld [vmem:[%s1194 + $0x60] sm:$0xf]
        %v1212 = vld [vmem:[%s1194 + $0x64] sm:$0xf]
        %v1213 = vld [vmem:[%s1194 + $0x6c] sm:$0xf]
        %v1214 = vld [vmem:[%s1194 + $0x70] sm:$0xf]
        %v1215 = vld [vmem:[%s1194 + $0x78] sm:$0xf]
        %v1216 = vld [vmem:[%s1194 + $0x7c] sm:$0xf]
        %v1217 = vld [vmem:[%s1194 + $0x84] sm:$0xf]
        %v1218 = vld [vmem:[%s1194 + $0x88] sm:$0xf]
        %v1219 = vld [vmem:[%s1194 + $0x90] sm:$0xf]
        %v1220 = vld [vmem:[%s1194 + $0x94] sm:$0xf]
        %v1221 = vld [vmem:[%s1194 + $0x9c] sm:$0xf]
        %v1222 = vld [vmem:[%s1194 + $0xa0] sm:$0xf]
        %v1223 = vld [vmem:[%s1194 + $0xa8] sm:$0xf]
        %v1224 = vld [vmem:[%s1194 + $0xac] sm:$0xf]
        %v1225 = vld [vmem:[%s1194 + $0xb4] sm:$0xf]
        %v1226 = vld [vmem:[%s1194 + $0xb8] sm:$0xf]
        %1259 = vrot.lane.b32.xlu0 %v1195, 12
        %v1260 = vpop.permute.xlu0 %1259
        %1261 = vrot.lane.b32.xlu0 %v1196, 12
        %v1262 = vpop.permute.xlu0 %1261
        %1263 = vrot.lane.b32.xlu0 %v1197, 12
        %v1264 = vpop.permute.xlu0 %1263
        %1265 = vrot.lane.b32.xlu0 %v1198, 12
        %v1266 = vpop.permute.xlu0 %1265
        %1267 = vrot.lane.b32.xlu0 %v1199, 12
        %v1268 = vpop.permute.xlu0 %1267
        %1269 = vrot.lane.b32.xlu0 %v1200, 12
        %v1270 = vpop.permute.xlu0 %1269
        %1271 = vrot.lane.b32.xlu0 %v1201, 12
        %v1272 = vpop.permute.xlu0 %1271
        %1273 = vrot.lane.b32.xlu0 %v1202, 12
        %v1274 = vpop.permute.xlu0 %1273
        %1275 = vrot.lane.b32.xlu0 %v1203, 12
        %v1276 = vpop.permute.xlu0 %1275
        %1277 = vrot.lane.b32.xlu0 %v1204, 12
        %v1278 = vpop.permute.xlu0 %1277
        %1279 = vrot.lane.b32.xlu0 %v1205, 12
        %v1280 = vpop.permute.xlu0 %1279
        %1281 = vrot.lane.b32.xlu0 %v1206, 12
        %v1282 = vpop.permute.xlu0 %1281
        %1283 = vrot.lane.b32.xlu0 %v1207, 12
        %v1284 = vpop.permute.xlu0 %1283
        %1285 = vrot.lane.b32.xlu0 %v1208, 12
        %v1286 = vpop.permute.xlu0 %1285
        %1287 = vrot.lane.b32.xlu0 %v1209, 12
        %v1288 = vpop.permute.xlu0 %1287
        %1289 = vrot.lane.b32.xlu0 %v1210, 12
        %v1290 = vpop.permute.xlu0 %1289
        %1291 = vrot.lane.b32.xlu0 %v1211, 12
        %v1292 = vpop.permute.xlu0 %1291
        %1293 = vrot.lane.b32.xlu0 %v1212, 12
        %v1294 = vpop.permute.xlu0 %1293
        %1295 = vrot.lane.b32.xlu0 %v1213, 12
        %v1296 = vpop.permute.xlu0 %1295
        %1297 = vrot.lane.b32.xlu0 %v1214, 12
        %v1298 = vpop.permute.xlu0 %1297
        %1299 = vrot.lane.b32.xlu0 %v1215, 12
        %v1300 = vpop.permute.xlu0 %1299
        %1301 = vrot.lane.b32.xlu0 %v1216, 12
        %v1302 = vpop.permute.xlu0 %1301
        %1303 = vrot.lane.b32.xlu0 %v1217, 12
        %v1304 = vpop.permute.xlu0 %1303
        %1305 = vrot.lane.b32.xlu0 %v1218, 12
        %v1306 = vpop.permute.xlu0 %1305
        %1307 = vrot.lane.b32.xlu0 %v1219, 12
        %v1308 = vpop.permute.xlu0 %1307
        %1309 = vrot.lane.b32.xlu0 %v1220, 12
        %v1310 = vpop.permute.xlu0 %1309
        %1311 = vrot.lane.b32.xlu0 %v1221, 12
        %v1312 = vpop.permute.xlu0 %1311
        %1313 = vrot.lane.b32.xlu0 %v1222, 12
        %v1314 = vpop.permute.xlu0 %1313
        %1315 = vrot.lane.b32.xlu0 %v1223, 12
        %v1316 = vpop.permute.xlu0 %1315
        %1317 = vrot.lane.b32.xlu0 %v1224, 12
        %v1318 = vpop.permute.xlu0 %1317
        %1319 = vrot.lane.b32.xlu0 %v1225, 12
        %v1320 = vpop.permute.xlu0 %1319
        %1321 = vrot.lane.b32.xlu0 %v1226, 12
        %v1322 = vpop.permute.xlu0 %1321
        %vm1355 = vcmask 126048
        %1356 = vst.msk [vmem:[#allocation2] sm:$0xf] %vm1355, %v1260
        %1357 = vst.msk [vmem:[#allocation2 + $0x4] sm:$0xf] %vm1355, %v1262
        %1358 = vst.msk [vmem:[#allocation2 + $0x8] sm:$0xf] %vm1355, %v1264
        %1359 = vst.msk [vmem:[#allocation2 + $0xc] sm:$0xf] %vm1355, %v1266
        %1360 = vst.msk [vmem:[#allocation2 + $0x10] sm:$0xf] %vm1355, %v1268
        %1361 = vst.msk [vmem:[#allocation2 + $0x14] sm:$0xf] %vm1355, %v1270
        %1362 = vst.msk [vmem:[#allocation2 + $0x18] sm:$0xf] %vm1355, %v1272
        %1363 = vst.msk [vmem:[#allocation2 + $0x1c] sm:$0xf] %vm1355, %v1274
        %1364 = vst.msk [vmem:[#allocation2 + $0x20] sm:$0xf] %vm1355, %v1276
        %1365 = vst.msk [vmem:[#allocation2 + $0x24] sm:$0xf] %vm1355, %v1278
        %1366 = vst.msk [vmem:[#allocation2 + $0x28] sm:$0xf] %vm1355, %v1280
        %1367 = vst.msk [vmem:[#allocation2 + $0x2c] sm:$0xf] %vm1355, %v1282
        %1368 = vst.msk [vmem:[#allocation2 + $0x30] sm:$0xf] %vm1355, %v1284
        %1369 = vst.msk [vmem:[#allocation2 + $0x34] sm:$0xf] %vm1355, %v1286
        %1370 = vst.msk [vmem:[#allocation2 + $0x38] sm:$0xf] %vm1355, %v1288
        %1371 = vst.msk [vmem:[#allocation2 + $0x3c] sm:$0xf] %vm1355, %v1290
        %1372 = vst.msk [vmem:[#allocation2 + $0x40] sm:$0xf] %vm1355, %v1292
        %1373 = vst.msk [vmem:[#allocation2 + $0x44] sm:$0xf] %vm1355, %v1294
        %1374 = vst.msk [vmem:[#allocation2 + $0x48] sm:$0xf] %vm1355, %v1296
        %1375 = vst.msk [vmem:[#allocation2 + $0x4c] sm:$0xf] %vm1355, %v1298
        %1376 = vst.msk [vmem:[#allocation2 + $0x50] sm:$0xf] %vm1355, %v1300
        %1377 = vst.msk [vmem:[#allocation2 + $0x54] sm:$0xf] %vm1355, %v1302
        %1378 = vst.msk [vmem:[#allocation2 + $0x58] sm:$0xf] %vm1355, %v1304
        %1379 = vst.msk [vmem:[#allocation2 + $0x5c] sm:$0xf] %vm1355, %v1306
        %1380 = vst.msk [vmem:[#allocation2 + $0x60] sm:$0xf] %vm1355, %v1308
        %1381 = vst.msk [vmem:[#allocation2 + $0x64] sm:$0xf] %vm1355, %v1310
        %1382 = vst.msk [vmem:[#allocation2 + $0x68] sm:$0xf] %vm1355, %v1312
        %1383 = vst.msk [vmem:[#allocation2 + $0x6c] sm:$0xf] %vm1355, %v1314
        %1384 = vst.msk [vmem:[#allocation2 + $0x70] sm:$0xf] %vm1355, %v1316
        %1385 = vst.msk [vmem:[#allocation2 + $0x74] sm:$0xf] %vm1355, %v1318
        %1386 = vst.msk [vmem:[#allocation2 + $0x78] sm:$0xf] %vm1355, %v1320
        %1387 = vst.msk [vmem:[#allocation2 + $0x7c] sm:$0xf] %vm1355, %v1322
        %v1388 = vld [vmem:[%s1194] sm:$0xf]
        %v1389 = vld [vmem:[%s1194 + $0x4] sm:$0xf]
        %v1390 = vld [vmem:[%s1194 + $0x8] sm:$0x1]
        %v1391 = vld [vmem:[%s1194 + $0xc] sm:$0xf]
        %v1392 = vld [vmem:[%s1194 + $0x10] sm:$0xf]
        %v1393 = vld [vmem:[%s1194 + $0x14] sm:$0x1]
        %v1394 = vld [vmem:[%s1194 + $0x18] sm:$0xf]
        %v1395 = vld [vmem:[%s1194 + $0x1c] sm:$0xf]
        %v1396 = vld [vmem:[%s1194 + $0x20] sm:$0x1]
        %v1397 = vld [vmem:[%s1194 + $0x24] sm:$0xf]
        %v1398 = vld [vmem:[%s1194 + $0x28] sm:$0xf]
        %v1399 = vld [vmem:[%s1194 + $0x2c] sm:$0x1]
        %v1400 = vld [vmem:[%s1194 + $0x30] sm:$0xf]
        %v1401 = vld [vmem:[%s1194 + $0x34] sm:$0xf]
        %v1402 = vld [vmem:[%s1194 + $0x38] sm:$0x1]
        %v1403 = vld [vmem:[%s1194 + $0x3c] sm:$0xf]
        %v1404 = vld [vmem:[%s1194 + $0x40] sm:$0xf]
        %v1405 = vld [vmem:[%s1194 + $0x44] sm:$0x1]
        %v1406 = vld [vmem:[%s1194 + $0x48] sm:$0xf]
        %v1407 = vld [vmem:[%s1194 + $0x4c] sm:$0xf]
        %v1408 = vld [vmem:[%s1194 + $0x50] sm:$0x1]
        %v1409 = vld [vmem:[%s1194 + $0x54] sm:$0xf]
        %v1410 = vld [vmem:[%s1194 + $0x58] sm:$0xf]
        %v1411 = vld [vmem:[%s1194 + $0x5c] sm:$0x1]
        %v1412 = vld [vmem:[%s1194 + $0x60] sm:$0xf]
        %v1413 = vld [vmem:[%s1194 + $0x64] sm:$0xf]
        %v1414 = vld [vmem:[%s1194 + $0x68] sm:$0x1]
        %v1415 = vld [vmem:[%s1194 + $0x6c] sm:$0xf]
        %v1416 = vld [vmem:[%s1194 + $0x70] sm:$0xf]
        %v1417 = vld [vmem:[%s1194 + $0x74] sm:$0x1]
        %v1418 = vld [vmem:[%s1194 + $0x78] sm:$0xf]
        %v1419 = vld [vmem:[%s1194 + $0x7c] sm:$0xf]
        %v1420 = vld [vmem:[%s1194 + $0x80] sm:$0x1]
        %v1421 = vld [vmem:[%s1194 + $0x84] sm:$0xf]
        %v1422 = vld [vmem:[%s1194 + $0x88] sm:$0xf]
        %v1423 = vld [vmem:[%s1194 + $0x8c] sm:$0x1]
        %v1424 = vld [vmem:[%s1194 + $0x90] sm:$0xf]
        %v1425 = vld [vmem:[%s1194 + $0x94] sm:$0xf]
        %v1426 = vld [vmem:[%s1194 + $0x98] sm:$0x1]
        %v1427 = vld [vmem:[%s1194 + $0x9c] sm:$0xf]
        %v1428 = vld [vmem:[%s1194 + $0xa0] sm:$0xf]
        %v1429 = vld [vmem:[%s1194 + $0xa4] sm:$0x1]
        %v1430 = vld [vmem:[%s1194 + $0xa8] sm:$0xf]
        %v1431 = vld [vmem:[%s1194 + $0xac] sm:$0xf]
        %v1432 = vld [vmem:[%s1194 + $0xb0] sm:$0x1]
        %v1433 = vld [vmem:[%s1194 + $0xb4] sm:$0xf]
        %v1434 = vld [vmem:[%s1194 + $0xb8] sm:$0xf]
        %v1435 = vld [vmem:[%s1194 + $0xbc] sm:$0x1]
        %v1437 = vshrl.u32 %v1388, 16
        %v1439 = vrot.slane %v1437, 4
        %v1440 = vshll.u32 %v1388, 16
        %v1442 = vrot.slane %v1440, 5
        %v1443 = vor.u32 %v1439, %v1442
        %v1444 = vrot.slane %v1443, 4
        %v1446 = vshll.u32 %v1389, 16
        %v1448 = vrot.slane %v1446, 5
        %v1449 = vsel %vm337, %v1444, %v1448
        %v1450 = vshrl.u32 %v1389, 16
        %v1452 = vrot.slane %v1450, 4
        %v1453 = vor.u32 %v1452, %v1448
        %v1454 = vrot.slane %v1453, 4
        %v1456 = vshll.u32 %v1390, 16
        %v1458 = vrot.slane %v1456, 5
        %v1459 = vsel %vm337, %v1454, %v1458
        %v1461 = vshrl.u32 %v1391, 16
        %v1463 = vrot.slane %v1461, 4
        %v1464 = vshll.u32 %v1391, 16
        %v1466 = vrot.slane %v1464, 5
        %v1467 = vor.u32 %v1463, %v1466
        %v1468 = vrot.slane %v1467, 4
        %v1470 = vshll.u32 %v1392, 16
        %v1472 = vrot.slane %v1470, 5
        %v1473 = vsel %vm337, %v1468, %v1472
        %v1474 = vshrl.u32 %v1392, 16
        %v1476 = vrot.slane %v1474, 4
        %v1477 = vor.u32 %v1476, %v1472
        %v1478 = vrot.slane %v1477, 4
        %v1480 = vshll.u32 %v1393, 16
        %v1482 = vrot.slane %v1480, 5
        %v1483 = vsel %vm337, %v1478, %v1482
        %v1485 = vshrl.u32 %v1394, 16
        %v1487 = vrot.slane %v1485, 4
        %v1488 = vshll.u32 %v1394, 16
        %v1490 = vrot.slane %v1488, 5
        %v1491 = vor.u32 %v1487, %v1490
        %v1492 = vrot.slane %v1491, 4
        %v1494 = vshll.u32 %v1395, 16
        %v1496 = vrot.slane %v1494, 5
        %v1497 = vsel %vm337, %v1492, %v1496
        %v1498 = vshrl.u32 %v1395, 16
        %v1500 = vrot.slane %v1498, 4
        %v1501 = vor.u32 %v1500, %v1496
        %v1502 = vrot.slane %v1501, 4
        %v1504 = vshll.u32 %v1396, 16
        %v1506 = vrot.slane %v1504, 5
        %v1507 = vsel %vm337, %v1502, %v1506
        %v1509 = vshrl.u32 %v1397, 16
        %v1511 = vrot.slane %v1509, 4
        %v1512 = vshll.u32 %v1397, 16
        %v1514 = vrot.slane %v1512, 5
        %v1515 = vor.u32 %v1511, %v1514
        %v1516 = vrot.slane %v1515, 4
        %v1518 = vshll.u32 %v1398, 16
        %v1520 = vrot.slane %v1518, 5
        %v1521 = vsel %vm337, %v1516, %v1520
        %v1522 = vshrl.u32 %v1398, 16
        %v1524 = vrot.slane %v1522, 4
        %v1525 = vor.u32 %v1524, %v1520
        %v1526 = vrot.slane %v1525, 4
        %v1528 = vshll.u32 %v1399, 16
        %v1530 = vrot.slane %v1528, 5
        %v1531 = vsel %vm337, %v1526, %v1530
        %v1533 = vshrl.u32 %v1400, 16
        %v1535 = vrot.slane %v1533, 4
        %v1536 = vshll.u32 %v1400, 16
        %v1538 = vrot.slane %v1536, 5
        %v1539 = vor.u32 %v1535, %v1538
        %v1540 = vrot.slane %v1539, 4
        %v1542 = vshll.u32 %v1401, 16
        %v1544 = vrot.slane %v1542, 5
        %v1545 = vsel %vm337, %v1540, %v1544
        %v1546 = vshrl.u32 %v1401, 16
        %v1548 = vrot.slane %v1546, 4
        %v1549 = vor.u32 %v1548, %v1544
        %v1550 = vrot.slane %v1549, 4
        %v1552 = vshll.u32 %v1402, 16
        %v1554 = vrot.slane %v1552, 5
        %v1555 = vsel %vm337, %v1550, %v1554
        %v1557 = vshrl.u32 %v1403, 16
        %v1559 = vrot.slane %v1557, 4
        %v1560 = vshll.u32 %v1403, 16
        %v1562 = vrot.slane %v1560, 5
        %v1563 = vor.u32 %v1559, %v1562
        %v1564 = vrot.slane %v1563, 4
        %v1566 = vshll.u32 %v1404, 16
        %v1568 = vrot.slane %v1566, 5
        %v1569 = vsel %vm337, %v1564, %v1568
        %v1570 = vshrl.u32 %v1404, 16
        %v1572 = vrot.slane %v1570, 4
        %v1573 = vor.u32 %v1572, %v1568
        %v1574 = vrot.slane %v1573, 4
        %v1576 = vshll.u32 %v1405, 16
        %v1578 = vrot.slane %v1576, 5
        %v1579 = vsel %vm337, %v1574, %v1578
        %v1581 = vshrl.u32 %v1406, 16
        %v1583 = vrot.slane %v1581, 4
        %v1584 = vshll.u32 %v1406, 16
        %v1586 = vrot.slane %v1584, 5
        %v1587 = vor.u32 %v1583, %v1586
        %v1588 = vrot.slane %v1587, 4
        %v1590 = vshll.u32 %v1407, 16
        %v1592 = vrot.slane %v1590, 5
        %v1593 = vsel %vm337, %v1588, %v1592
        %v1594 = vshrl.u32 %v1407, 16
        %v1596 = vrot.slane %v1594, 4
        %v1597 = vor.u32 %v1596, %v1592
        %v1598 = vrot.slane %v1597, 4
        %v1600 = vshll.u32 %v1408, 16
        %v1602 = vrot.slane %v1600, 5
        %v1603 = vsel %vm337, %v1598, %v1602
        %v1605 = vshrl.u32 %v1409, 16
        %v1607 = vrot.slane %v1605, 4
        %v1608 = vshll.u32 %v1409, 16
        %v1610 = vrot.slane %v1608, 5
        %v1611 = vor.u32 %v1607, %v1610
        %v1612 = vrot.slane %v1611, 4
        %v1614 = vshll.u32 %v1410, 16
        %v1616 = vrot.slane %v1614, 5
        %v1617 = vsel %vm337, %v1612, %v1616
        %v1618 = vshrl.u32 %v1410, 16
        %v1620 = vrot.slane %v1618, 4
        %v1621 = vor.u32 %v1620, %v1616
        %v1622 = vrot.slane %v1621, 4
        %v1624 = vshll.u32 %v1411, 16
        %v1626 = vrot.slane %v1624, 5
        %v1627 = vsel %vm337, %v1622, %v1626
        %v1629 = vshrl.u32 %v1412, 16
        %v1631 = vrot.slane %v1629, 4
        %v1632 = vshll.u32 %v1412, 16
        %v1634 = vrot.slane %v1632, 5
        %v1635 = vor.u32 %v1631, %v1634
        %v1636 = vrot.slane %v1635, 4
        %v1638 = vshll.u32 %v1413, 16
        %v1640 = vrot.slane %v1638, 5
        %v1641 = vsel %vm337, %v1636, %v1640
        %v1642 = vshrl.u32 %v1413, 16
        %v1644 = vrot.slane %v1642, 4
        %v1645 = vor.u32 %v1644, %v1640
        %v1646 = vrot.slane %v1645, 4
        %v1648 = vshll.u32 %v1414, 16
        %v1650 = vrot.slane %v1648, 5
        %v1651 = vsel %vm337, %v1646, %v1650
        %v1653 = vshrl.u32 %v1415, 16
        %v1655 = vrot.slane %v1653, 4
        %v1656 = vshll.u32 %v1415, 16
        %v1658 = vrot.slane %v1656, 5
        %v1659 = vor.u32 %v1655, %v1658
        %v1660 = vrot.slane %v1659, 4
        %v1662 = vshll.u32 %v1416, 16
        %v1664 = vrot.slane %v1662, 5
        %v1665 = vsel %vm337, %v1660, %v1664
        %v1666 = vshrl.u32 %v1416, 16
        %v1668 = vrot.slane %v1666, 4
        %v1669 = vor.u32 %v1668, %v1664
        %v1670 = vrot.slane %v1669, 4
        %v1672 = vshll.u32 %v1417, 16
        %v1674 = vrot.slane %v1672, 5
        %v1675 = vsel %vm337, %v1670, %v1674
        %v1677 = vshrl.u32 %v1418, 16
        %v1679 = vrot.slane %v1677, 4
        %v1680 = vshll.u32 %v1418, 16
        %v1682 = vrot.slane %v1680, 5
        %v1683 = vor.u32 %v1679, %v1682
        %v1684 = vrot.slane %v1683, 4
        %v1686 = vshll.u32 %v1419, 16
        %v1688 = vrot.slane %v1686, 5
        %v1689 = vsel %vm337, %v1684, %v1688
        %v1690 = vshrl.u32 %v1419, 16
        %v1692 = vrot.slane %v1690, 4
        %v1693 = vor.u32 %v1692, %v1688
        %v1694 = vrot.slane %v1693, 4
        %v1696 = vshll.u32 %v1420, 16
        %v1698 = vrot.slane %v1696, 5
        %v1699 = vsel %vm337, %v1694, %v1698
        %v1701 = vshrl.u32 %v1421, 16
        %v1703 = vrot.slane %v1701, 4
        %v1704 = vshll.u32 %v1421, 16
        %v1706 = vrot.slane %v1704, 5
        %v1707 = vor.u32 %v1703, %v1706
        %v1708 = vrot.slane %v1707, 4
        %v1710 = vshll.u32 %v1422, 16
        %v1712 = vrot.slane %v1710, 5
        %v1713 = vsel %vm337, %v1708, %v1712
        %v1714 = vshrl.u32 %v1422, 16
        %v1716 = vrot.slane %v1714, 4
        %v1717 = vor.u32 %v1716, %v1712
        %v1718 = vrot.slane %v1717, 4
        %v1720 = vshll.u32 %v1423, 16
        %v1722 = vrot.slane %v1720, 5
        %v1723 = vsel %vm337, %v1718, %v1722
        %v1725 = vshrl.u32 %v1424, 16
        %v1727 = vrot.slane %v1725, 4
        %v1728 = vshll.u32 %v1424, 16
        %v1730 = vrot.slane %v1728, 5
        %v1731 = vor.u32 %v1727, %v1730
        %v1732 = vrot.slane %v1731, 4
        %v1734 = vshll.u32 %v1425, 16
        %v1736 = vrot.slane %v1734, 5
        %v1737 = vsel %vm337, %v1732, %v1736
        %v1738 = vshrl.u32 %v1425, 16
        %v1740 = vrot.slane %v1738, 4
        %v1741 = vor.u32 %v1740, %v1736
        %v1742 = vrot.slane %v1741, 4
        %v1744 = vshll.u32 %v1426, 16
        %v1746 = vrot.slane %v1744, 5
        %v1747 = vsel %vm337, %v1742, %v1746
        %v1749 = vshrl.u32 %v1427, 16
        %v1751 = vrot.slane %v1749, 4
        %v1752 = vshll.u32 %v1427, 16
        %v1754 = vrot.slane %v1752, 5
        %v1755 = vor.u32 %v1751, %v1754
        %v1756 = vrot.slane %v1755, 4
        %v1758 = vshll.u32 %v1428, 16
        %v1760 = vrot.slane %v1758, 5
        %v1761 = vsel %vm337, %v1756, %v1760
        %v1762 = vshrl.u32 %v1428, 16
        %v1764 = vrot.slane %v1762, 4
        %v1765 = vor.u32 %v1764, %v1760
        %v1766 = vrot.slane %v1765, 4
        %v1768 = vshll.u32 %v1429, 16
        %v1770 = vrot.slane %v1768, 5
        %v1771 = vsel %vm337, %v1766, %v1770
        %v1773 = vshrl.u32 %v1430, 16
        %v1775 = vrot.slane %v1773, 4
        %v1776 = vshll.u32 %v1430, 16
        %v1778 = vrot.slane %v1776, 5
        %v1779 = vor.u32 %v1775, %v1778
        %v1780 = vrot.slane %v1779, 4
        %v1782 = vshll.u32 %v1431, 16
        %v1784 = vrot.slane %v1782, 5
        %v1785 = vsel %vm337, %v1780, %v1784
        %v1786 = vshrl.u32 %v1431, 16
        %v1788 = vrot.slane %v1786, 4
        %v1789 = vor.u32 %v1788, %v1784
        %v1790 = vrot.slane %v1789, 4
        %v1792 = vshll.u32 %v1432, 16
        %v1794 = vrot.slane %v1792, 5
        %v1795 = vsel %vm337, %v1790, %v1794
        %v1797 = vshrl.u32 %v1433, 16
        %v1799 = vrot.slane %v1797, 4
        %v1800 = vshll.u32 %v1433, 16
        %v1802 = vrot.slane %v1800, 5
        %v1803 = vor.u32 %v1799, %v1802
        %v1804 = vrot.slane %v1803, 4
        %v1806 = vshll.u32 %v1434, 16
        %v1808 = vrot.slane %v1806, 5
        %v1809 = vsel %vm337, %v1804, %v1808
        %v1810 = vshrl.u32 %v1434, 16
        %v1812 = vrot.slane %v1810, 4
        %v1813 = vor.u32 %v1812, %v1808
        %v1814 = vrot.slane %v1813, 4
        %v1816 = vshll.u32 %v1435, 16
        %v1818 = vrot.slane %v1816, 5
        %v1819 = vsel %vm337, %v1814, %v1818
        %1820 = vrot.lane.b32.xlu0 %v1449, 16
        %v1821 = vpop.permute.xlu0 %1820
        %1822 = vrot.lane.b32.xlu0 %v1459, 16
        %v1823 = vpop.permute.xlu0 %1822
        %1824 = vrot.lane.b32.xlu0 %v1473, 16
        %v1825 = vpop.permute.xlu0 %1824
        %1826 = vrot.lane.b32.xlu0 %v1483, 16
        %v1827 = vpop.permute.xlu0 %1826
        %1828 = vrot.lane.b32.xlu0 %v1497, 16
        %v1829 = vpop.permute.xlu0 %1828
        %1830 = vrot.lane.b32.xlu0 %v1507, 16
        %v1831 = vpop.permute.xlu0 %1830
        %1832 = vrot.lane.b32.xlu0 %v1521, 16
        %v1833 = vpop.permute.xlu0 %1832
        %1834 = vrot.lane.b32.xlu0 %v1531, 16
        %v1835 = vpop.permute.xlu0 %1834
        %1836 = vrot.lane.b32.xlu0 %v1545, 16
        %v1837 = vpop.permute.xlu0 %1836
        %1838 = vrot.lane.b32.xlu0 %v1555, 16
        %v1839 = vpop.permute.xlu0 %1838
        %1840 = vrot.lane.b32.xlu0 %v1569, 16
        %v1841 = vpop.permute.xlu0 %1840
        %1842 = vrot.lane.b32.xlu0 %v1579, 16
        %v1843 = vpop.permute.xlu0 %1842
        %1844 = vrot.lane.b32.xlu0 %v1593, 16
        %v1845 = vpop.permute.xlu0 %1844
        %1846 = vrot.lane.b32.xlu0 %v1603, 16
        %v1847 = vpop.permute.xlu0 %1846
        %1848 = vrot.lane.b32.xlu0 %v1617, 16
        %v1849 = vpop.permute.xlu0 %1848
        %1850 = vrot.lane.b32.xlu0 %v1627, 16
        %v1851 = vpop.permute.xlu0 %1850
        %1852 = vrot.lane.b32.xlu0 %v1641, 16
        %v1853 = vpop.permute.xlu0 %1852
        %1854 = vrot.lane.b32.xlu0 %v1651, 16
        %v1855 = vpop.permute.xlu0 %1854
        %1856 = vrot.lane.b32.xlu0 %v1665, 16
        %v1857 = vpop.permute.xlu0 %1856
        %1858 = vrot.lane.b32.xlu0 %v1675, 16
        %v1859 = vpop.permute.xlu0 %1858
        %1860 = vrot.lane.b32.xlu0 %v1689, 16
        %v1861 = vpop.permute.xlu0 %1860
        %1862 = vrot.lane.b32.xlu0 %v1699, 16
        %v1863 = vpop.permute.xlu0 %1862
        %1864 = vrot.lane.b32.xlu0 %v1713, 16
        %v1865 = vpop.permute.xlu0 %1864
        %1866 = vrot.lane.b32.xlu0 %v1723, 16
        %v1867 = vpop.permute.xlu0 %1866
        %1868 = vrot.lane.b32.xlu0 %v1737, 16
        %v1869 = vpop.permute.xlu0 %1868
        %1870 = vrot.lane.b32.xlu0 %v1747, 16
        %v1871 = vpop.permute.xlu0 %1870
        %1872 = vrot.lane.b32.xlu0 %v1761, 16
        %v1873 = vpop.permute.xlu0 %1872
        %1874 = vrot.lane.b32.xlu0 %v1771, 16
        %v1875 = vpop.permute.xlu0 %1874
        %1876 = vrot.lane.b32.xlu0 %v1785, 16
        %v1877 = vpop.permute.xlu0 %1876
        %1878 = vrot.lane.b32.xlu0 %v1795, 16
        %v1879 = vpop.permute.xlu0 %1878
        %1880 = vrot.lane.b32.xlu0 %v1809, 16
        %v1881 = vpop.permute.xlu0 %1880
        %1882 = vrot.lane.b32.xlu0 %v1819, 16
        %v1883 = vpop.permute.xlu0 %1882
        %vm1916 = vcmask 158848
        %1917 = vst.msk [vmem:[#allocation2] sm:$0xf] %vm1916, %v1821
        %1918 = vst.msk [vmem:[#allocation2 + $0x4] sm:$0xf] %vm1916, %v1823
        %1919 = vst.msk [vmem:[#allocation2 + $0x8] sm:$0xf] %vm1916, %v1825
        %1920 = vst.msk [vmem:[#allocation2 + $0xc] sm:$0xf] %vm1916, %v1827
        %1921 = vst.msk [vmem:[#allocation2 + $0x10] sm:$0xf] %vm1916, %v1829
        %1922 = vst.msk [vmem:[#allocation2 + $0x14] sm:$0xf] %vm1916, %v1831
        %1923 = vst.msk [vmem:[#allocation2 + $0x18] sm:$0xf] %vm1916, %v1833
        %1924 = vst.msk [vmem:[#allocation2 + $0x1c] sm:$0xf] %vm1916, %v1835
        %1925 = vst.msk [vmem:[#allocation2 + $0x20] sm:$0xf] %vm1916, %v1837
        %1926 = vst.msk [vmem:[#allocation2 + $0x24] sm:$0xf] %vm1916, %v1839
        %1927 = vst.msk [vmem:[#allocation2 + $0x28] sm:$0xf] %vm1916, %v1841
        %1928 = vst.msk [vmem:[#allocation2 + $0x2c] sm:$0xf] %vm1916, %v1843
        %1929 = vst.msk [vmem:[#allocation2 + $0x30] sm:$0xf] %vm1916, %v1845
        %1930 = vst.msk [vmem:[#allocation2 + $0x34] sm:$0xf] %vm1916, %v1847
        %1931 = vst.msk [vmem:[#allocation2 + $0x38] sm:$0xf] %vm1916, %v1849
        %1932 = vst.msk [vmem:[#allocation2 + $0x3c] sm:$0xf] %vm1916, %v1851
        %1933 = vst.msk [vmem:[#allocation2 + $0x40] sm:$0xf] %vm1916, %v1853
        %1934 = vst.msk [vmem:[#allocation2 + $0x44] sm:$0xf] %vm1916, %v1855
        %1935 = vst.msk [vmem:[#allocation2 + $0x48] sm:$0xf] %vm1916, %v1857
        %1936 = vst.msk [vmem:[#allocation2 + $0x4c] sm:$0xf] %vm1916, %v1859
        %1937 = vst.msk [vmem:[#allocation2 + $0x50] sm:$0xf] %vm1916, %v1861
        %1938 = vst.msk [vmem:[#allocation2 + $0x54] sm:$0xf] %vm1916, %v1863
        %1939 = vst.msk [vmem:[#allocation2 + $0x58] sm:$0xf] %vm1916, %v1865
        %1940 = vst.msk [vmem:[#allocation2 + $0x5c] sm:$0xf] %vm1916, %v1867
        %1941 = vst.msk [vmem:[#allocation2 + $0x60] sm:$0xf] %vm1916, %v1869
        %1942 = vst.msk [vmem:[#allocation2 + $0x64] sm:$0xf] %vm1916, %v1871
        %1943 = vst.msk [vmem:[#allocation2 + $0x68] sm:$0xf] %vm1916, %v1873
        %1944 = vst.msk [vmem:[#allocation2 + $0x6c] sm:$0xf] %vm1916, %v1875
        %1945 = vst.msk [vmem:[#allocation2 + $0x70] sm:$0xf] %vm1916, %v1877
        %1946 = vst.msk [vmem:[#allocation2 + $0x74] sm:$0xf] %vm1916, %v1879
        %1947 = vst.msk [vmem:[#allocation2 + $0x78] sm:$0xf] %vm1916, %v1881
        %1948 = vst.msk [vmem:[#allocation2 + $0x7c] sm:$0xf] %vm1916, %v1883
        %v1949 = vld [vmem:[%s1194] sm:$0xe]
        %v1950 = vld [vmem:[%s1194 + $0x4] sm:$0xf]
        %v1951 = vld [vmem:[%s1194 + $0x8] sm:$0x1]
        %v1952 = vld [vmem:[%s1194 + $0xc] sm:$0xe]
        %v1953 = vld [vmem:[%s1194 + $0x10] sm:$0xf]
        %v1954 = vld [vmem:[%s1194 + $0x14] sm:$0x1]
        %v1955 = vld [vmem:[%s1194 + $0x18] sm:$0xe]
        %v1956 = vld [vmem:[%s1194 + $0x1c] sm:$0xf]
        %v1957 = vld [vmem:[%s1194 + $0x20] sm:$0x1]
        %v1958 = vld [vmem:[%s1194 + $0x24] sm:$0xe]
        %v1959 = vld [vmem:[%s1194 + $0x28] sm:$0xf]
        %v1960 = vld [vmem:[%s1194 + $0x2c] sm:$0x1]
        %v1961 = vld [vmem:[%s1194 + $0x30] sm:$0xe]
        %v1962 = vld [vmem:[%s1194 + $0x34] sm:$0xf]
        %v1963 = vld [vmem:[%s1194 + $0x38] sm:$0x1]
        %v1964 = vld [vmem:[%s1194 + $0x3c] sm:$0xe]
        %v1965 = vld [vmem:[%s1194 + $0x40] sm:$0xf]
        %v1966 = vld [vmem:[%s1194 + $0x44] sm:$0x1]
        %v1967 = vld [vmem:[%s1194 + $0x48] sm:$0xe]
        %v1968 = vld [vmem:[%s1194 + $0x4c] sm:$0xf]
        %v1969 = vld [vmem:[%s1194 + $0x50] sm:$0x1]
        %v1970 = vld [vmem:[%s1194 + $0x54] sm:$0xe]
        %v1971 = vld [vmem:[%s1194 + $0x58] sm:$0xf]
        %v1972 = vld [vmem:[%s1194 + $0x5c] sm:$0x1]
        %v1973 = vld [vmem:[%s1194 + $0x60] sm:$0xe]
        %v1974 = vld [vmem:[%s1194 + $0x64] sm:$0xf]
        %v1975 = vld [vmem:[%s1194 + $0x68] sm:$0x1]
        %v1976 = vld [vmem:[%s1194 + $0x6c] sm:$0xe]
        %v1977 = vld [vmem:[%s1194 + $0x70] sm:$0xf]
        %v1978 = vld [vmem:[%s1194 + $0x74] sm:$0x1]
        %v1979 = vld [vmem:[%s1194 + $0x78] sm:$0xe]
        %v1980 = vld [vmem:[%s1194 + $0x7c] sm:$0xf]
        %v1981 = vld [vmem:[%s1194 + $0x80] sm:$0x1]
        %v1982 = vld [vmem:[%s1194 + $0x84] sm:$0xe]
        %v1983 = vld [vmem:[%s1194 + $0x88] sm:$0xf]
        %v1984 = vld [vmem:[%s1194 + $0x8c] sm:$0x1]
        %v1985 = vld [vmem:[%s1194 + $0x90] sm:$0xe]
        %v1986 = vld [vmem:[%s1194 + $0x94] sm:$0xf]
        %v1987 = vld [vmem:[%s1194 + $0x98] sm:$0x1]
        %v1988 = vld [vmem:[%s1194 + $0x9c] sm:$0xe]
        %v1989 = vld [vmem:[%s1194 + $0xa0] sm:$0xf]
        %v1990 = vld [vmem:[%s1194 + $0xa4] sm:$0x1]
        %v1991 = vld [vmem:[%s1194 + $0xa8] sm:$0xe]
        %v1992 = vld [vmem:[%s1194 + $0xac] sm:$0xf]
        %v1993 = vld [vmem:[%s1194 + $0xb0] sm:$0x1]
        %v1994 = vld [vmem:[%s1194 + $0xb4] sm:$0xe]
        %v1995 = vld [vmem:[%s1194 + $0xb8] sm:$0xf]
        %v1996 = vld [vmem:[%s1194 + $0xbc] sm:$0x1]
        %v2045 = vrot.slane %v1949, 5
        %v2046 = vrot.slane %v2045, 4
        %v2047 = vrot.slane %v1950, 5
        %v2048 = vsel %vm949, %v2046, %v2047
        %v2049 = vrot.slane %v2047, 4
        %v2050 = vrot.slane %v1951, 5
        %v2051 = vsel %vm949, %v2049, %v2050
        %v2052 = vrot.slane %v1952, 5
        %v2053 = vrot.slane %v2052, 4
        %v2054 = vrot.slane %v1953, 5
        %v2055 = vsel %vm949, %v2053, %v2054
        %v2056 = vrot.slane %v2054, 4
        %v2057 = vrot.slane %v1954, 5
        %v2058 = vsel %vm949, %v2056, %v2057
        %v2059 = vrot.slane %v1955, 5
        %v2060 = vrot.slane %v2059, 4
        %v2061 = vrot.slane %v1956, 5
        %v2062 = vsel %vm949, %v2060, %v2061
        %v2063 = vrot.slane %v2061, 4
        %v2064 = vrot.slane %v1957, 5
        %v2065 = vsel %vm949, %v2063, %v2064
        %v2066 = vrot.slane %v1958, 5
        %v2067 = vrot.slane %v2066, 4
        %v2068 = vrot.slane %v1959, 5
        %v2069 = vsel %vm949, %v2067, %v2068
        %v2070 = vrot.slane %v2068, 4
        %v2071 = vrot.slane %v1960, 5
        %v2072 = vsel %vm949, %v2070, %v2071
        %v2073 = vrot.slane %v1961, 5
        %v2074 = vrot.slane %v2073, 4
        %v2075 = vrot.slane %v1962, 5
        %v2076 = vsel %vm949, %v2074, %v2075
        %v2077 = vrot.slane %v2075, 4
        %v2078 = vrot.slane %v1963, 5
        %v2079 = vsel %vm949, %v2077, %v2078
        %v2080 = vrot.slane %v1964, 5
        %v2081 = vrot.slane %v2080, 4
        %v2082 = vrot.slane %v1965, 5
        %v2083 = vsel %vm949, %v2081, %v2082
        %v2084 = vrot.slane %v2082, 4
        %v2085 = vrot.slane %v1966, 5
        %v2086 = vsel %vm949, %v2084, %v2085
        %v2087 = vrot.slane %v1967, 5
        %v2088 = vrot.slane %v2087, 4
        %v2089 = vrot.slane %v1968, 5
        %v2090 = vsel %vm949, %v2088, %v2089
        %v2091 = vrot.slane %v2089, 4
        %v2092 = vrot.slane %v1969, 5
        %v2093 = vsel %vm949, %v2091, %v2092
        %v2094 = vrot.slane %v1970, 5
        %v2095 = vrot.slane %v2094, 4
        %v2096 = vrot.slane %v1971, 5
        %v2097 = vsel %vm949, %v2095, %v2096
        %v2098 = vrot.slane %v2096, 4
        %v2099 = vrot.slane %v1972, 5
        %v2100 = vsel %vm949, %v2098, %v2099
        %v2101 = vrot.slane %v1973, 5
        %v2102 = vrot.slane %v2101, 4
        %v2103 = vrot.slane %v1974, 5
        %v2104 = vsel %vm949, %v2102, %v2103
        %v2105 = vrot.slane %v2103, 4
        %v2106 = vrot.slane %v1975, 5
        %v2107 = vsel %vm949, %v2105, %v2106
        %v2108 = vrot.slane %v1976, 5
        %v2109 = vrot.slane %v2108, 4
        %v2110 = vrot.slane %v1977, 5
        %v2111 = vsel %vm949, %v2109, %v2110
        %v2112 = vrot.slane %v2110, 4
        %v2113 = vrot.slane %v1978, 5
        %v2114 = vsel %vm949, %v2112, %v2113
        %v2115 = vrot.slane %v1979, 5
        %v2116 = vrot.slane %v2115, 4
        %v2117 = vrot.slane %v1980, 5
        %v2118 = vsel %vm949, %v2116, %v2117
        %v2119 = vrot.slane %v2117, 4
        %v2120 = vrot.slane %v1981, 5
        %v2121 = vsel %vm949, %v2119, %v2120
        %v2122 = vrot.slane %v1982, 5
        %v2123 = vrot.slane %v2122, 4
        %v2124 = vrot.slane %v1983, 5
        %v2125 = vsel %vm949, %v2123, %v2124
        %v2126 = vrot.slane %v2124, 4
        %v2127 = vrot.slane %v1984, 5
        %v2128 = vsel %vm949, %v2126, %v2127
        %v2129 = vrot.slane %v1985, 5
        %v2130 = vrot.slane %v2129, 4
        %v2131 = vrot.slane %v1986, 5
        %v2132 = vsel %vm949, %v2130, %v2131
        %v2133 = vrot.slane %v2131, 4
        %v2134 = vrot.slane %v1987, 5
        %v2135 = vsel %vm949, %v2133, %v2134
        %v2136 = vrot.slane %v1988, 5
        %v2137 = vrot.slane %v2136, 4
        %v2138 = vrot.slane %v1989, 5
        %v2139 = vsel %vm949, %v2137, %v2138
        %v2140 = vrot.slane %v2138, 4
        %v2141 = vrot.slane %v1990, 5
        %v2142 = vsel %vm949, %v2140, %v2141
        %v2143 = vrot.slane %v1991, 5
        %v2144 = vrot.slane %v2143, 4
        %v2145 = vrot.slane %v1992, 5
        %v2146 = vsel %vm949, %v2144, %v2145
        %v2147 = vrot.slane %v2145, 4
        %v2148 = vrot.slane %v1993, 5
        %v2149 = vsel %vm949, %v2147, %v2148
        %v2150 = vrot.slane %v1994, 5
        %v2151 = vrot.slane %v2150, 4
        %v2152 = vrot.slane %v1995, 5
        %v2153 = vsel %vm949, %v2151, %v2152
        %v2154 = vrot.slane %v2152, 4
        %v2155 = vrot.slane %v1996, 5
        %v2156 = vsel %vm949, %v2154, %v2155
        %2157 = vrot.lane.b32.xlu0 %v2048, 20
        %v2158 = vpop.permute.xlu0 %2157
        %2159 = vrot.lane.b32.xlu0 %v2051, 20
        %v2160 = vpop.permute.xlu0 %2159
        %2161 = vrot.lane.b32.xlu0 %v2055, 20
        %v2162 = vpop.permute.xlu0 %2161
        %2163 = vrot.lane.b32.xlu0 %v2058, 20
        %v2164 = vpop.permute.xlu0 %2163
        %2165 = vrot.lane.b32.xlu0 %v2062, 20
        %v2166 = vpop.permute.xlu0 %2165
        %2167 = vrot.lane.b32.xlu0 %v2065, 20
        %v2168 = vpop.permute.xlu0 %2167
        %2169 = vrot.lane.b32.xlu0 %v2069, 20
        %v2170 = vpop.permute.xlu0 %2169
        %2171 = vrot.lane.b32.xlu0 %v2072, 20
        %v2172 = vpop.permute.xlu0 %2171
        %2173 = vrot.lane.b32.xlu0 %v2076, 20
        %v2174 = vpop.permute.xlu0 %2173
        %2175 = vrot.lane.b32.xlu0 %v2079, 20
        %v2176 = vpop.permute.xlu0 %2175
        %2177 = vrot.lane.b32.xlu0 %v2083, 20
        %v2178 = vpop.permute.xlu0 %2177
        %2179 = vrot.lane.b32.xlu0 %v2086, 20
        %v2180 = vpop.permute.xlu0 %2179
        %2181 = vrot.lane.b32.xlu0 %v2090, 20
        %v2182 = vpop.permute.xlu0 %2181
        %2183 = vrot.lane.b32.xlu0 %v2093, 20
        %v2184 = vpop.permute.xlu0 %2183
        %2185 = vrot.lane.b32.xlu0 %v2097, 20
        %v2186 = vpop.permute.xlu0 %2185
        %2187 = vrot.lane.b32.xlu0 %v2100, 20
        %v2188 = vpop.permute.xlu0 %2187
        %2189 = vrot.lane.b32.xlu0 %v2104, 20
        %v2190 = vpop.permute.xlu0 %2189
        %2191 = vrot.lane.b32.xlu0 %v2107, 20
        %v2192 = vpop.permute.xlu0 %2191
        %2193 = vrot.lane.b32.xlu0 %v2111, 20
        %v2194 = vpop.permute.xlu0 %2193
        %2195 = vrot.lane.b32.xlu0 %v2114, 20
        %v2196 = vpop.permute.xlu0 %2195
        %2197 = vrot.lane.b32.xlu0 %v2118, 20
        %v2198 = vpop.permute.xlu0 %2197
        %2199 = vrot.lane.b32.xlu0 %v2121, 20
        %v2200 = vpop.permute.xlu0 %2199
        %2201 = vrot.lane.b32.xlu0 %v2125, 20
        %v2202 = vpop.permute.xlu0 %2201
        %2203 = vrot.lane.b32.xlu0 %v2128, 20
        %v2204 = vpop.permute.xlu0 %2203
        %2205 = vrot.lane.b32.xlu0 %v2132, 20
        %v2206 = vpop.permute.xlu0 %2205
        %2207 = vrot.lane.b32.xlu0 %v2135, 20
        %v2208 = vpop.permute.xlu0 %2207
        %2209 = vrot.lane.b32.xlu0 %v2139, 20
        %v2210 = vpop.permute.xlu0 %2209
        %2211 = vrot.lane.b32.xlu0 %v2142, 20
        %v2212 = vpop.permute.xlu0 %2211
        %2213 = vrot.lane.b32.xlu0 %v2146, 20
        %v2214 = vpop.permute.xlu0 %2213
        %2215 = vrot.lane.b32.xlu0 %v2149, 20
        %v2216 = vpop.permute.xlu0 %2215
        %2217 = vrot.lane.b32.xlu0 %v2153, 20
        %v2218 = vpop.permute.xlu0 %2217
        %2219 = vrot.lane.b32.xlu0 %v2156, 20
        %v2220 = vpop.permute.xlu0 %2219
        %vm2253 = vcmask 191648
        %2254 = vst.msk [vmem:[#allocation2] sm:$0xf] %vm2253, %v2158
        %2255 = vst.msk [vmem:[#allocation2 + $0x4] sm:$0xf] %vm2253, %v2160
        %2256 = vst.msk [vmem:[#allocation2 + $0x8] sm:$0xf] %vm2253, %v2162
        %2257 = vst.msk [vmem:[#allocation2 + $0xc] sm:$0xf] %vm2253, %v2164
        %2258 = vst.msk [vmem:[#allocation2 + $0x10] sm:$0xf] %vm2253, %v2166
        %2259 = vst.msk [vmem:[#allocation2 + $0x14] sm:$0xf] %vm2253, %v2168
        %2260 = vst.msk [vmem:[#allocation2 + $0x18] sm:$0xf] %vm2253, %v2170
        %2261 = vst.msk [vmem:[#allocation2 + $0x1c] sm:$0xf] %vm2253, %v2172
        %2262 = vst.msk [vmem:[#allocation2 + $0x20] sm:$0xf] %vm2253, %v2174
        %2263 = vst.msk [vmem:[#allocation2 + $0x24] sm:$0xf] %vm2253, %v2176
        %2264 = vst.msk [vmem:[#allocation2 + $0x28] sm:$0xf] %vm2253, %v2178
        %2265 = vst.msk [vmem:[#allocation2 + $0x2c] sm:$0xf] %vm2253, %v2180
        %2266 = vst.msk [vmem:[#allocation2 + $0x30] sm:$0xf] %vm2253, %v2182
        %2267 = vst.msk [vmem:[#allocation2 + $0x34] sm:$0xf] %vm2253, %v2184
        %2268 = vst.msk [vmem:[#allocation2 + $0x38] sm:$0xf] %vm2253, %v2186
        %2269 = vst.msk [vmem:[#allocation2 + $0x3c] sm:$0xf] %vm2253, %v2188
        %2270 = vst.msk [vmem:[#allocation2 + $0x40] sm:$0xf] %vm2253, %v2190
        %2271 = vst.msk [vmem:[#allocation2 + $0x44] sm:$0xf] %vm2253, %v2192
        %2272 = vst.msk [vmem:[#allocation2 + $0x48] sm:$0xf] %vm2253, %v2194
        %2273 = vst.msk [vmem:[#allocation2 + $0x4c] sm:$0xf] %vm2253, %v2196
        %2274 = vst.msk [vmem:[#allocation2 + $0x50] sm:$0xf] %vm2253, %v2198
        %2275 = vst.msk [vmem:[#allocation2 + $0x54] sm:$0xf] %vm2253, %v2200
        %2276 = vst.msk [vmem:[#allocation2 + $0x58] sm:$0xf] %vm2253, %v2202
        %2277 = vst.msk [vmem:[#allocation2 + $0x5c] sm:$0xf] %vm2253, %v2204
        %2278 = vst.msk [vmem:[#allocation2 + $0x60] sm:$0xf] %vm2253, %v2206
        %2279 = vst.msk [vmem:[#allocation2 + $0x64] sm:$0xf] %vm2253, %v2208
        %2280 = vst.msk [vmem:[#allocation2 + $0x68] sm:$0xf] %vm2253, %v2210
        %2281 = vst.msk [vmem:[#allocation2 + $0x6c] sm:$0xf] %vm2253, %v2212
        %2282 = vst.msk [vmem:[#allocation2 + $0x70] sm:$0xf] %vm2253, %v2214
        %2283 = vst.msk [vmem:[#allocation2 + $0x74] sm:$0xf] %vm2253, %v2216
        %2284 = vst.msk [vmem:[#allocation2 + $0x78] sm:$0xf] %vm2253, %v2218
        %2285 = vst.msk [vmem:[#allocation2 + $0x7c] sm:$0xf] %vm2253, %v2220
        %s2286 = sadd.s32 %s185, 2
        %s2287 = smul.u32 %s2286, 3
        %s2288 = smul.addr %s2287, 4
        %s2289 = scalar_lea.vmem %s182, %s2288
        %v2290 = vld [vmem:[%s2289] sm:$0xf]
        %v2291 = vld [vmem:[%s2289 + $0x4] sm:$0xf]
        %v2292 = vld [vmem:[%s2289 + $0xc] sm:$0xf]
        %v2293 = vld [vmem:[%s2289 + $0x10] sm:$0xf]
        %v2294 = vld [vmem:[%s2289 + $0x18] sm:$0xf]
        %v2295 = vld [vmem:[%s2289 + $0x1c] sm:$0xf]
        %v2296 = vld [vmem:[%s2289 + $0x24] sm:$0xf]
        %v2297 = vld [vmem:[%s2289 + $0x28] sm:$0xf]
        %v2298 = vld [vmem:[%s2289 + $0x30] sm:$0xf]
        %v2299 = vld [vmem:[%s2289 + $0x34] sm:$0xf]
        %v2300 = vld [vmem:[%s2289 + $0x3c] sm:$0xf]
        %v2301 = vld [vmem:[%s2289 + $0x40] sm:$0xf]
        %v2302 = vld [vmem:[%s2289 + $0x48] sm:$0xf]
        %v2303 = vld [vmem:[%s2289 + $0x4c] sm:$0xf]
        %v2304 = vld [vmem:[%s2289 + $0x54] sm:$0xf]
        %v2305 = vld [vmem:[%s2289 + $0x58] sm:$0xf]
        %v2306 = vld [vmem:[%s2289 + $0x60] sm:$0xf]
        %v2307 = vld [vmem:[%s2289 + $0x64] sm:$0xf]
        %v2308 = vld [vmem:[%s2289 + $0x6c] sm:$0xf]
        %v2309 = vld [vmem:[%s2289 + $0x70] sm:$0xf]
        %v2310 = vld [vmem:[%s2289 + $0x78] sm:$0xf]
        %v2311 = vld [vmem:[%s2289 + $0x7c] sm:$0xf]
        %v2312 = vld [vmem:[%s2289 + $0x84] sm:$0xf]
        %v2313 = vld [vmem:[%s2289 + $0x88] sm:$0xf]
        %v2314 = vld [vmem:[%s2289 + $0x90] sm:$0xf]
        %v2315 = vld [vmem:[%s2289 + $0x94] sm:$0xf]
        %v2316 = vld [vmem:[%s2289 + $0x9c] sm:$0xf]
        %v2317 = vld [vmem:[%s2289 + $0xa0] sm:$0xf]
        %v2318 = vld [vmem:[%s2289 + $0xa8] sm:$0xf]
        %v2319 = vld [vmem:[%s2289 + $0xac] sm:$0xf]
        %v2320 = vld [vmem:[%s2289 + $0xb4] sm:$0xf]
        %v2321 = vld [vmem:[%s2289 + $0xb8] sm:$0xf]
        %2354 = vrot.lane.b32.xlu0 %v2290, 24
        %v2355 = vpop.permute.xlu0 %2354
        %2356 = vrot.lane.b32.xlu0 %v2291, 24
        %v2357 = vpop.permute.xlu0 %2356
        %2358 = vrot.lane.b32.xlu0 %v2292, 24
        %v2359 = vpop.permute.xlu0 %2358
        %2360 = vrot.lane.b32.xlu0 %v2293, 24
        %v2361 = vpop.permute.xlu0 %2360
        %2362 = vrot.lane.b32.xlu0 %v2294, 24
        %v2363 = vpop.permute.xlu0 %2362
        %2364 = vrot.lane.b32.xlu0 %v2295, 24
        %v2365 = vpop.permute.xlu0 %2364
        %2366 = vrot.lane.b32.xlu0 %v2296, 24
        %v2367 = vpop.permute.xlu0 %2366
        %2368 = vrot.lane.b32.xlu0 %v2297, 24
        %v2369 = vpop.permute.xlu0 %2368
        %2370 = vrot.lane.b32.xlu0 %v2298, 24
        %v2371 = vpop.permute.xlu0 %2370
        %2372 = vrot.lane.b32.xlu0 %v2299, 24
        %v2373 = vpop.permute.xlu0 %2372
        %2374 = vrot.lane.b32.xlu0 %v2300, 24
        %v2375 = vpop.permute.xlu0 %2374
        %2376 = vrot.lane.b32.xlu0 %v2301, 24
        %v2377 = vpop.permute.xlu0 %2376
        %2378 = vrot.lane.b32.xlu0 %v2302, 24
        %v2379 = vpop.permute.xlu0 %2378
        %2380 = vrot.lane.b32.xlu0 %v2303, 24
        %v2381 = vpop.permute.xlu0 %2380
        %2382 = vrot.lane.b32.xlu0 %v2304, 24
        %v2383 = vpop.permute.xlu0 %2382
        %2384 = vrot.lane.b32.xlu0 %v2305, 24
        %v2385 = vpop.permute.xlu0 %2384
        %2386 = vrot.lane.b32.xlu0 %v2306, 24
        %v2387 = vpop.permute.xlu0 %2386
        %2388 = vrot.lane.b32.xlu0 %v2307, 24
        %v2389 = vpop.permute.xlu0 %2388
        %2390 = vrot.lane.b32.xlu0 %v2308, 24
        %v2391 = vpop.permute.xlu0 %2390
        %2392 = vrot.lane.b32.xlu0 %v2309, 24
        %v2393 = vpop.permute.xlu0 %2392
        %2394 = vrot.lane.b32.xlu0 %v2310, 24
        %v2395 = vpop.permute.xlu0 %2394
        %2396 = vrot.lane.b32.xlu0 %v2311, 24
        %v2397 = vpop.permute.xlu0 %2396
        %2398 = vrot.lane.b32.xlu0 %v2312, 24
        %v2399 = vpop.permute.xlu0 %2398
        %2400 = vrot.lane.b32.xlu0 %v2313, 24
        %v2401 = vpop.permute.xlu0 %2400
        %2402 = vrot.lane.b32.xlu0 %v2314, 24
        %v2403 = vpop.permute.xlu0 %2402
        %2404 = vrot.lane.b32.xlu0 %v2315, 24
        %v2405 = vpop.permute.xlu0 %2404
        %2406 = vrot.lane.b32.xlu0 %v2316, 24
        %v2407 = vpop.permute.xlu0 %2406
        %2408 = vrot.lane.b32.xlu0 %v2317, 24
        %v2409 = vpop.permute.xlu0 %2408
        %2410 = vrot.lane.b32.xlu0 %v2318, 24
        %v2411 = vpop.permute.xlu0 %2410
        %2412 = vrot.lane.b32.xlu0 %v2319, 24
        %v2413 = vpop.permute.xlu0 %2412
        %2414 = vrot.lane.b32.xlu0 %v2320, 24
        %v2415 = vpop.permute.xlu0 %2414
        %2416 = vrot.lane.b32.xlu0 %v2321, 24
        %v2417 = vpop.permute.xlu0 %2416
        %vm2450 = vcmask 224448
        %2451 = vst.msk [vmem:[#allocation2] sm:$0xf] %vm2450, %v2355
        %2452 = vst.msk [vmem:[#allocation2 + $0x4] sm:$0xf] %vm2450, %v2357
        %2453 = vst.msk [vmem:[#allocation2 + $0x8] sm:$0xf] %vm2450, %v2359
        %2454 = vst.msk [vmem:[#allocation2 + $0xc] sm:$0xf] %vm2450, %v2361
        %2455 = vst.msk [vmem:[#allocation2 + $0x10] sm:$0xf] %vm2450, %v2363
        %2456 = vst.msk [vmem:[#allocation2 + $0x14] sm:$0xf] %vm2450, %v2365
        %2457 = vst.msk [vmem:[#allocation2 + $0x18] sm:$0xf] %vm2450, %v2367
        %2458 = vst.msk [vmem:[#allocation2 + $0x1c] sm:$0xf] %vm2450, %v2369
        %2459 = vst.msk [vmem:[#allocation2 + $0x20] sm:$0xf] %vm2450, %v2371
        %2460 = vst.msk [vmem:[#allocation2 + $0x24] sm:$0xf] %vm2450, %v2373
        %2461 = vst.msk [vmem:[#allocation2 + $0x28] sm:$0xf] %vm2450, %v2375
        %2462 = vst.msk [vmem:[#allocation2 + $0x2c] sm:$0xf] %vm2450, %v2377
        %2463 = vst.msk [vmem:[#allocation2 + $0x30] sm:$0xf] %vm2450, %v2379
        %2464 = vst.msk [vmem:[#allocation2 + $0x34] sm:$0xf] %vm2450, %v2381
        %2465 = vst.msk [vmem:[#allocation2 + $0x38] sm:$0xf] %vm2450, %v2383
        %2466 = vst.msk [vmem:[#allocation2 + $0x3c] sm:$0xf] %vm2450, %v2385
        %2467 = vst.msk [vmem:[#allocation2 + $0x40] sm:$0xf] %vm2450, %v2387
        %2468 = vst.msk [vmem:[#allocation2 + $0x44] sm:$0xf] %vm2450, %v2389
        %2469 = vst.msk [vmem:[#allocation2 + $0x48] sm:$0xf] %vm2450, %v2391
        %2470 = vst.msk [vmem:[#allocation2 + $0x4c] sm:$0xf] %vm2450, %v2393
        %2471 = vst.msk [vmem:[#allocation2 + $0x50] sm:$0xf] %vm2450, %v2395
        %2472 = vst.msk [vmem:[#allocation2 + $0x54] sm:$0xf] %vm2450, %v2397
        %2473 = vst.msk [vmem:[#allocation2 + $0x58] sm:$0xf] %vm2450, %v2399
        %2474 = vst.msk [vmem:[#allocation2 + $0x5c] sm:$0xf] %vm2450, %v2401
        %2475 = vst.msk [vmem:[#allocation2 + $0x60] sm:$0xf] %vm2450, %v2403
        %2476 = vst.msk [vmem:[#allocation2 + $0x64] sm:$0xf] %vm2450, %v2405
        %2477 = vst.msk [vmem:[#allocation2 + $0x68] sm:$0xf] %vm2450, %v2407
        %2478 = vst.msk [vmem:[#allocation2 + $0x6c] sm:$0xf] %vm2450, %v2409
        %2479 = vst.msk [vmem:[#allocation2 + $0x70] sm:$0xf] %vm2450, %v2411
        %2480 = vst.msk [vmem:[#allocation2 + $0x74] sm:$0xf] %vm2450, %v2413
        %2481 = vst.msk [vmem:[#allocation2 + $0x78] sm:$0xf] %vm2450, %v2415
        %2482 = vst.msk [vmem:[#allocation2 + $0x7c] sm:$0xf] %vm2450, %v2417
        %v2483 = vld [vmem:[%s2289] sm:$0xf]
        %v2484 = vld [vmem:[%s2289 + $0x4] sm:$0xf]
        %v2485 = vld [vmem:[%s2289 + $0x8] sm:$0x1]
        %v2486 = vld [vmem:[%s2289 + $0xc] sm:$0xf]
        %v2487 = vld [vmem:[%s2289 + $0x10] sm:$0xf]
        %v2488 = vld [vmem:[%s2289 + $0x14] sm:$0x1]
        %v2489 = vld [vmem:[%s2289 + $0x18] sm:$0xf]
        %v2490 = vld [vmem:[%s2289 + $0x1c] sm:$0xf]
        %v2491 = vld [vmem:[%s2289 + $0x20] sm:$0x1]
        %v2492 = vld [vmem:[%s2289 + $0x24] sm:$0xf]
        %v2493 = vld [vmem:[%s2289 + $0x28] sm:$0xf]
        %v2494 = vld [vmem:[%s2289 + $0x2c] sm:$0x1]
        %v2495 = vld [vmem:[%s2289 + $0x30] sm:$0xf]
        %v2496 = vld [vmem:[%s2289 + $0x34] sm:$0xf]
        %v2497 = vld [vmem:[%s2289 + $0x38] sm:$0x1]
        %v2498 = vld [vmem:[%s2289 + $0x3c] sm:$0xf]
        %v2499 = vld [vmem:[%s2289 + $0x40] sm:$0xf]
        %v2500 = vld [vmem:[%s2289 + $0x44] sm:$0x1]
        %v2501 = vld [vmem:[%s2289 + $0x48] sm:$0xf]
        %v2502 = vld [vmem:[%s2289 + $0x4c] sm:$0xf]
        %v2503 = vld [vmem:[%s2289 + $0x50] sm:$0x1]
        %v2504 = vld [vmem:[%s2289 + $0x54] sm:$0xf]
        %v2505 = vld [vmem:[%s2289 + $0x58] sm:$0xf]
        %v2506 = vld [vmem:[%s2289 + $0x5c] sm:$0x1]
        %v2507 = vld [vmem:[%s2289 + $0x60] sm:$0xf]
        %v2508 = vld [vmem:[%s2289 + $0x64] sm:$0xf]
        %v2509 = vld [vmem:[%s2289 + $0x68] sm:$0x1]
        %v2510 = vld [vmem:[%s2289 + $0x6c] sm:$0xf]
        %v2511 = vld [vmem:[%s2289 + $0x70] sm:$0xf]
        %v2512 = vld [vmem:[%s2289 + $0x74] sm:$0x1]
        %v2513 = vld [vmem:[%s2289 + $0x78] sm:$0xf]
        %v2514 = vld [vmem:[%s2289 + $0x7c] sm:$0xf]
        %v2515 = vld [vmem:[%s2289 + $0x80] sm:$0x1]
        %v2516 = vld [vmem:[%s2289 + $0x84] sm:$0xf]
        %v2517 = vld [vmem:[%s2289 + $0x88] sm:$0xf]
        %v2518 = vld [vmem:[%s2289 + $0x8c] sm:$0x1]
        %v2519 = vld [vmem:[%s2289 + $0x90] sm:$0xf]
        %v2520 = vld [vmem:[%s2289 + $0x94] sm:$0xf]
        %v2521 = vld [vmem:[%s2289 + $0x98] sm:$0x1]
        %v2522 = vld [vmem:[%s2289 + $0x9c] sm:$0xf]
        %v2523 = vld [vmem:[%s2289 + $0xa0] sm:$0xf]
        %v2524 = vld [vmem:[%s2289 + $0xa4] sm:$0x1]
        %v2525 = vld [vmem:[%s2289 + $0xa8] sm:$0xf]
        %v2526 = vld [vmem:[%s2289 + $0xac] sm:$0xf]
        %v2527 = vld [vmem:[%s2289 + $0xb0] sm:$0x1]
        %v2528 = vld [vmem:[%s2289 + $0xb4] sm:$0xf]
        %v2529 = vld [vmem:[%s2289 + $0xb8] sm:$0xf]
        %v2530 = vld [vmem:[%s2289 + $0xbc] sm:$0x1]
        %v2532 = vshrl.u32 %v2483, 16
        %v2534 = vrot.slane %v2532, 4
        %v2535 = vshll.u32 %v2483, 16
        %v2537 = vrot.slane %v2535, 5
        %v2538 = vor.u32 %v2534, %v2537
        %v2539 = vrot.slane %v2538, 4
        %v2541 = vshll.u32 %v2484, 16
        %v2543 = vrot.slane %v2541, 5
        %v2544 = vsel %vm337, %v2539, %v2543
        %v2545 = vshrl.u32 %v2484, 16
        %v2547 = vrot.slane %v2545, 4
        %v2548 = vor.u32 %v2547, %v2543
        %v2549 = vrot.slane %v2548, 4
        %v2551 = vshll.u32 %v2485, 16
        %v2553 = vrot.slane %v2551, 5
        %v2554 = vsel %vm337, %v2549, %v2553
        %v2556 = vshrl.u32 %v2486, 16
        %v2558 = vrot.slane %v2556, 4
        %v2559 = vshll.u32 %v2486, 16
        %v2561 = vrot.slane %v2559, 5
        %v2562 = vor.u32 %v2558, %v2561
        %v2563 = vrot.slane %v2562, 4
        %v2565 = vshll.u32 %v2487, 16
        %v2567 = vrot.slane %v2565, 5
        %v2568 = vsel %vm337, %v2563, %v2567
        %v2569 = vshrl.u32 %v2487, 16
        %v2571 = vrot.slane %v2569, 4
        %v2572 = vor.u32 %v2571, %v2567
        %v2573 = vrot.slane %v2572, 4
        %v2575 = vshll.u32 %v2488, 16
        %v2577 = vrot.slane %v2575, 5
        %v2578 = vsel %vm337, %v2573, %v2577
        %v2580 = vshrl.u32 %v2489, 16
        %v2582 = vrot.slane %v2580, 4
        %v2583 = vshll.u32 %v2489, 16
        %v2585 = vrot.slane %v2583, 5
        %v2586 = vor.u32 %v2582, %v2585
        %v2587 = vrot.slane %v2586, 4
        %v2589 = vshll.u32 %v2490, 16
        %v2591 = vrot.slane %v2589, 5
        %v2592 = vsel %vm337, %v2587, %v2591
        %v2593 = vshrl.u32 %v2490, 16
        %v2595 = vrot.slane %v2593, 4
        %v2596 = vor.u32 %v2595, %v2591
        %v2597 = vrot.slane %v2596, 4
        %v2599 = vshll.u32 %v2491, 16
        %v2601 = vrot.slane %v2599, 5
        %v2602 = vsel %vm337, %v2597, %v2601
        %v2604 = vshrl.u32 %v2492, 16
        %v2606 = vrot.slane %v2604, 4
        %v2607 = vshll.u32 %v2492, 16
        %v2609 = vrot.slane %v2607, 5
        %v2610 = vor.u32 %v2606, %v2609
        %v2611 = vrot.slane %v2610, 4
        %v2613 = vshll.u32 %v2493, 16
        %v2615 = vrot.slane %v2613, 5
        %v2616 = vsel %vm337, %v2611, %v2615
        %v2617 = vshrl.u32 %v2493, 16
        %v2619 = vrot.slane %v2617, 4
        %v2620 = vor.u32 %v2619, %v2615
        %v2621 = vrot.slane %v2620, 4
        %v2623 = vshll.u32 %v2494, 16
        %v2625 = vrot.slane %v2623, 5
        %v2626 = vsel %vm337, %v2621, %v2625
        %v2628 = vshrl.u32 %v2495, 16
        %v2630 = vrot.slane %v2628, 4
        %v2631 = vshll.u32 %v2495, 16
        %v2633 = vrot.slane %v2631, 5
        %v2634 = vor.u32 %v2630, %v2633
        %v2635 = vrot.slane %v2634, 4
        %v2637 = vshll.u32 %v2496, 16
        %v2639 = vrot.slane %v2637, 5
        %v2640 = vsel %vm337, %v2635, %v2639
        %v2641 = vshrl.u32 %v2496, 16
        %v2643 = vrot.slane %v2641, 4
        %v2644 = vor.u32 %v2643, %v2639
        %v2645 = vrot.slane %v2644, 4
        %v2647 = vshll.u32 %v2497, 16
        %v2649 = vrot.slane %v2647, 5
        %v2650 = vsel %vm337, %v2645, %v2649
        %v2652 = vshrl.u32 %v2498, 16
        %v2654 = vrot.slane %v2652, 4
        %v2655 = vshll.u32 %v2498, 16
        %v2657 = vrot.slane %v2655, 5
        %v2658 = vor.u32 %v2654, %v2657
        %v2659 = vrot.slane %v2658, 4
        %v2661 = vshll.u32 %v2499, 16
        %v2663 = vrot.slane %v2661, 5
        %v2664 = vsel %vm337, %v2659, %v2663
        %v2665 = vshrl.u32 %v2499, 16
        %v2667 = vrot.slane %v2665, 4
        %v2668 = vor.u32 %v2667, %v2663
        %v2669 = vrot.slane %v2668, 4
        %v2671 = vshll.u32 %v2500, 16
        %v2673 = vrot.slane %v2671, 5
        %v2674 = vsel %vm337, %v2669, %v2673
        %v2676 = vshrl.u32 %v2501, 16
        %v2678 = vrot.slane %v2676, 4
        %v2679 = vshll.u32 %v2501, 16
        %v2681 = vrot.slane %v2679, 5
        %v2682 = vor.u32 %v2678, %v2681
        %v2683 = vrot.slane %v2682, 4
        %v2685 = vshll.u32 %v2502, 16
        %v2687 = vrot.slane %v2685, 5
        %v2688 = vsel %vm337, %v2683, %v2687
        %v2689 = vshrl.u32 %v2502, 16
        %v2691 = vrot.slane %v2689, 4
        %v2692 = vor.u32 %v2691, %v2687
        %v2693 = vrot.slane %v2692, 4
        %v2695 = vshll.u32 %v2503, 16
        %v2697 = vrot.slane %v2695, 5
        %v2698 = vsel %vm337, %v2693, %v2697
        %v2700 = vshrl.u32 %v2504, 16
        %v2702 = vrot.slane %v2700, 4
        %v2703 = vshll.u32 %v2504, 16
        %v2705 = vrot.slane %v2703, 5
        %v2706 = vor.u32 %v2702, %v2705
        %v2707 = vrot.slane %v2706, 4
        %v2709 = vshll.u32 %v2505, 16
        %v2711 = vrot.slane %v2709, 5
        %v2712 = vsel %vm337, %v2707, %v2711
        %v2713 = vshrl.u32 %v2505, 16
        %v2715 = vrot.slane %v2713, 4
        %v2716 = vor.u32 %v2715, %v2711
        %v2717 = vrot.slane %v2716, 4
        %v2719 = vshll.u32 %v2506, 16
        %v2721 = vrot.slane %v2719, 5
        %v2722 = vsel %vm337, %v2717, %v2721
        %v2724 = vshrl.u32 %v2507, 16
        %v2726 = vrot.slane %v2724, 4
        %v2727 = vshll.u32 %v2507, 16
        %v2729 = vrot.slane %v2727, 5
        %v2730 = vor.u32 %v2726, %v2729
        %v2731 = vrot.slane %v2730, 4
        %v2733 = vshll.u32 %v2508, 16
        %v2735 = vrot.slane %v2733, 5
        %v2736 = vsel %vm337, %v2731, %v2735
        %v2737 = vshrl.u32 %v2508, 16
        %v2739 = vrot.slane %v2737, 4
        %v2740 = vor.u32 %v2739, %v2735
        %v2741 = vrot.slane %v2740, 4
        %v2743 = vshll.u32 %v2509, 16
        %v2745 = vrot.slane %v2743, 5
        %v2746 = vsel %vm337, %v2741, %v2745
        %v2748 = vshrl.u32 %v2510, 16
        %v2750 = vrot.slane %v2748, 4
        %v2751 = vshll.u32 %v2510, 16
        %v2753 = vrot.slane %v2751, 5
        %v2754 = vor.u32 %v2750, %v2753
        %v2755 = vrot.slane %v2754, 4
        %v2757 = vshll.u32 %v2511, 16
        %v2759 = vrot.slane %v2757, 5
        %v2760 = vsel %vm337, %v2755, %v2759
        %v2761 = vshrl.u32 %v2511, 16
        %v2763 = vrot.slane %v2761, 4
        %v2764 = vor.u32 %v2763, %v2759
        %v2765 = vrot.slane %v2764, 4
        %v2767 = vshll.u32 %v2512, 16
        %v2769 = vrot.slane %v2767, 5
        %v2770 = vsel %vm337, %v2765, %v2769
        %v2772 = vshrl.u32 %v2513, 16
        %v2774 = vrot.slane %v2772, 4
        %v2775 = vshll.u32 %v2513, 16
        %v2777 = vrot.slane %v2775, 5
        %v2778 = vor.u32 %v2774, %v2777
        %v2779 = vrot.slane %v2778, 4
        %v2781 = vshll.u32 %v2514, 16
        %v2783 = vrot.slane %v2781, 5
        %v2784 = vsel %vm337, %v2779, %v2783
        %v2785 = vshrl.u32 %v2514, 16
        %v2787 = vrot.slane %v2785, 4
        %v2788 = vor.u32 %v2787, %v2783
        %v2789 = vrot.slane %v2788, 4
        %v2791 = vshll.u32 %v2515, 16
        %v2793 = vrot.slane %v2791, 5
        %v2794 = vsel %vm337, %v2789, %v2793
        %v2796 = vshrl.u32 %v2516, 16
        %v2798 = vrot.slane %v2796, 4
        %v2799 = vshll.u32 %v2516, 16
        %v2801 = vrot.slane %v2799, 5
        %v2802 = vor.u32 %v2798, %v2801
        %v2803 = vrot.slane %v2802, 4
        %v2805 = vshll.u32 %v2517, 16
        %v2807 = vrot.slane %v2805, 5
        %v2808 = vsel %vm337, %v2803, %v2807
        %v2809 = vshrl.u32 %v2517, 16
        %v2811 = vrot.slane %v2809, 4
        %v2812 = vor.u32 %v2811, %v2807
        %v2813 = vrot.slane %v2812, 4
        %v2815 = vshll.u32 %v2518, 16
        %v2817 = vrot.slane %v2815, 5
        %v2818 = vsel %vm337, %v2813, %v2817
        %v2820 = vshrl.u32 %v2519, 16
        %v2822 = vrot.slane %v2820, 4
        %v2823 = vshll.u32 %v2519, 16
        %v2825 = vrot.slane %v2823, 5
        %v2826 = vor.u32 %v2822, %v2825
        %v2827 = vrot.slane %v2826, 4
        %v2829 = vshll.u32 %v2520, 16
        %v2831 = vrot.slane %v2829, 5
        %v2832 = vsel %vm337, %v2827, %v2831
        %v2833 = vshrl.u32 %v2520, 16
        %v2835 = vrot.slane %v2833, 4
        %v2836 = vor.u32 %v2835, %v2831
        %v2837 = vrot.slane %v2836, 4
        %v2839 = vshll.u32 %v2521, 16
        %v2841 = vrot.slane %v2839, 5
        %v2842 = vsel %vm337, %v2837, %v2841
        %v2844 = vshrl.u32 %v2522, 16
        %v2846 = vrot.slane %v2844, 4
        %v2847 = vshll.u32 %v2522, 16
        %v2849 = vrot.slane %v2847, 5
        %v2850 = vor.u32 %v2846, %v2849
        %v2851 = vrot.slane %v2850, 4
        %v2853 = vshll.u32 %v2523, 16
        %v2855 = vrot.slane %v2853, 5
        %v2856 = vsel %vm337, %v2851, %v2855
        %v2857 = vshrl.u32 %v2523, 16
        %v2859 = vrot.slane %v2857, 4
        %v2860 = vor.u32 %v2859, %v2855
        %v2861 = vrot.slane %v2860, 4
        %v2863 = vshll.u32 %v2524, 16
        %v2865 = vrot.slane %v2863, 5
        %v2866 = vsel %vm337, %v2861, %v2865
        %v2868 = vshrl.u32 %v2525, 16
        %v2870 = vrot.slane %v2868, 4
        %v2871 = vshll.u32 %v2525, 16
        %v2873 = vrot.slane %v2871, 5
        %v2874 = vor.u32 %v2870, %v2873
        %v2875 = vrot.slane %v2874, 4
        %v2877 = vshll.u32 %v2526, 16
        %v2879 = vrot.slane %v2877, 5
        %v2880 = vsel %vm337, %v2875, %v2879
        %v2881 = vshrl.u32 %v2526, 16
        %v2883 = vrot.slane %v2881, 4
        %v2884 = vor.u32 %v2883, %v2879
        %v2885 = vrot.slane %v2884, 4
        %v2887 = vshll.u32 %v2527, 16
        %v2889 = vrot.slane %v2887, 5
        %v2890 = vsel %vm337, %v2885, %v2889
        %v2892 = vshrl.u32 %v2528, 16
        %v2894 = vrot.slane %v2892, 4
        %v2895 = vshll.u32 %v2528, 16
        %v2897 = vrot.slane %v2895, 5
        %v2898 = vor.u32 %v2894, %v2897
        %v2899 = vrot.slane %v2898, 4
        %v2901 = vshll.u32 %v2529, 16
        %v2903 = vrot.slane %v2901, 5
        %v2904 = vsel %vm337, %v2899, %v2903
        %v2905 = vshrl.u32 %v2529, 16
        %v2907 = vrot.slane %v2905, 4
        %v2908 = vor.u32 %v2907, %v2903
        %v2909 = vrot.slane %v2908, 4
        %v2911 = vshll.u32 %v2530, 16
        %v2913 = vrot.slane %v2911, 5
        %v2914 = vsel %vm337, %v2909, %v2913
        %2915 = vrot.lane.b32.xlu0 %v2544, 28
        %v2916 = vpop.permute.xlu0 %2915
        %2917 = vrot.lane.b32.xlu0 %v2554, 28
        %v2918 = vpop.permute.xlu0 %2917
        %2919 = vrot.lane.b32.xlu0 %v2568, 28
        %v2920 = vpop.permute.xlu0 %2919
        %2921 = vrot.lane.b32.xlu0 %v2578, 28
        %v2922 = vpop.permute.xlu0 %2921
        %2923 = vrot.lane.b32.xlu0 %v2592, 28
        %v2924 = vpop.permute.xlu0 %2923
        %2925 = vrot.lane.b32.xlu0 %v2602, 28
        %v2926 = vpop.permute.xlu0 %2925
        %2927 = vrot.lane.b32.xlu0 %v2616, 28
        %v2928 = vpop.permute.xlu0 %2927
        %2929 = vrot.lane.b32.xlu0 %v2626, 28
        %v2930 = vpop.permute.xlu0 %2929
        %2931 = vrot.lane.b32.xlu0 %v2640, 28
        %v2932 = vpop.permute.xlu0 %2931
        %2933 = vrot.lane.b32.xlu0 %v2650, 28
        %v2934 = vpop.permute.xlu0 %2933
        %2935 = vrot.lane.b32.xlu0 %v2664, 28
        %v2936 = vpop.permute.xlu0 %2935
        %2937 = vrot.lane.b32.xlu0 %v2674, 28
        %v2938 = vpop.permute.xlu0 %2937
        %2939 = vrot.lane.b32.xlu0 %v2688, 28
        %v2940 = vpop.permute.xlu0 %2939
        %2941 = vrot.lane.b32.xlu0 %v2698, 28
        %v2942 = vpop.permute.xlu0 %2941
        %2943 = vrot.lane.b32.xlu0 %v2712, 28
        %v2944 = vpop.permute.xlu0 %2943
        %2945 = vrot.lane.b32.xlu0 %v2722, 28
        %v2946 = vpop.permute.xlu0 %2945
        %2947 = vrot.lane.b32.xlu0 %v2736, 28
        %v2948 = vpop.permute.xlu0 %2947
        %2949 = vrot.lane.b32.xlu0 %v2746, 28
        %v2950 = vpop.permute.xlu0 %2949
        %2951 = vrot.lane.b32.xlu0 %v2760, 28
        %v2952 = vpop.permute.xlu0 %2951
        %2953 = vrot.lane.b32.xlu0 %v2770, 28
        %v2954 = vpop.permute.xlu0 %2953
        %2955 = vrot.lane.b32.xlu0 %v2784, 28
        %v2956 = vpop.permute.xlu0 %2955
        %2957 = vrot.lane.b32.xlu0 %v2794, 28
        %v2958 = vpop.permute.xlu0 %2957
        %2959 = vrot.lane.b32.xlu0 %v2808, 28
        %v2960 = vpop.permute.xlu0 %2959
        %2961 = vrot.lane.b32.xlu0 %v2818, 28
        %v2962 = vpop.permute.xlu0 %2961
        %2963 = vrot.lane.b32.xlu0 %v2832, 28
        %v2964 = vpop.permute.xlu0 %2963
        %2965 = vrot.lane.b32.xlu0 %v2842, 28
        %v2966 = vpop.permute.xlu0 %2965
        %2967 = vrot.lane.b32.xlu0 %v2856, 28
        %v2968 = vpop.permute.xlu0 %2967
        %2969 = vrot.lane.b32.xlu0 %v2866, 28
        %v2970 = vpop.permute.xlu0 %2969
        %2971 = vrot.lane.b32.xlu0 %v2880, 28
        %v2972 = vpop.permute.xlu0 %2971
        %2973 = vrot.lane.b32.xlu0 %v2890, 28
        %v2974 = vpop.permute.xlu0 %2973
        %2975 = vrot.lane.b32.xlu0 %v2904, 28
        %v2976 = vpop.permute.xlu0 %2975
        %2977 = vrot.lane.b32.xlu0 %v2914, 28
        %v2978 = vpop.permute.xlu0 %2977
        %vm3011 = vcmask 257248
        %3012 = vst.msk [vmem:[#allocation2] sm:$0xf] %vm3011, %v2916
        %3013 = vst.msk [vmem:[#allocation2 + $0x4] sm:$0xf] %vm3011, %v2918
        %3014 = vst.msk [vmem:[#allocation2 + $0x8] sm:$0xf] %vm3011, %v2920
        %3015 = vst.msk [vmem:[#allocation2 + $0xc] sm:$0xf] %vm3011, %v2922
        %3016 = vst.msk [vmem:[#allocation2 + $0x10] sm:$0xf] %vm3011, %v2924
        %3017 = vst.msk [vmem:[#allocation2 + $0x14] sm:$0xf] %vm3011, %v2926
        %3018 = vst.msk [vmem:[#allocation2 + $0x18] sm:$0xf] %vm3011, %v2928
        %3019 = vst.msk [vmem:[#allocation2 + $0x1c] sm:$0xf] %vm3011, %v2930
        %3020 = vst.msk [vmem:[#allocation2 + $0x20] sm:$0xf] %vm3011, %v2932
        %3021 = vst.msk [vmem:[#allocation2 + $0x24] sm:$0xf] %vm3011, %v2934
        %3022 = vst.msk [vmem:[#allocation2 + $0x28] sm:$0xf] %vm3011, %v2936
        %3023 = vst.msk [vmem:[#allocation2 + $0x2c] sm:$0xf] %vm3011, %v2938
        %3024 = vst.msk [vmem:[#allocation2 + $0x30] sm:$0xf] %vm3011, %v2940
        %3025 = vst.msk [vmem:[#allocation2 + $0x34] sm:$0xf] %vm3011, %v2942
        %3026 = vst.msk [vmem:[#allocation2 + $0x38] sm:$0xf] %vm3011, %v2944
        %3027 = vst.msk [vmem:[#allocation2 + $0x3c] sm:$0xf] %vm3011, %v2946
        %3028 = vst.msk [vmem:[#allocation2 + $0x40] sm:$0xf] %vm3011, %v2948
        %3029 = vst.msk [vmem:[#allocation2 + $0x44] sm:$0xf] %vm3011, %v2950
        %3030 = vst.msk [vmem:[#allocation2 + $0x48] sm:$0xf] %vm3011, %v2952
        %3031 = vst.msk [vmem:[#allocation2 + $0x4c] sm:$0xf] %vm3011, %v2954
        %3032 = vst.msk [vmem:[#allocation2 + $0x50] sm:$0xf] %vm3011, %v2956
        %3033 = vst.msk [vmem:[#allocation2 + $0x54] sm:$0xf] %vm3011, %v2958
        %3034 = vst.msk [vmem:[#allocation2 + $0x58] sm:$0xf] %vm3011, %v2960
        %3035 = vst.msk [vmem:[#allocation2 + $0x5c] sm:$0xf] %vm3011, %v2962
        %3036 = vst.msk [vmem:[#allocation2 + $0x60] sm:$0xf] %vm3011, %v2964
        %3037 = vst.msk [vmem:[#allocation2 + $0x64] sm:$0xf] %vm3011, %v2966
        %3038 = vst.msk [vmem:[#allocation2 + $0x68] sm:$0xf] %vm3011, %v2968
        %3039 = vst.msk [vmem:[#allocation2 + $0x6c] sm:$0xf] %vm3011, %v2970
        %3040 = vst.msk [vmem:[#allocation2 + $0x70] sm:$0xf] %vm3011, %v2972
        %3041 = vst.msk [vmem:[#allocation2 + $0x74] sm:$0xf] %vm3011, %v2974
        %3042 = vst.msk [vmem:[#allocation2 + $0x78] sm:$0xf] %vm3011, %v2976
        %3043 = vst.msk [vmem:[#allocation2 + $0x7c] sm:$0xf] %vm3011, %v2978
        %v3044 = vld [vmem:[%s2289] sm:$0xe]
        %v3045 = vld [vmem:[%s2289 + $0x4] sm:$0xf]
        %v3046 = vld [vmem:[%s2289 + $0x8] sm:$0x1]
        %v3047 = vld [vmem:[%s2289 + $0xc] sm:$0xe]
        %v3048 = vld [vmem:[%s2289 + $0x10] sm:$0xf]
        %v3049 = vld [vmem:[%s2289 + $0x14] sm:$0x1]
        %v3050 = vld [vmem:[%s2289 + $0x18] sm:$0xe]
        %v3051 = vld [vmem:[%s2289 + $0x1c] sm:$0xf]
        %v3052 = vld [vmem:[%s2289 + $0x20] sm:$0x1]
        %v3053 = vld [vmem:[%s2289 + $0x24] sm:$0xe]
        %v3054 = vld [vmem:[%s2289 + $0x28] sm:$0xf]
        %v3055 = vld [vmem:[%s2289 + $0x2c] sm:$0x1]
        %v3056 = vld [vmem:[%s2289 + $0x30] sm:$0xe]
        %v3057 = vld [vmem:[%s2289 + $0x34] sm:$0xf]
        %v3058 = vld [vmem:[%s2289 + $0x38] sm:$0x1]
        %v3059 = vld [vmem:[%s2289 + $0x3c] sm:$0xe]
        %v3060 = vld [vmem:[%s2289 + $0x40] sm:$0xf]
        %v3061 = vld [vmem:[%s2289 + $0x44] sm:$0x1]
        %v3062 = vld [vmem:[%s2289 + $0x48] sm:$0xe]
        %v3063 = vld [vmem:[%s2289 + $0x4c] sm:$0xf]
        %v3064 = vld [vmem:[%s2289 + $0x50] sm:$0x1]
        %v3065 = vld [vmem:[%s2289 + $0x54] sm:$0xe]
        %v3066 = vld [vmem:[%s2289 + $0x58] sm:$0xf]
        %v3067 = vld [vmem:[%s2289 + $0x5c] sm:$0x1]
        %v3068 = vld [vmem:[%s2289 + $0x60] sm:$0xe]
        %v3069 = vld [vmem:[%s2289 + $0x64] sm:$0xf]
        %v3070 = vld [vmem:[%s2289 + $0x68] sm:$0x1]
        %v3071 = vld [vmem:[%s2289 + $0x6c] sm:$0xe]
        %v3072 = vld [vmem:[%s2289 + $0x70] sm:$0xf]
        %v3073 = vld [vmem:[%s2289 + $0x74] sm:$0x1]
        %v3074 = vld [vmem:[%s2289 + $0x78] sm:$0xe]
        %v3075 = vld [vmem:[%s2289 + $0x7c] sm:$0xf]
        %v3076 = vld [vmem:[%s2289 + $0x80] sm:$0x1]
        %v3077 = vld [vmem:[%s2289 + $0x84] sm:$0xe]
        %v3078 = vld [vmem:[%s2289 + $0x88] sm:$0xf]
        %v3079 = vld [vmem:[%s2289 + $0x8c] sm:$0x1]
        %v3080 = vld [vmem:[%s2289 + $0x90] sm:$0xe]
        %v3081 = vld [vmem:[%s2289 + $0x94] sm:$0xf]
        %v3082 = vld [vmem:[%s2289 + $0x98] sm:$0x1]
        %v3083 = vld [vmem:[%s2289 + $0x9c] sm:$0xe]
        %v3084 = vld [vmem:[%s2289 + $0xa0] sm:$0xf]
        %v3085 = vld [vmem:[%s2289 + $0xa4] sm:$0x1]
        %v3086 = vld [vmem:[%s2289 + $0xa8] sm:$0xe]
        %v3087 = vld [vmem:[%s2289 + $0xac] sm:$0xf]
        %v3088 = vld [vmem:[%s2289 + $0xb0] sm:$0x1]
        %v3089 = vld [vmem:[%s2289 + $0xb4] sm:$0xe]
        %v3090 = vld [vmem:[%s2289 + $0xb8] sm:$0xf]
        %v3091 = vld [vmem:[%s2289 + $0xbc] sm:$0x1]
        %v3140 = vrot.slane %v3044, 5
        %v3141 = vrot.slane %v3140, 4
        %v3142 = vrot.slane %v3045, 5
        %v3143 = vsel %vm949, %v3141, %v3142
        %v3144 = vrot.slane %v3142, 4
        %v3145 = vrot.slane %v3046, 5
        %v3146 = vsel %vm949, %v3144, %v3145
        %v3147 = vrot.slane %v3047, 5
        %v3148 = vrot.slane %v3147, 4
        %v3149 = vrot.slane %v3048, 5
        %v3150 = vsel %vm949, %v3148, %v3149
        %v3151 = vrot.slane %v3149, 4
        %v3152 = vrot.slane %v3049, 5
        %v3153 = vsel %vm949, %v3151, %v3152
        %v3154 = vrot.slane %v3050, 5
        %v3155 = vrot.slane %v3154, 4
        %v3156 = vrot.slane %v3051, 5
        %v3157 = vsel %vm949, %v3155, %v3156
        %v3158 = vrot.slane %v3156, 4
        %v3159 = vrot.slane %v3052, 5
        %v3160 = vsel %vm949, %v3158, %v3159
        %v3161 = vrot.slane %v3053, 5
        %v3162 = vrot.slane %v3161, 4
        %v3163 = vrot.slane %v3054, 5
        %v3164 = vsel %vm949, %v3162, %v3163
        %v3165 = vrot.slane %v3163, 4
        %v3166 = vrot.slane %v3055, 5
        %v3167 = vsel %vm949, %v3165, %v3166
        %v3168 = vrot.slane %v3056, 5
        %v3169 = vrot.slane %v3168, 4
        %v3170 = vrot.slane %v3057, 5
        %v3171 = vsel %vm949, %v3169, %v3170
        %v3172 = vrot.slane %v3170, 4
        %v3173 = vrot.slane %v3058, 5
        %v3174 = vsel %vm949, %v3172, %v3173
        %v3175 = vrot.slane %v3059, 5
        %v3176 = vrot.slane %v3175, 4
        %v3177 = vrot.slane %v3060, 5
        %v3178 = vsel %vm949, %v3176, %v3177
        %v3179 = vrot.slane %v3177, 4
        %v3180 = vrot.slane %v3061, 5
        %v3181 = vsel %vm949, %v3179, %v3180
        %v3182 = vrot.slane %v3062, 5
        %v3183 = vrot.slane %v3182, 4
        %v3184 = vrot.slane %v3063, 5
        %v3185 = vsel %vm949, %v3183, %v3184
        %v3186 = vrot.slane %v3184, 4
        %v3187 = vrot.slane %v3064, 5
        %v3188 = vsel %vm949, %v3186, %v3187
        %v3189 = vrot.slane %v3065, 5
        %v3190 = vrot.slane %v3189, 4
        %v3191 = vrot.slane %v3066, 5
        %v3192 = vsel %vm949, %v3190, %v3191
        %v3193 = vrot.slane %v3191, 4
        %v3194 = vrot.slane %v3067, 5
        %v3195 = vsel %vm949, %v3193, %v3194
        %v3196 = vrot.slane %v3068, 5
        %v3197 = vrot.slane %v3196, 4
        %v3198 = vrot.slane %v3069, 5
        %v3199 = vsel %vm949, %v3197, %v3198
        %v3200 = vrot.slane %v3198, 4
        %v3201 = vrot.slane %v3070, 5
        %v3202 = vsel %vm949, %v3200, %v3201
        %v3203 = vrot.slane %v3071, 5
        %v3204 = vrot.slane %v3203, 4
        %v3205 = vrot.slane %v3072, 5
        %v3206 = vsel %vm949, %v3204, %v3205
        %v3207 = vrot.slane %v3205, 4
        %v3208 = vrot.slane %v3073, 5
        %v3209 = vsel %vm949, %v3207, %v3208
        %v3210 = vrot.slane %v3074, 5
        %v3211 = vrot.slane %v3210, 4
        %v3212 = vrot.slane %v3075, 5
        %v3213 = vsel %vm949, %v3211, %v3212
        %v3214 = vrot.slane %v3212, 4
        %v3215 = vrot.slane %v3076, 5
        %v3216 = vsel %vm949, %v3214, %v3215
        %v3217 = vrot.slane %v3077, 5
        %v3218 = vrot.slane %v3217, 4
        %v3219 = vrot.slane %v3078, 5
        %v3220 = vsel %vm949, %v3218, %v3219
        %v3221 = vrot.slane %v3219, 4
        %v3222 = vrot.slane %v3079, 5
        %v3223 = vsel %vm949, %v3221, %v3222
        %v3224 = vrot.slane %v3080, 5
        %v3225 = vrot.slane %v3224, 4
        %v3226 = vrot.slane %v3081, 5
        %v3227 = vsel %vm949, %v3225, %v3226
        %v3228 = vrot.slane %v3226, 4
        %v3229 = vrot.slane %v3082, 5
        %v3230 = vsel %vm949, %v3228, %v3229
        %v3231 = vrot.slane %v3083, 5
        %v3232 = vrot.slane %v3231, 4
        %v3233 = vrot.slane %v3084, 5
        %v3234 = vsel %vm949, %v3232, %v3233
        %v3235 = vrot.slane %v3233, 4
        %v3236 = vrot.slane %v3085, 5
        %v3237 = vsel %vm949, %v3235, %v3236
        %v3238 = vrot.slane %v3086, 5
        %v3239 = vrot.slane %v3238, 4
        %v3240 = vrot.slane %v3087, 5
        %v3241 = vsel %vm949, %v3239, %v3240
        %v3242 = vrot.slane %v3240, 4
        %v3243 = vrot.slane %v3088, 5
        %v3244 = vsel %vm949, %v3242, %v3243
        %v3245 = vrot.slane %v3089, 5
        %v3246 = vrot.slane %v3245, 4
        %v3247 = vrot.slane %v3090, 5
        %v3248 = vsel %vm949, %v3246, %v3247
        %v3249 = vrot.slane %v3247, 4
        %v3250 = vrot.slane %v3091, 5
        %v3251 = vsel %vm949, %v3249, %v3250
        %3252 = vrot.lane.b32.xlu0 %v3143, 32
        %v3253 = vpop.permute.xlu0 %3252
        %3254 = vrot.lane.b32.xlu0 %v3146, 32
        %v3255 = vpop.permute.xlu0 %3254
        %3256 = vrot.lane.b32.xlu0 %v3150, 32
        %v3257 = vpop.permute.xlu0 %3256
        %3258 = vrot.lane.b32.xlu0 %v3153, 32
        %v3259 = vpop.permute.xlu0 %3258
        %3260 = vrot.lane.b32.xlu0 %v3157, 32
        %v3261 = vpop.permute.xlu0 %3260
        %3262 = vrot.lane.b32.xlu0 %v3160, 32
        %v3263 = vpop.permute.xlu0 %3262
        %3264 = vrot.lane.b32.xlu0 %v3164, 32
        %v3265 = vpop.permute.xlu0 %3264
        %3266 = vrot.lane.b32.xlu0 %v3167, 32
        %v3267 = vpop.permute.xlu0 %3266
        %3268 = vrot.lane.b32.xlu0 %v3171, 32
        %v3269 = vpop.permute.xlu0 %3268
        %3270 = vrot.lane.b32.xlu0 %v3174, 32
        %v3271 = vpop.permute.xlu0 %3270
        %3272 = vrot.lane.b32.xlu0 %v3178, 32
        %v3273 = vpop.permute.xlu0 %3272
        %3274 = vrot.lane.b32.xlu0 %v3181, 32
        %v3275 = vpop.permute.xlu0 %3274
        %3276 = vrot.lane.b32.xlu0 %v3185, 32
        %v3277 = vpop.permute.xlu0 %3276
        %3278 = vrot.lane.b32.xlu0 %v3188, 32
        %v3279 = vpop.permute.xlu0 %3278
        %3280 = vrot.lane.b32.xlu0 %v3192, 32
        %v3281 = vpop.permute.xlu0 %3280
        %3282 = vrot.lane.b32.xlu0 %v3195, 32
        %v3283 = vpop.permute.xlu0 %3282
        %3284 = vrot.lane.b32.xlu0 %v3199, 32
        %v3285 = vpop.permute.xlu0 %3284
        %3286 = vrot.lane.b32.xlu0 %v3202, 32
        %v3287 = vpop.permute.xlu0 %3286
        %3288 = vrot.lane.b32.xlu0 %v3206, 32
        %v3289 = vpop.permute.xlu0 %3288
        %3290 = vrot.lane.b32.xlu0 %v3209, 32
        %v3291 = vpop.permute.xlu0 %3290
        %3292 = vrot.lane.b32.xlu0 %v3213, 32
        %v3293 = vpop.permute.xlu0 %3292
        %3294 = vrot.lane.b32.xlu0 %v3216, 32
        %v3295 = vpop.permute.xlu0 %3294
        %3296 = vrot.lane.b32.xlu0 %v3220, 32
        %v3297 = vpop.permute.xlu0 %3296
        %3298 = vrot.lane.b32.xlu0 %v3223, 32
        %v3299 = vpop.permute.xlu0 %3298
        %3300 = vrot.lane.b32.xlu0 %v3227, 32
        %v3301 = vpop.permute.xlu0 %3300
        %3302 = vrot.lane.b32.xlu0 %v3230, 32
        %v3303 = vpop.permute.xlu0 %3302
        %3304 = vrot.lane.b32.xlu0 %v3234, 32
        %v3305 = vpop.permute.xlu0 %3304
        %3306 = vrot.lane.b32.xlu0 %v3237, 32
        %v3307 = vpop.permute.xlu0 %3306
        %3308 = vrot.lane.b32.xlu0 %v3241, 32
        %v3309 = vpop.permute.xlu0 %3308
        %3310 = vrot.lane.b32.xlu0 %v3244, 32
        %v3311 = vpop.permute.xlu0 %3310
        %3312 = vrot.lane.b32.xlu0 %v3248, 32
        %v3313 = vpop.permute.xlu0 %3312
        %3314 = vrot.lane.b32.xlu0 %v3251, 32
        %v3315 = vpop.permute.xlu0 %3314
        %vm3348 = vcmask 290048
        %3349 = vst.msk [vmem:[#allocation2] sm:$0xf] %vm3348, %v3253
        %3350 = vst.msk [vmem:[#allocation2 + $0x4] sm:$0xf] %vm3348, %v3255
        %3351 = vst.msk [vmem:[#allocation2 + $0x8] sm:$0xf] %vm3348, %v3257
        %3352 = vst.msk [vmem:[#allocation2 + $0xc] sm:$0xf] %vm3348, %v3259
        %3353 = vst.msk [vmem:[#allocation2 + $0x10] sm:$0xf] %vm3348, %v3261
        %3354 = vst.msk [vmem:[#allocation2 + $0x14] sm:$0xf] %vm3348, %v3263
        %3355 = vst.msk [vmem:[#allocation2 + $0x18] sm:$0xf] %vm3348, %v3265
        %3356 = vst.msk [vmem:[#allocation2 + $0x1c] sm:$0xf] %vm3348, %v3267
        %3357 = vst.msk [vmem:[#allocation2 + $0x20] sm:$0xf] %vm3348, %v3269
        %3358 = vst.msk [vmem:[#allocation2 + $0x24] sm:$0xf] %vm3348, %v3271
        %3359 = vst.msk [vmem:[#allocation2 + $0x28] sm:$0xf] %vm3348, %v3273
        %3360 = vst.msk [vmem:[#allocation2 + $0x2c] sm:$0xf] %vm3348, %v3275
        %3361 = vst.msk [vmem:[#allocation2 + $0x30] sm:$0xf] %vm3348, %v3277
        %3362 = vst.msk [vmem:[#allocation2 + $0x34] sm:$0xf] %vm3348, %v3279
        %3363 = vst.msk [vmem:[#allocation2 + $0x38] sm:$0xf] %vm3348, %v3281
        %3364 = vst.msk [vmem:[#allocation2 + $0x3c] sm:$0xf] %vm3348, %v3283
        %3365 = vst.msk [vmem:[#allocation2 + $0x40] sm:$0xf] %vm3348, %v3285
        %3366 = vst.msk [vmem:[#allocation2 + $0x44] sm:$0xf] %vm3348, %v3287
        %3367 = vst.msk [vmem:[#allocation2 + $0x48] sm:$0xf] %vm3348, %v3289
        %3368 = vst.msk [vmem:[#allocation2 + $0x4c] sm:$0xf] %vm3348, %v3291
        %3369 = vst.msk [vmem:[#allocation2 + $0x50] sm:$0xf] %vm3348, %v3293
        %3370 = vst.msk [vmem:[#allocation2 + $0x54] sm:$0xf] %vm3348, %v3295
        %3371 = vst.msk [vmem:[#allocation2 + $0x58] sm:$0xf] %vm3348, %v3297
        %3372 = vst.msk [vmem:[#allocation2 + $0x5c] sm:$0xf] %vm3348, %v3299
        %3373 = vst.msk [vmem:[#allocation2 + $0x60] sm:$0xf] %vm3348, %v3301
        %3374 = vst.msk [vmem:[#allocation2 + $0x64] sm:$0xf] %vm3348, %v3303
        %3375 = vst.msk [vmem:[#allocation2 + $0x68] sm:$0xf] %vm3348, %v3305
        %3376 = vst.msk [vmem:[#allocation2 + $0x6c] sm:$0xf] %vm3348, %v3307
        %3377 = vst.msk [vmem:[#allocation2 + $0x70] sm:$0xf] %vm3348, %v3309
        %3378 = vst.msk [vmem:[#allocation2 + $0x74] sm:$0xf] %vm3348, %v3311
        %3379 = vst.msk [vmem:[#allocation2 + $0x78] sm:$0xf] %vm3348, %v3313
        %3380 = vst.msk [vmem:[#allocation2 + $0x7c] sm:$0xf] %vm3348, %v3315
        %v3381 = vld [vmem:[%s1] sm:$0xf]
        %v3382 = vld [vmem:[%s1 + $0x4] sm:$0xf]
        %v3383 = vld [vmem:[%s1 + $0x8] sm:$0xf]
        %v3384 = vld [vmem:[%s1 + $0xc] sm:$0xf]
        %v3385 = vld [vmem:[%s1 + $0x10] sm:$0xf]
        %v3386 = vld [vmem:[%s1 + $0x14] sm:$0xf]
        %v3387 = vld [vmem:[%s1 + $0x18] sm:$0xf]
        %v3388 = vld [vmem:[%s1 + $0x1c] sm:$0xf]
        %v3389 = vld [vmem:[%s1 + $0x20] sm:$0xf]
        %v3390 = vld [vmem:[%s1 + $0x24] sm:$0xf]
        %v3391 = vld [vmem:[%s1 + $0x28] sm:$0xf]
        %v3392 = vld [vmem:[%s1 + $0x2c] sm:$0xf]
        %v3393 = vld [vmem:[%s1 + $0x30] sm:$0xf]
        %v3394 = vld [vmem:[%s1 + $0x34] sm:$0xf]
        %v3395 = vld [vmem:[%s1 + $0x38] sm:$0xf]
        %v3396 = vld [vmem:[%s1 + $0x3c] sm:$0xf]
        %v3397 = vld [vmem:[%s2] sm:$0x1]
        %v3398 = vld [vmem:[#allocation2] sm:$0xf]
        %v3399 = vld [vmem:[#allocation2 + $0x4] sm:$0xf]
        %v3400 = vld [vmem:[#allocation2 + $0x8] sm:$0xf]
        %v3401 = vld [vmem:[#allocation2 + $0xc] sm:$0xf]
        %v3402 = vld [vmem:[#allocation2 + $0x10] sm:$0xf]
        %v3403 = vld [vmem:[#allocation2 + $0x14] sm:$0xf]
        %v3404 = vld [vmem:[#allocation2 + $0x18] sm:$0xf]
        %v3405 = vld [vmem:[#allocation2 + $0x1c] sm:$0xf]
        %v3406 = vld [vmem:[#allocation2 + $0x20] sm:$0xf]
        %v3407 = vld [vmem:[#allocation2 + $0x24] sm:$0xf]
        %v3408 = vld [vmem:[#allocation2 + $0x28] sm:$0xf]
        %v3409 = vld [vmem:[#allocation2 + $0x2c] sm:$0xf]
        %v3410 = vld [vmem:[#allocation2 + $0x30] sm:$0xf]
        %v3411 = vld [vmem:[#allocation2 + $0x34] sm:$0xf]
        %v3412 = vld [vmem:[#allocation2 + $0x38] sm:$0xf]
        %v3413 = vld [vmem:[#allocation2 + $0x3c] sm:$0xf]
        %v3414 = vld [vmem:[#allocation2 + $0x40] sm:$0xf]
        %v3415 = vld [vmem:[#allocation2 + $0x44] sm:$0xf]
        %v3416 = vld [vmem:[#allocation2 + $0x48] sm:$0xf]
        %v3417 = vld [vmem:[#allocation2 + $0x4c] sm:$0xf]
        %v3418 = vld [vmem:[#allocation2 + $0x50] sm:$0xf]
        %v3419 = vld [vmem:[#allocation2 + $0x54] sm:$0xf]
        %v3420 = vld [vmem:[#allocation2 + $0x58] sm:$0xf]
        %v3421 = vld [vmem:[#allocation2 + $0x5c] sm:$0xf]
        %v3422 = vld [vmem:[#allocation2 + $0x60] sm:$0xf]
        %v3423 = vld [vmem:[#allocation2 + $0x64] sm:$0xf]
        %v3424 = vld [vmem:[#allocation2 + $0x68] sm:$0xf]
        %v3425 = vld [vmem:[#allocation2 + $0x6c] sm:$0xf]
        %v3426 = vld [vmem:[#allocation2 + $0x70] sm:$0xf]
        %v3427 = vld [vmem:[#allocation2 + $0x74] sm:$0xf]
        %v3428 = vld [vmem:[#allocation2 + $0x78] sm:$0xf]
        %v3429 = vld [vmem:[#allocation2 + $0x7c] sm:$0xf]
        %v3431 = vlaneseq
        %v3432 = vshrl.u32 %v3431, 7
        %v3433 = vsub.s32 0, %v3432
        %v3434 = vrot.slane %v3397, %v3433
        %v3468 = vunpack.c.l.b16 %v3398
        %v3469 = vunpack.c.l.b16 %v3399
        %v3470 = vunpack.c.l.b16 %v3400
        %v3471 = vunpack.c.l.b16 %v3401
        %v3472 = vunpack.c.l.b16 %v3402
        %v3473 = vunpack.c.l.b16 %v3403
        %v3474 = vunpack.c.l.b16 %v3404
        %v3475 = vunpack.c.l.b16 %v3405
        %v3476 = vunpack.c.l.b16 %v3406
        %v3477 = vunpack.c.l.b16 %v3407
        %v3478 = vunpack.c.l.b16 %v3408
        %v3479 = vunpack.c.l.b16 %v3409
        %v3480 = vunpack.c.l.b16 %v3410
        %v3481 = vunpack.c.l.b16 %v3411
        %v3482 = vunpack.c.l.b16 %v3412
        %v3483 = vunpack.c.l.b16 %v3413
        %v3484 = vunpack.c.l.b16 %v3414
        %v3485 = vunpack.c.l.b16 %v3415
        %v3486 = vunpack.c.l.b16 %v3416
        %v3487 = vunpack.c.l.b16 %v3417
        %v3488 = vunpack.c.l.b16 %v3418
        %v3489 = vunpack.c.l.b16 %v3419
        %v3490 = vunpack.c.l.b16 %v3420
        %v3491 = vunpack.c.l.b16 %v3421
        %v3492 = vunpack.c.l.b16 %v3422
        %v3493 = vunpack.c.l.b16 %v3423
        %v3494 = vunpack.c.l.b16 %v3424
        %v3495 = vunpack.c.l.b16 %v3425
        %v3496 = vunpack.c.l.b16 %v3426
        %v3497 = vunpack.c.l.b16 %v3427
        %v3498 = vunpack.c.l.b16 %v3428
        %v3499 = vunpack.c.l.b16 %v3429
        %v3500 = vpack.c.b16 %v3469, %v3468
        %v3501 = vpack.c.b16 %v3471, %v3470
        %v3502 = vpack.c.b16 %v3473, %v3472
        %v3503 = vpack.c.b16 %v3475, %v3474
        %v3504 = vpack.c.b16 %v3477, %v3476
        %v3505 = vpack.c.b16 %v3479, %v3478
        %v3506 = vpack.c.b16 %v3481, %v3480
        %v3507 = vpack.c.b16 %v3483, %v3482
        %v3508 = vpack.c.b16 %v3485, %v3484
        %v3509 = vpack.c.b16 %v3487, %v3486
        %v3510 = vpack.c.b16 %v3489, %v3488
        %v3511 = vpack.c.b16 %v3491, %v3490
        %v3512 = vpack.c.b16 %v3493, %v3492
        %v3513 = vpack.c.b16 %v3495, %v3494
        %v3514 = vpack.c.b16 %v3497, %v3496
        %v3515 = vpack.c.b16 %v3499, %v3498
        %v3548 = vunpack.c.l.b16 %v3381
        %v3549 = vunpack.c.l.b16 %v3382
        %v3550 = vunpack.c.l.b16 %v3383
        %v3551 = vunpack.c.l.b16 %v3384
        %v3552 = vunpack.c.l.b16 %v3385
        %v3553 = vunpack.c.l.b16 %v3386
        %v3554 = vunpack.c.l.b16 %v3387
        %v3555 = vunpack.c.l.b16 %v3388
        %v3556 = vunpack.c.l.b16 %v3389
        %v3557 = vunpack.c.l.b16 %v3390
        %v3558 = vunpack.c.l.b16 %v3391
        %v3559 = vunpack.c.l.b16 %v3392
        %v3560 = vunpack.c.l.b16 %v3393
        %v3561 = vunpack.c.l.b16 %v3394
        %v3562 = vunpack.c.l.b16 %v3395
        %v3563 = vunpack.c.l.b16 %v3396
        %v3564 = vpack.c.b16 %v3549, %v3548
        %v3565 = vpack.c.b16 %v3551, %v3550
        %v3566 = vpack.c.b16 %v3553, %v3552
        %v3567 = vpack.c.b16 %v3555, %v3554
        %v3568 = vpack.c.b16 %v3557, %v3556
        %v3569 = vpack.c.b16 %v3559, %v3558
        %v3570 = vpack.c.b16 %v3561, %v3560
        %v3571 = vpack.c.b16 %v3563, %v3562
        %3580 = vmatprep.subr.bf16.mxu0 0
        %3581 = vmatpush1.bf16.msra.mxu0 %v3571
        %3582 = vmatprep.subr.bf16.mxu0 0
        %3583 = vmatpush1.bf16.msra.mxu0 %v3570
        %3584 = vmatprep.subr.bf16.mxu0 0
        %3585 = vmatpush1.bf16.msra.mxu0 %v3569
        %3586 = vmatprep.subr.bf16.mxu0 0
        %3587 = vmatpush1.bf16.msra.mxu0 %v3568
        %3588 = vmatprep.subr.bf16.mxu0 0
        %3589 = vmatpush1.bf16.msra.mxu0 %v3567
        %3590 = vmatprep.subr.bf16.mxu0 0
        %3591 = vmatpush1.bf16.msra.mxu0 %v3566
        %3592 = vmatprep.subr.bf16.mxu0 0
        %3593 = vmatpush1.bf16.msra.mxu0 %v3565
        %3594 = vmatprep.subr.bf16.mxu0 0
        %3595 = vmatpush1.bf16.msra.mxu0 %v3564
        %3596 = vmatprep.subr.bf16.mxu0 0
        %3597 = vmatpush2.bf16.msra.mxu0 0
        %3598 = vmatprep.subr.bf16.mxu0 0
        %3599 = vmatpush2.bf16.msra.mxu0 0
        %3600 = vmatprep.subr.bf16.mxu0 0
        %3601 = vmatpush2.bf16.msra.mxu0 0
        %3602 = vmatprep.subr.bf16.mxu0 0
        %3603 = vmatpush2.bf16.msra.mxu0 0
        %3604 = vmatprep.subr.bf16.mxu0 0
        %3605 = vmatpush2.bf16.msra.mxu0 0
        %3606 = vmatprep.subr.bf16.mxu0 0
        %3607 = vmatpush2.bf16.msra.mxu0 0
        %3608 = vmatprep.subr.bf16.mxu0 0
        %3609 = vmatpush2.bf16.msra.mxu0 0
        %3610 = vmatprep.subr.bf16.mxu0 0
        %3611 = vmatpush2.bf16.msra.mxu0 0
        %3612 = vmatprep.mubr.bf16.mxu0 0
        %3613 = vmatmul.mubr.bf16.gmra.mxu0 %v3500
        %v3614 = vpop.f32.mrf.mxu0
        %v3615 = vadd.f32 %v3434, %v3614
        %v3616 = vpop.f32.mrf.mxu0
        %v3617 = vpop.f32.mrf.mxu0
        %v3618 = vadd.f32 %v3434, %v3617
        %v3619 = vpop.f32.mrf.mxu0
        %3620 = vmatprep.mubr.bf16.mxu0 0
        %3621 = vmatmul.mubr.bf16.gmra.mxu0 %v3501
        %v3622 = vpop.f32.mrf.mxu0
        %v3623 = vadd.f32 %v3434, %v3622
        %v3624 = vpop.f32.mrf.mxu0
        %v3625 = vpop.f32.mrf.mxu0
        %v3626 = vadd.f32 %v3434, %v3625
        %v3627 = vpop.f32.mrf.mxu0
        %3628 = vmatprep.mubr.bf16.mxu0 0
        %3629 = vmatmul.mubr.bf16.gmra.mxu0 %v3502
        %v3630 = vpop.f32.mrf.mxu0
        %v3631 = vadd.f32 %v3434, %v3630
        %v3632 = vpop.f32.mrf.mxu0
        %v3633 = vpop.f32.mrf.mxu0
        %v3634 = vadd.f32 %v3434, %v3633
        %v3635 = vpop.f32.mrf.mxu0
        %3636 = vmatprep.mubr.bf16.mxu0 0
        %3637 = vmatmul.mubr.bf16.gmra.mxu0 %v3503
        %v3638 = vpop.f32.mrf.mxu0
        %v3639 = vadd.f32 %v3434, %v3638
        %v3640 = vpop.f32.mrf.mxu0
        %v3641 = vpop.f32.mrf.mxu0
        %v3642 = vadd.f32 %v3434, %v3641
        %v3643 = vpop.f32.mrf.mxu0
        %3644 = vmatprep.mubr.bf16.mxu0 0
        %3645 = vmatmul.mubr.bf16.gmra.mxu0 %v3504
        %v3646 = vpop.f32.mrf.mxu0
        %v3647 = vadd.f32 %v3434, %v3646
        %v3648 = vpop.f32.mrf.mxu0
        %v3649 = vpop.f32.mrf.mxu0
        %v3650 = vadd.f32 %v3434, %v3649
        %v3651 = vpop.f32.mrf.mxu0
        %3652 = vmatprep.mubr.bf16.mxu0 0
        %3653 = vmatmul.mubr.bf16.gmra.mxu0 %v3505
        %v3654 = vpop.f32.mrf.mxu0
        %v3655 = vadd.f32 %v3434, %v3654
        %v3656 = vpop.f32.mrf.mxu0
        %v3657 = vpop.f32.mrf.mxu0
        %v3658 = vadd.f32 %v3434, %v3657
        %v3659 = vpop.f32.mrf.mxu0
        %3660 = vmatprep.mubr.bf16.mxu0 0
        %3661 = vmatmul.mubr.bf16.gmra.mxu0 %v3506
        %v3662 = vpop.f32.mrf.mxu0
        %v3663 = vadd.f32 %v3434, %v3662
        %v3664 = vpop.f32.mrf.mxu0
        %v3665 = vpop.f32.mrf.mxu0
        %v3666 = vadd.f32 %v3434, %v3665
        %v3667 = vpop.f32.mrf.mxu0
        %3668 = vmatprep.mubr.bf16.mxu0 0
        %3669 = vmatmul.mubr.bf16.gmra.mxu0 %v3507
        %v3670 = vpop.f32.mrf.mxu0
        %v3671 = vadd.f32 %v3434, %v3670
        %v3672 = vpop.f32.mrf.mxu0
        %v3673 = vpop.f32.mrf.mxu0
        %v3674 = vadd.f32 %v3434, %v3673
        %v3675 = vpop.f32.mrf.mxu0
        %3676 = vmatprep.mubr.bf16.mxu0 0
        %3677 = vmatmul.mubr.bf16.gmra.mxu0 %v3508
        %v3678 = vpop.f32.mrf.mxu0
        %v3679 = vadd.f32 %v3434, %v3678
        %v3680 = vpop.f32.mrf.mxu0
        %v3681 = vpop.f32.mrf.mxu0
        %v3682 = vadd.f32 %v3434, %v3681
        %v3683 = vpop.f32.mrf.mxu0
        %3684 = vmatprep.mubr.bf16.mxu0 0
        %3685 = vmatmul.mubr.bf16.gmra.mxu0 %v3509
        %v3686 = vpop.f32.mrf.mxu0
        %v3687 = vadd.f32 %v3434, %v3686
        %v3688 = vpop.f32.mrf.mxu0
        %v3689 = vpop.f32.mrf.mxu0
        %v3690 = vadd.f32 %v3434, %v3689
        %v3691 = vpop.f32.mrf.mxu0
        %3692 = vmatprep.mubr.bf16.mxu0 0
        %3693 = vmatmul.mubr.bf16.gmra.mxu0 %v3510
        %v3694 = vpop.f32.mrf.mxu0
        %v3695 = vadd.f32 %v3434, %v3694
        %v3696 = vpop.f32.mrf.mxu0
        %v3697 = vpop.f32.mrf.mxu0
        %v3698 = vadd.f32 %v3434, %v3697
        %v3699 = vpop.f32.mrf.mxu0
        %3700 = vmatprep.mubr.bf16.mxu0 0
        %3701 = vmatmul.mubr.bf16.gmra.mxu0 %v3511
        %v3702 = vpop.f32.mrf.mxu0
        %v3703 = vadd.f32 %v3434, %v3702
        %v3704 = vpop.f32.mrf.mxu0
        %v3705 = vpop.f32.mrf.mxu0
        %v3706 = vadd.f32 %v3434, %v3705
        %v3707 = vpop.f32.mrf.mxu0
        %3708 = vmatprep.mubr.bf16.mxu0 0
        %3709 = vmatmul.mubr.bf16.gmra.mxu0 %v3512
        %v3710 = vpop.f32.mrf.mxu0
        %v3711 = vadd.f32 %v3434, %v3710
        %v3712 = vpop.f32.mrf.mxu0
        %v3713 = vpop.f32.mrf.mxu0
        %v3714 = vadd.f32 %v3434, %v3713
        %v3715 = vpop.f32.mrf.mxu0
        %3716 = vmatprep.mubr.bf16.mxu0 0
        %3717 = vmatmul.mubr.bf16.gmra.mxu0 %v3513
        %v3718 = vpop.f32.mrf.mxu0
        %v3719 = vadd.f32 %v3434, %v3718
        %v3720 = vpop.f32.mrf.mxu0
        %v3721 = vpop.f32.mrf.mxu0
        %v3722 = vadd.f32 %v3434, %v3721
        %v3723 = vpop.f32.mrf.mxu0
        %3724 = vmatprep.mubr.bf16.mxu0 0
        %3725 = vmatmul.mubr.bf16.gmra.mxu0 %v3514
        %v3726 = vpop.f32.mrf.mxu0
        %v3727 = vadd.f32 %v3434, %v3726
        %v3728 = vpop.f32.mrf.mxu0
        %v3729 = vpop.f32.mrf.mxu0
        %v3730 = vadd.f32 %v3434, %v3729
        %v3731 = vpop.f32.mrf.mxu0
        %3732 = vmatprep.mubr.bf16.mxu0 0
        %3733 = vmatmul.mubr.bf16.gmra.mxu0 %v3515
        %v3734 = vpop.f32.mrf.mxu0
        %v3735 = vadd.f32 %v3434, %v3734
        %v3736 = vpop.f32.mrf.mxu0
        %v3737 = vpop.f32.mrf.mxu0
        %v3738 = vadd.f32 %v3434, %v3737
        %v3739 = vpop.f32.mrf.mxu0
        %3740 = vdwg.mxu0
        %v3741 = vpack.c.bf16 %v3618, %v3615
        %v3742 = vpack.c.bf16 %v3626, %v3623
        %v3743 = vpack.c.bf16 %v3634, %v3631
        %v3744 = vpack.c.bf16 %v3642, %v3639
        %v3745 = vpack.c.bf16 %v3650, %v3647
        %v3746 = vpack.c.bf16 %v3658, %v3655
        %v3747 = vpack.c.bf16 %v3666, %v3663
        %v3748 = vpack.c.bf16 %v3674, %v3671
        %v3749 = vpack.c.bf16 %v3682, %v3679
        %v3750 = vpack.c.bf16 %v3690, %v3687
        %v3751 = vpack.c.bf16 %v3698, %v3695
        %v3752 = vpack.c.bf16 %v3706, %v3703
        %v3753 = vpack.c.bf16 %v3714, %v3711
        %v3754 = vpack.c.bf16 %v3722, %v3719
        %v3755 = vpack.c.bf16 %v3730, %v3727
        %v3756 = vpack.c.bf16 %v3738, %v3735
        %v3773 = vunpack.c.l.b16 %v3741
        %v3774 = vunpack.c.h.b16 %v3741
        %v3775 = vunpack.c.l.b16 %v3742
        %v3776 = vunpack.c.h.b16 %v3742
        %v3777 = vunpack.c.l.b16 %v3743
        %v3778 = vunpack.c.h.b16 %v3743
        %v3779 = vunpack.c.l.b16 %v3744
        %v3780 = vunpack.c.h.b16 %v3744
        %v3781 = vunpack.c.l.b16 %v3745
        %v3782 = vunpack.c.h.b16 %v3745
        %v3783 = vunpack.c.l.b16 %v3746
        %v3784 = vunpack.c.h.b16 %v3746
        %v3785 = vunpack.c.l.b16 %v3747
        %v3786 = vunpack.c.h.b16 %v3747
        %v3787 = vunpack.c.l.b16 %v3748
        %v3788 = vunpack.c.h.b16 %v3748
        %v3789 = vunpack.c.l.b16 %v3749
        %v3790 = vunpack.c.h.b16 %v3749
        %v3791 = vunpack.c.l.b16 %v3750
        %v3792 = vunpack.c.h.b16 %v3750
        %v3793 = vunpack.c.l.b16 %v3751
        %v3794 = vunpack.c.h.b16 %v3751
        %v3795 = vunpack.c.l.b16 %v3752
        %v3796 = vunpack.c.h.b16 %v3752
        %v3797 = vunpack.c.l.b16 %v3753
        %v3798 = vunpack.c.h.b16 %v3753
        %v3799 = vunpack.c.l.b16 %v3754
        %v3800 = vunpack.c.h.b16 %v3754
        %v3801 = vunpack.c.l.b16 %v3755
        %v3802 = vunpack.c.h.b16 %v3755
        %v3803 = vunpack.c.l.b16 %v3756
        %v3804 = vunpack.c.h.b16 %v3756
        %v3805 = vpack.c.b16 %v3773, %v3773
        %v3806 = vpack.c.b16 %v3774, %v3774
        %v3807 = vpack.c.b16 %v3775, %v3775
        %v3808 = vpack.c.b16 %v3776, %v3776
        %v3809 = vpack.c.b16 %v3777, %v3777
        %v3810 = vpack.c.b16 %v3778, %v3778
        %v3811 = vpack.c.b16 %v3779, %v3779
        %v3812 = vpack.c.b16 %v3780, %v3780
        %v3813 = vpack.c.b16 %v3781, %v3781
        %v3814 = vpack.c.b16 %v3782, %v3782
        %v3815 = vpack.c.b16 %v3783, %v3783
        %v3816 = vpack.c.b16 %v3784, %v3784
        %v3817 = vpack.c.b16 %v3785, %v3785
        %v3818 = vpack.c.b16 %v3786, %v3786
        %v3819 = vpack.c.b16 %v3787, %v3787
        %v3820 = vpack.c.b16 %v3788, %v3788
        %v3821 = vpack.c.b16 %v3789, %v3789
        %v3822 = vpack.c.b16 %v3790, %v3790
        %v3823 = vpack.c.b16 %v3791, %v3791
        %v3824 = vpack.c.b16 %v3792, %v3792
        %v3825 = vpack.c.b16 %v3793, %v3793
        %v3826 = vpack.c.b16 %v3794, %v3794
        %v3827 = vpack.c.b16 %v3795, %v3795
        %v3828 = vpack.c.b16 %v3796, %v3796
        %v3829 = vpack.c.b16 %v3797, %v3797
        %v3830 = vpack.c.b16 %v3798, %v3798
        %v3831 = vpack.c.b16 %v3799, %v3799
        %v3832 = vpack.c.b16 %v3800, %v3800
        %v3833 = vpack.c.b16 %v3801, %v3801
        %v3834 = vpack.c.b16 %v3802, %v3802
        %v3835 = vpack.c.b16 %v3803, %v3803
        %v3836 = vpack.c.b16 %v3804, %v3804
        %3869 = vst [vmem:[%s177] sm:$0xf] %v3805
        %3870 = vst [vmem:[%s177 + $0x4] sm:$0xf] %v3806
        %3871 = vst [vmem:[%s177 + $0x8] sm:$0xf] %v3807
        %3872 = vst [vmem:[%s177 + $0xc] sm:$0xf] %v3808
        %3873 = vst [vmem:[%s177 + $0x10] sm:$0xf] %v3809
        %3874 = vst [vmem:[%s177 + $0x14] sm:$0xf] %v3810
        %3875 = vst [vmem:[%s177 + $0x18] sm:$0xf] %v3811
        %3876 = vst [vmem:[%s177 + $0x1c] sm:$0xf] %v3812
        %3877 = vst [vmem:[%s177 + $0x20] sm:$0xf] %v3813
        %3878 = vst [vmem:[%s177 + $0x24] sm:$0xf] %v3814
        %3879 = vst [vmem:[%s177 + $0x28] sm:$0xf] %v3815
        %3880 = vst [vmem:[%s177 + $0x2c] sm:$0xf] %v3816
        %3881 = vst [vmem:[%s177 + $0x30] sm:$0xf] %v3817
        %3882 = vst [vmem:[%s177 + $0x34] sm:$0xf] %v3818
        %3883 = vst [vmem:[%s177 + $0x38] sm:$0xf] %v3819
        %3884 = vst [vmem:[%s177 + $0x3c] sm:$0xf] %v3820
        %3885 = vst [vmem:[%s177 + $0x40] sm:$0xf] %v3821
        %3886 = vst [vmem:[%s177 + $0x44] sm:$0xf] %v3822
        %3887 = vst [vmem:[%s177 + $0x48] sm:$0xf] %v3823
        %3888 = vst [vmem:[%s177 + $0x4c] sm:$0xf] %v3824
        %3889 = vst [vmem:[%s177 + $0x50] sm:$0xf] %v3825
        %3890 = vst [vmem:[%s177 + $0x54] sm:$0xf] %v3826
        %3891 = vst [vmem:[%s177 + $0x58] sm:$0xf] %v3827
        %3892 = vst [vmem:[%s177 + $0x5c] sm:$0xf] %v3828
        %3893 = vst [vmem:[%s177 + $0x60] sm:$0xf] %v3829
        %3894 = vst [vmem:[%s177 + $0x64] sm:$0xf] %v3830
        %3895 = vst [vmem:[%s177 + $0x68] sm:$0xf] %v3831
        %3896 = vst [vmem:[%s177 + $0x6c] sm:$0xf] %v3832
        %3897 = vst [vmem:[%s177 + $0x70] sm:$0xf] %v3833
        %3898 = vst [vmem:[%s177 + $0x74] sm:$0xf] %v3834
        %3899 = vst [vmem:[%s177 + $0x78] sm:$0xf] %v3835
        %3900 = vst [vmem:[%s177 + $0x7c] sm:$0xf] %v3836
        %s3901 = sand.u32 %s107, 1
        %s3902 = scalar_lea.sflag [#allocation4], %s3901
        %s3903 = sand.u32 %s107, 1
        %s3904 = smul.addr %s3903, 128
        %s3905 = scalar_lea.vmem [#allocation3], %s3904
        // Predicated region
        $region33: #{tpu_custom_call.1} parent=31 // pred_check
          %p3906 = pneg %p117
        $region34: #{tpu_custom_call.1} parent=31 // pred_check_branch
          %3908 = sbr.rel (%p3906) target = $region36
        $region35: #{tpu_custom_call.1} parent=31 // pred_region
          %s3909 = smul.u32 32, %s22
          %s3911 = ssub.s32 2048, 2048
          %3912 = vsyncadd %s3902, %s3911
          %s3913 = smul.addr %s21, 32
          %s3914 = sadd.s32 %s3909, %s3913
          %s3915 = smul.addr %s3914, 64
          %s3916 = scalar_lea.hbm %s3, %s3915
          %s3917 = sshll.u32 %s3905, 4
          %s3918 = int_to_ptr.vmem [resolvable:$true] %s3917
          %3923 = dma.vmem_to_hbm [thread:$0]  %s3918, 2048, %s3916, %s3902, 64, 64, 4
        $region36: #{tpu_custom_call.1} parent=31 // pred_fallthru
          _
      $region32: #{tpu_custom_call.1} parent=5 // pred_fallthru
        _
      %p3924 = scmp.le.s32.totalorder 2, %s12
      // Predicated region
      $region37: #{tpu_custom_call.1} parent=5 // pred_check
        %p3925 = pneg %p3924
      $region38: #{tpu_custom_call.1} parent=5 // pred_check_branch
        %3927 = sbr.rel (%p3925) target = $region40
      $region39: #{tpu_custom_call.1} parent=5 // pred_region
        %s3928 = ssub.s32 %s12, 2
        // Predicated region
        $region41: #{tpu_custom_call.1} parent=39 // pred_check
          %p3929 = pneg %p123
        $region42: #{tpu_custom_call.1} parent=39 // pred_check_branch
          %3931 = sbr.rel (%p3929) target = $region44
        $region43: #{tpu_custom_call.1} parent=39 // pred_region
          %s3932 = sand.u32 %s108, 1
          %s3933 = scalar_lea.sflag [#allocation4], %s3932
          %s3934 = sand.u32 %s108, 1
          %s3935 = smul.addr %s3934, 128
          %s3936 = scalar_lea.vmem [#allocation3], %s3935
          %3937 = dma.done %s3933, 2048
        $region44: #{tpu_custom_call.1} parent=39 // pred_fallthru
          _
      $region40: #{tpu_custom_call.1} parent=5 // pred_fallthru
        _
    $region6: #{tpu_custom_call.1} parent=1 // loop_footer
      %s16 = sadd.s32 1, %s12
    $region7: #{tpu_custom_call.1} parent=1 // loop_footer_branch
      %11 = sbr.rel target = $region3
    $region8: #{tpu_custom_call.1} parent=1 // loop_exit
      _
    %3938 = vsyncpa [#allocation4], 1
    %s3939 = scalar_lea.sflag [#allocation4], 1
    %3940 = vsyncpa %s3939, 1

</llo_original>
